<compile_context>
chip_gen: v6e
topology: v6e:2x2x1
jax: 0.10.0
libtpu: 0.0.40
codegen_flags: <defaults>
</compile_context>

<pallas_src>
import functools

import jax
import jax.numpy as jnp
from jax.experimental import pallas as pl
from jax.experimental.pallas import tpu as pltpu


def _round_up(n, m):
    return (n + m - 1) // m * m


def _choose_tile(B, block_batch):
    """Pick (tb, bp): tb a multiple of 8, bp = grid*tb >= B.

    Prefers (a) no extra host-side padding of x (tb divides the sublane-padded
    batch), (b) >=2 grid steps so v7x's two TensorCores both get batch tiles,
    (c) tiles as fat as possible (each grid step carries ~0.35us fixed cost).
    """
    bp8 = _round_up(B, 8)                       # mandatory sublane padding only
    cap = min(block_batch, bp8 // 2 if bp8 >= 16 else bp8)
    cap = max(8, cap // 8 * 8)
    # Largest reasonably-fat tile that divides the sublane-padded batch.
    for tb in range(cap, max(7, cap // 2 - 1), -8):
        if bp8 % tb == 0:
            return tb, bp8
    # No clean divisor: accept some extra padding, keep tiles fat.
    return cap, _round_up(B, cap)


# ----------------------------- Pallas kernel --------------------------------
def _vae_kernel(
    x_ref, eps_ref,
    # encoder hidden layers
    we1_ref, be1_ref, we2_ref, be2_ref,
    # fused gaussian-sample head (mu | log_var)
    wh_ref, bh_ref,
    # decoder hidden layers + output
    wd1_ref, bd1_ref, wd2_ref, bd2_ref, wo_ref, bo_ref,
    # outputs
    xrec_ref, lat_ref,
    *, z_dim,
):
    f32 = jnp.float32

    def softplus(v):
        # numerically stable log(1 + exp(v)); matches F.softplus semantics
        return jnp.logaddexp(v, 0.0)

    def linear(h, w_ref, b_ref):
        # Cast activations to the (possibly bf16) weight dtype so the MXU takes
        # its native low-precision path; accumulate in f32; f32 bias add.
        return jnp.dot(h.astype(w_ref.dtype), w_ref[...],
                       preferred_element_type=f32) + b_ref[...]

    # ---- Encoder: softplus on all hidden layers except the last ----
    # (PyTorch Encoder: `if i < len(self.h) - 1: x = F.softplus(x)`)
    h = softplus(linear(x_ref[...], we1_ref, be1_ref))   # i = 0 -> softplus
    h = linear(h, we2_ref, be2_ref)                      # i = 1 (last) -> none

    # ---- Gaussian sample: fused mu|log_var head, one MXU matmul ----
    # TODO(synk): Gaussian_sample is undefined in the provided source; this is
    # the standard reparameterization used by that repo.
    head = linear(h, wh_ref, bh_ref)                     # [TB, 2*z_dim], f32
    mu = head[:, :z_dim]
    log_var = softplus(head[:, z_dim:])
    z = mu + jnp.exp(0.5 * log_var) * eps_ref[...].astype(f32)

    # ---- Decoder: softplus on every hidden layer, sigmoid on output ----
    d = softplus(linear(z, wd1_ref, bd1_ref))
    d = softplus(linear(d, wd2_ref, bd2_ref))
    xrec_ref[...] = jax.nn.sigmoid(linear(d, wo_ref, bo_ref)).astype(xrec_ref.dtype)

    # ---- Lane-dense packed latent slab: [z | mu | log_var | (unwritten pad)]
    # Three masked slice stores (no concatenate, no zeros temporary). Pad lanes
    # >= 3*z_dim are never written; the wrapper never reads them.
    lat_ref[:, :z_dim] = z.astype(lat_ref.dtype)
    lat_ref[:, z_dim:2 * z_dim] = mu.astype(lat_ref.dtype)
    lat_ref[:, 2 * z_dim:3 * z_dim] = log_var.astype(lat_ref.dtype)


# ------------------------------ wrapper --------------------------------------
def vae_forward(x, eps, params, *, block_batch=256, transfer_dtype=jnp.bfloat16):
    """Full VAE forward pass.

    x:      [B, x_dim] float32
    eps:    [B, z_dim] float32 standard-normal noise (reparameterization)
    params: flat tuple of (W, b) arrays in kernel-argument order
            (W stored [in, out], fused mu|log_var head).
    Returns x_reconstructed (transfer_dtype), (z, mu, log_var) (float32).
    """
    B, x_dim = x.shape
    z_dim = eps.shape[1]
    lat_pad = _round_up(3 * z_dim, 128)           # packed latent slab width

    tb, bp = _choose_tile(B, block_batch)
    if bp != B:
        # TODO(synk): a ragged final tile / in-kernel row mask would avoid this
        # host-side copy; only hit when no fat tile divides the batch cleanly.
        x = jnp.pad(x, ((0, bp - B), (0, 0)))
        eps = jnp.pad(eps, ((0, bp - B), (0, 0)))

    # bf16 HBM transfer for activations and weights; biases stay f32 (tiny).
    x = x.astype(transfer_dtype)
    eps = eps.astype(transfer_dtype)
    params = tuple(p.astype(transfer_dtype) if i % 2 == 0 else p.astype(jnp.float32)
                   for i, p in enumerate(params))

    def batch_spec(feat):
        return pl.BlockSpec((tb, feat), lambda i: (i, 0))

    def resident_spec(arr):
        # Same block for every grid step -> Pallas skips the re-copy after the
        # first step; weights/biases stay VMEM-resident (DMA'd once).
        return pl.BlockSpec(arr.shape, lambda i: (0, 0))

    in_specs = [batch_spec(x_dim), batch_spec(z_dim)]
    in_specs += [resident_spec(p) for p in params]

    out_shape = (
        jax.ShapeDtypeStruct((bp, x_dim), transfer_dtype),   # x_reconstructed
        jax.ShapeDtypeStruct((bp, lat_pad), jnp.float32),    # packed z|mu|logvar
    )
    out_specs = (batch_spec(x_dim), batch_spec(lat_pad))

    # Advisory cost estimate so XLA schedules surrounding ops sensibly.
    h1, h2 = params[0].shape[1], params[2].shape[1]
    flops = 2 * bp * (x_dim * h1 + h1 * h2 + h2 * (2 * z_dim)
                      + z_dim * h2 + h2 * h1 + h1 * x_dim)
    transcendentals = bp * (2 * h1 + h2 + 2 * z_dim + x_dim)
    bytes_accessed = (
        x.size * x.dtype.itemsize + eps.size * eps.dtype.itemsize
        + sum(p.size * p.dtype.itemsize for p in params)
        + bp * x_dim * jnp.dtype(transfer_dtype).itemsize
        + bp * lat_pad * 4)

    kernel = functools.partial(_vae_kernel, z_dim=z_dim)

    x_rec, lat = pl.pallas_call(
        kernel,
        grid=(bp // tb,),
        in_specs=in_specs,
        out_specs=out_specs,
        out_shape=out_shape,
        compiler_params=pltpu.CompilerParams(
            dimension_semantics=("parallel",)),
        cost_estimate=pl.CostEstimate(
            flops=int(flops),
            transcendentals=int(transcendentals),
            bytes_accessed=int(bytes_accessed)),
    )(x, eps, *params)

    x_rec = x_rec[:B]
    lat = lat[:B]
    z = lat[:, :z_dim]
    mu = lat[:, z_dim:2 * z_dim]
    log_var = lat[:, 2 * z_dim:3 * z_dim]
    return x_rec, (z, mu, log_var)


# --------------------------- parameter setup ---------------------------------
def _xavier_normal(key, fan_in, fan_out):
    # matches torch.nn.init.xavier_normal_ (gain=1); stored [in, out]
    std = (2.0 / (fan_in + fan_out)) ** 0.5
    return std * jax.random.normal(key, (fan_in, fan_out), dtype=jnp.float32)


def make_vae_params(key, x_dim, h_dim, z_dim):
    """All Linear weights (xavier normal) and zero biases, kernel-arg order."""
    keys = jax.random.split(key, 7)

    def layer(k, fi, fo):
        return _xavier_normal(k, fi, fo), jnp.zeros((1, fo), dtype=jnp.float32)

    we1, be1 = layer(keys[0], x_dim, h_dim[0])       # enc h1
    we2, be2 = layer(keys[1], h_dim[0], h_dim[1])    # enc h2
    # Gaussian heads, xavier-initialized separately (matches two nn.Linear's),
    # then fused into one [h2, 2*z_dim] weight so the kernel does one matmul.
    wmu, bmu = layer(keys[2], h_dim[1], z_dim)
    wlv, blv = layer(keys[3], h_dim[1], z_dim)
    wh = jnp.concatenate([wmu, wlv], axis=1)
    bh = jnp.concatenate([bmu, blv], axis=1)
    wd1, bd1 = layer(keys[4], z_dim, h_dim[1])       # dec h1 (reversed h_dim)
    wd2, bd2 = layer(keys[5], h_dim[1], h_dim[0])    # dec h2
    wo, bo = layer(keys[6], h_dim[0], x_dim)         # dec output

    return (we1, be1, we2, be2, wh, bh, wd1, bd1, wd2, bd2, wo, bo)


# ------------------------------ main -----------------------------------------
if __name__ == "__main__":
    # VAE config: dims = [x_dim, [h1, h2], z_dim]
    x_dim, h_dim, z_dim = 256, [128, 64], 32
    batch = 256   # -> two 128-row batch tiles (exercises grid pipeline, no pad)

    root = jax.random.PRNGKey(0)
    k_params, k_x, k_eps = jax.random.split(root, 3)

    params = make_vae_params(k_params, x_dim, h_dim, z_dim)
    x = jax.random.uniform(k_x, (batch, x_dim), dtype=jnp.float32)
    eps = jax.random.normal(k_eps, (batch, z_dim), dtype=jnp.float32)

    x_rec, (z, mu, log_var) = vae_forward(x, eps, params)
    jax.block_until_ready((x_rec, z, mu, log_var))

    assert x_rec.shape == (batch, x_dim)
    assert z.shape == (batch, z_dim)
    assert mu.shape == (batch, z_dim)
    assert log_var.shape == (batch, z_dim)
    assert bool(jnp.all(jnp.isfinite(x_rec.astype(jnp.float32))))
    assert bool(jnp.all((x_rec >= 0.0) & (x_rec <= 1.0)))   # sigmoid output
    assert bool(jnp.all(jnp.isfinite(z)))
    assert bool(jnp.all(jnp.isfinite(mu)))
    assert bool(jnp.all(log_var >= 0.0))                    # softplus output

    print("KERNEL_OK")
</pallas_src>

<mosaic_0001>
module attributes {stable_mosaic.version = 11 : i64} {
  func.func @_vae_kernel(%arg0: i32, %arg1: memref<128x256xbf16, #tpu.memory_space<vmem>>, %arg2: memref<128x32xbf16, #tpu.memory_space<vmem>>, %arg3: memref<256x128xbf16, #tpu.memory_space<vmem>>, %arg4: memref<1x128xf32, #tpu.memory_space<vmem>>, %arg5: memref<128x64xbf16, #tpu.memory_space<vmem>>, %arg6: memref<1x64xf32, #tpu.memory_space<vmem>>, %arg7: memref<64x64xbf16, #tpu.memory_space<vmem>>, %arg8: memref<1x64xf32, #tpu.memory_space<vmem>>, %arg9: memref<32x64xbf16, #tpu.memory_space<vmem>>, %arg10: memref<1x64xf32, #tpu.memory_space<vmem>>, %arg11: memref<64x128xbf16, #tpu.memory_space<vmem>>, %arg12: memref<1x128xf32, #tpu.memory_space<vmem>>, %arg13: memref<128x256xbf16, #tpu.memory_space<vmem>>, %arg14: memref<1x256xf32, #tpu.memory_space<vmem>>, %arg15: memref<128x256xbf16, #tpu.memory_space<vmem>>, %arg16: memref<128x128xf32, #tpu.memory_space<vmem>>) attributes {dimension_semantics = [#tpu.dimension_semantics<parallel>], iteration_bounds = array<i64: 2>, scalar_prefetch = 0 : i64, scratch_operands = 0 : i64, tpu.core_type = #tpu.core_type<tc>, window_params = [{transform_indices = @transform_0, window_bounds = array<i64: 128, 256>}, {transform_indices = @transform_1, window_bounds = array<i64: 128, 32>}, {pipeline_mode = #tpu.pipeline_mode<synchronous>, transform_indices = @transform_2, window_bounds = array<i64: 256, 128>}, {pipeline_mode = #tpu.pipeline_mode<synchronous>, transform_indices = @transform_3, window_bounds = array<i64: 1, 128>}, {pipeline_mode = #tpu.pipeline_mode<synchronous>, transform_indices = @transform_4, window_bounds = array<i64: 128, 64>}, {pipeline_mode = #tpu.pipeline_mode<synchronous>, transform_indices = @transform_5, window_bounds = array<i64: 1, 64>}, {pipeline_mode = #tpu.pipeline_mode<synchronous>, transform_indices = @transform_6, window_bounds = array<i64: 64, 64>}, {pipeline_mode = #tpu.pipeline_mode<synchronous>, transform_indices = @transform_7, window_bounds = array<i64: 1, 64>}, {pipeline_mode = #tpu.pipeline_mode<synchronous>, transform_indices = @transform_8, window_bounds = array<i64: 32, 64>}, {pipeline_mode = #tpu.pipeline_mode<synchronous>, transform_indices = @transform_9, window_bounds = array<i64: 1, 64>}, {pipeline_mode = #tpu.pipeline_mode<synchronous>, transform_indices = @transform_10, window_bounds = array<i64: 64, 128>}, {pipeline_mode = #tpu.pipeline_mode<synchronous>, transform_indices = @transform_11, window_bounds = array<i64: 1, 128>}, {pipeline_mode = #tpu.pipeline_mode<synchronous>, transform_indices = @transform_12, window_bounds = array<i64: 128, 256>}, {pipeline_mode = #tpu.pipeline_mode<synchronous>, transform_indices = @transform_13, window_bounds = array<i64: 1, 256>}, {transform_indices = @transform_14, window_bounds = array<i64: 128, 256>}, {transform_indices = @transform_15, window_bounds = array<i64: 128, 128>}]} {
    %c0 = arith.constant 0 : index
    %c0_0 = arith.constant 0 : index
    %0 = vector.load %arg1[%c0, %c0_0] : memref<128x256xbf16, #tpu.memory_space<vmem>>, vector<128x256xbf16>
    %c0_1 = arith.constant 0 : index
    %c0_2 = arith.constant 0 : index
    %1 = vector.load %arg3[%c0_1, %c0_2] : memref<256x128xbf16, #tpu.memory_space<vmem>>, vector<256x128xbf16>
    %cst = arith.constant dense<0.000000e+00> : vector<128x128xf32>
    %2 = tpu.matmul %0, %1, %cst {dimension_numbers = #tpu.dot_dimension_numbers<[1], [0], [0], [1], [0, 0, 1, 1], [], []>} : vector<128x256xbf16>, vector<256x128xbf16>, vector<128x128xf32> -> vector<128x128xf32>
    %c0_3 = arith.constant 0 : index
    %c0_4 = arith.constant 0 : index
    %3 = vector.load %arg4[%c0_3, %c0_4] : memref<1x128xf32, #tpu.memory_space<vmem>>, vector<1x128xf32>
    %4 = vector.broadcast %3 : vector<1x128xf32> to vector<128x128xf32>
    %5 = arith.addf %2, %4 : vector<128x128xf32>
    %cst_5 = arith.constant 0.000000e+00 : f32
    %6 = vector.broadcast %cst_5 : f32 to vector<128x128xf32>
    %7 = arith.maximumf %5, %6 : vector<128x128xf32>
    %8 = vector.broadcast %cst_5 : f32 to vector<128x128xf32>
    %9 = arith.subf %5, %8 : vector<128x128xf32>
    %10 = arith.cmpf one, %9, %9 : vector<128x128xf32>
    %11 = vector.broadcast %cst_5 : f32 to vector<128x128xf32>
    %12 = arith.addf %5, %11 : vector<128x128xf32>
    %13 = math.absf %9 : vector<128x128xf32>
    %cst_6 = arith.constant 0.000000e+00 : f32
    %14 = vector.broadcast %cst_6 : f32 to vector<128x128xf32>
    %15 = arith.subf %14, %13 : vector<128x128xf32>
    %16 = math.exp %15 : vector<128x128xf32>
    %17 = math.log1p %16 : vector<128x128xf32>
    %18 = arith.addf %7, %17 : vector<128x128xf32>
    %19 = arith.select %10, %12, %18 : vector<128x128xi1>, vector<128x128xf32>
    %20 = arith.truncf %19 : vector<128x128xf32> to vector<128x128xbf16>
    %c0_7 = arith.constant 0 : index
    %c0_8 = arith.constant 0 : index
    %21 = vector.load %arg5[%c0_7, %c0_8] : memref<128x64xbf16, #tpu.memory_space<vmem>>, vector<128x64xbf16>
    %cst_9 = arith.constant dense<0.000000e+00> : vector<128x64xf32>
    %22 = tpu.matmul %20, %21, %cst_9 {dimension_numbers = #tpu.dot_dimension_numbers<[1], [0], [0], [1], [0, 0, 1, 1], [], []>} : vector<128x128xbf16>, vector<128x64xbf16>, vector<128x64xf32> -> vector<128x64xf32>
    %c0_10 = arith.constant 0 : index
    %c0_11 = arith.constant 0 : index
    %23 = vector.load %arg6[%c0_10, %c0_11] : memref<1x64xf32, #tpu.memory_space<vmem>>, vector<1x64xf32>
    %24 = vector.broadcast %23 : vector<1x64xf32> to vector<128x64xf32>
    %25 = arith.addf %22, %24 : vector<128x64xf32>
    %26 = arith.truncf %25 : vector<128x64xf32> to vector<128x64xbf16>
    %c0_12 = arith.constant 0 : index
    %c0_13 = arith.constant 0 : index
    %27 = vector.load %arg7[%c0_12, %c0_13] : memref<64x64xbf16, #tpu.memory_space<vmem>>, vector<64x64xbf16>
    %cst_14 = arith.constant dense<0.000000e+00> : vector<128x64xf32>
    %28 = tpu.matmul %26, %27, %cst_14 {dimension_numbers = #tpu.dot_dimension_numbers<[1], [0], [0], [1], [0, 0, 1, 1], [], []>} : vector<128x64xbf16>, vector<64x64xbf16>, vector<128x64xf32> -> vector<128x64xf32>
    %c0_15 = arith.constant 0 : index
    %c0_16 = arith.constant 0 : index
    %29 = vector.load %arg8[%c0_15, %c0_16] : memref<1x64xf32, #tpu.memory_space<vmem>>, vector<1x64xf32>
    %30 = vector.broadcast %29 : vector<1x64xf32> to vector<128x64xf32>
    %31 = arith.addf %28, %30 : vector<128x64xf32>
    %32 = vector.extract_strided_slice %31 {offsets = [0, 0], sizes = [128, 32], strides = [1, 1]} : vector<128x64xf32> to vector<128x32xf32>
    %33 = vector.extract_strided_slice %31 {offsets = [0, 32], sizes = [128, 32], strides = [1, 1]} : vector<128x64xf32> to vector<128x32xf32>
    %cst_17 = arith.constant 0.000000e+00 : f32
    %34 = vector.broadcast %cst_17 : f32 to vector<128x32xf32>
    %35 = arith.maximumf %33, %34 : vector<128x32xf32>
    %36 = vector.broadcast %cst_17 : f32 to vector<128x32xf32>
    %37 = arith.subf %33, %36 : vector<128x32xf32>
    %38 = arith.cmpf one, %37, %37 : vector<128x32xf32>
    %39 = vector.broadcast %cst_17 : f32 to vector<128x32xf32>
    %40 = arith.addf %33, %39 : vector<128x32xf32>
    %41 = math.absf %37 : vector<128x32xf32>
    %cst_18 = arith.constant 0.000000e+00 : f32
    %42 = vector.broadcast %cst_18 : f32 to vector<128x32xf32>
    %43 = arith.subf %42, %41 : vector<128x32xf32>
    %44 = math.exp %43 : vector<128x32xf32>
    %45 = math.log1p %44 : vector<128x32xf32>
    %46 = arith.addf %35, %45 : vector<128x32xf32>
    %47 = arith.select %38, %40, %46 : vector<128x32xi1>, vector<128x32xf32>
    %cst_19 = arith.constant 5.000000e-01 : f32
    %48 = vector.broadcast %cst_19 : f32 to vector<128x32xf32>
    %49 = arith.mulf %48, %47 : vector<128x32xf32>
    %50 = math.exp %49 : vector<128x32xf32>
    %c0_20 = arith.constant 0 : index
    %c0_21 = arith.constant 0 : index
    %51 = vector.load %arg2[%c0_20, %c0_21] : memref<128x32xbf16, #tpu.memory_space<vmem>>, vector<128x32xbf16>
    %52 = arith.extf %51 : vector<128x32xbf16> to vector<128x32xf32>
    %53 = arith.mulf %50, %52 : vector<128x32xf32>
    %54 = arith.addf %32, %53 : vector<128x32xf32>
    %55 = arith.truncf %54 : vector<128x32xf32> to vector<128x32xbf16>
    %c0_22 = arith.constant 0 : index
    %c0_23 = arith.constant 0 : index
    %56 = vector.load %arg9[%c0_22, %c0_23] : memref<32x64xbf16, #tpu.memory_space<vmem>>, vector<32x64xbf16>
    %cst_24 = arith.constant dense<0.000000e+00> : vector<128x64xf32>
    %57 = tpu.matmul %55, %56, %cst_24 {dimension_numbers = #tpu.dot_dimension_numbers<[1], [0], [0], [1], [0, 0, 1, 1], [], []>} : vector<128x32xbf16>, vector<32x64xbf16>, vector<128x64xf32> -> vector<128x64xf32>
    %c0_25 = arith.constant 0 : index
    %c0_26 = arith.constant 0 : index
    %58 = vector.load %arg10[%c0_25, %c0_26] : memref<1x64xf32, #tpu.memory_space<vmem>>, vector<1x64xf32>
    %59 = vector.broadcast %58 : vector<1x64xf32> to vector<128x64xf32>
    %60 = arith.addf %57, %59 : vector<128x64xf32>
    %cst_27 = arith.constant 0.000000e+00 : f32
    %61 = vector.broadcast %cst_27 : f32 to vector<128x64xf32>
    %62 = arith.maximumf %60, %61 : vector<128x64xf32>
    %63 = vector.broadcast %cst_27 : f32 to vector<128x64xf32>
    %64 = arith.subf %60, %63 : vector<128x64xf32>
    %65 = arith.cmpf one, %64, %64 : vector<128x64xf32>
    %66 = vector.broadcast %cst_27 : f32 to vector<128x64xf32>
    %67 = arith.addf %60, %66 : vector<128x64xf32>
    %68 = math.absf %64 : vector<128x64xf32>
    %cst_28 = arith.constant 0.000000e+00 : f32
    %69 = vector.broadcast %cst_28 : f32 to vector<128x64xf32>
    %70 = arith.subf %69, %68 : vector<128x64xf32>
    %71 = math.exp %70 : vector<128x64xf32>
    %72 = math.log1p %71 : vector<128x64xf32>
    %73 = arith.addf %62, %72 : vector<128x64xf32>
    %74 = arith.select %65, %67, %73 : vector<128x64xi1>, vector<128x64xf32>
    %75 = arith.truncf %74 : vector<128x64xf32> to vector<128x64xbf16>
    %c0_29 = arith.constant 0 : index
    %c0_30 = arith.constant 0 : index
    %76 = vector.load %arg11[%c0_29, %c0_30] : memref<64x128xbf16, #tpu.memory_space<vmem>>, vector<64x128xbf16>
    %cst_31 = arith.constant dense<0.000000e+00> : vector<128x128xf32>
    %77 = tpu.matmul %75, %76, %cst_31 {dimension_numbers = #tpu.dot_dimension_numbers<[1], [0], [0], [1], [0, 0, 1, 1], [], []>} : vector<128x64xbf16>, vector<64x128xbf16>, vector<128x128xf32> -> vector<128x128xf32>
    %c0_32 = arith.constant 0 : index
    %c0_33 = arith.constant 0 : index
    %78 = vector.load %arg12[%c0_32, %c0_33] : memref<1x128xf32, #tpu.memory_space<vmem>>, vector<1x128xf32>
    %79 = vector.broadcast %78 : vector<1x128xf32> to vector<128x128xf32>
    %80 = arith.addf %77, %79 : vector<128x128xf32>
    %cst_34 = arith.constant 0.000000e+00 : f32
    %81 = vector.broadcast %cst_34 : f32 to vector<128x128xf32>
    %82 = arith.maximumf %80, %81 : vector<128x128xf32>
    %83 = vector.broadcast %cst_34 : f32 to vector<128x128xf32>
    %84 = arith.subf %80, %83 : vector<128x128xf32>
    %85 = arith.cmpf one, %84, %84 : vector<128x128xf32>
    %86 = vector.broadcast %cst_34 : f32 to vector<128x128xf32>
    %87 = arith.addf %80, %86 : vector<128x128xf32>
    %88 = math.absf %84 : vector<128x128xf32>
    %cst_35 = arith.constant 0.000000e+00 : f32
    %89 = vector.broadcast %cst_35 : f32 to vector<128x128xf32>
    %90 = arith.subf %89, %88 : vector<128x128xf32>
    %91 = math.exp %90 : vector<128x128xf32>
    %92 = math.log1p %91 : vector<128x128xf32>
    %93 = arith.addf %82, %92 : vector<128x128xf32>
    %94 = arith.select %85, %87, %93 : vector<128x128xi1>, vector<128x128xf32>
    %95 = arith.truncf %94 : vector<128x128xf32> to vector<128x128xbf16>
    %c0_36 = arith.constant 0 : index
    %c0_37 = arith.constant 0 : index
    %96 = vector.load %arg13[%c0_36, %c0_37] : memref<128x256xbf16, #tpu.memory_space<vmem>>, vector<128x256xbf16>
    %cst_38 = arith.constant dense<0.000000e+00> : vector<128x256xf32>
    %97 = tpu.matmul %95, %96, %cst_38 {dimension_numbers = #tpu.dot_dimension_numbers<[1], [0], [0], [1], [0, 0, 1, 1], [], []>} : vector<128x128xbf16>, vector<128x256xbf16>, vector<128x256xf32> -> vector<128x256xf32>
    %c0_39 = arith.constant 0 : index
    %c0_40 = arith.constant 0 : index
    %98 = vector.load %arg14[%c0_39, %c0_40] : memref<1x256xf32, #tpu.memory_space<vmem>>, vector<1x256xf32>
    %99 = vector.broadcast %98 : vector<1x256xf32> to vector<128x256xf32>
    %100 = arith.addf %97, %99 : vector<128x256xf32>
    %101 = arith.negf %100 : vector<128x256xf32>
    %102 = math.exp %101 : vector<128x256xf32>
    %cst_41 = arith.constant 1.000000e+00 : f32
    %103 = vector.broadcast %cst_41 : f32 to vector<128x256xf32>
    %104 = arith.addf %103, %102 : vector<128x256xf32>
    %105 = arith.divf %103, %104 : vector<128x256xf32>
    %106 = arith.truncf %105 : vector<128x256xf32> to vector<128x256xbf16>
    %c0_42 = arith.constant 0 : index
    %c0_43 = arith.constant 0 : index
    %107 = vector.load %arg15[%c0_42, %c0_43] : memref<128x256xbf16, #tpu.memory_space<vmem>>, vector<128x256xbf16>
    tpu.vector_store %arg15[%c0_42, %c0_43], %106 {strides = array<i32>} : memref<128x256xbf16, #tpu.memory_space<vmem>>, vector<128x256xbf16>,
    %c0_44 = arith.constant 0 : index
    %c0_45 = arith.constant 0 : index
    %108 = vector.load %arg16[%c0_44, %c0_45] : memref<128x128xf32, #tpu.memory_space<vmem>>, vector<128x32xf32>
    tpu.vector_store %arg16[%c0_44, %c0_45], %54 {strides = array<i32>} : memref<128x128xf32, #tpu.memory_space<vmem>>, vector<128x32xf32>,
    %c0_46 = arith.constant 0 : index
    %c32 = arith.constant 32 : index
    %109 = vector.load %arg16[%c0_46, %c32] : memref<128x128xf32, #tpu.memory_space<vmem>>, vector<128x32xf32>
    tpu.vector_store %arg16[%c0_46, %c32], %32 {strides = array<i32>} : memref<128x128xf32, #tpu.memory_space<vmem>>, vector<128x32xf32>,
    %c0_47 = arith.constant 0 : index
    %c64 = arith.constant 64 : index
    %110 = vector.load %arg16[%c0_47, %c64] : memref<128x128xf32, #tpu.memory_space<vmem>>, vector<128x32xf32>
    tpu.vector_store %arg16[%c0_47, %c64], %47 {strides = array<i32>} : memref<128x128xf32, #tpu.memory_space<vmem>>, vector<128x32xf32>,
    return
  }
  func.func @transform_0(%arg0: i32) -> (i32, i32) {
    %c0_i32 = arith.constant 0 : i32
    %c0_i32_0 = arith.constant 0 : i32
    return %arg0, %c0_i32 : i32, i32
  }
  func.func @transform_1(%arg0: i32) -> (i32, i32) {
    %c0_i32 = arith.constant 0 : i32
    %c0_i32_0 = arith.constant 0 : i32
    return %arg0, %c0_i32 : i32, i32
  }
  func.func @transform_2(%arg0: i32) -> (i32, i32) {
    %c0_i32 = arith.constant 0 : i32
    %c0_i32_0 = arith.constant 0 : i32
    %c0_i32_1 = arith.constant 0 : i32
    return %c0_i32, %c0_i32_0 : i32, i32
  }
  func.func @transform_3(%arg0: i32) -> (i32, i32) {
    %c0_i32 = arith.constant 0 : i32
    %c0_i32_0 = arith.constant 0 : i32
    %c0_i32_1 = arith.constant 0 : i32
    return %c0_i32, %c0_i32_0 : i32, i32
  }
  func.func @transform_4(%arg0: i32) -> (i32, i32) {
    %c0_i32 = arith.constant 0 : i32
    %c0_i32_0 = arith.constant 0 : i32
    %c0_i32_1 = arith.constant 0 : i32
    return %c0_i32, %c0_i32_0 : i32, i32
  }
  func.func @transform_5(%arg0: i32) -> (i32, i32) {
    %c0_i32 = arith.constant 0 : i32
    %c0_i32_0 = arith.constant 0 : i32
    %c0_i32_1 = arith.constant 0 : i32
    return %c0_i32, %c0_i32_0 : i32, i32
  }
  func.func @transform_6(%arg0: i32) -> (i32, i32) {
    %c0_i32 = arith.constant 0 : i32
    %c0_i32_0 = arith.constant 0 : i32
    %c0_i32_1 = arith.constant 0 : i32
    return %c0_i32, %c0_i32_0 : i32, i32
  }
  func.func @transform_7(%arg0: i32) -> (i32, i32) {
    %c0_i32 = arith.constant 0 : i32
    %c0_i32_0 = arith.constant 0 : i32
    %c0_i32_1 = arith.constant 0 : i32
    return %c0_i32, %c0_i32_0 : i32, i32
  }
  func.func @transform_8(%arg0: i32) -> (i32, i32) {
    %c0_i32 = arith.constant 0 : i32
    %c0_i32_0 = arith.constant 0 : i32
    %c0_i32_1 = arith.constant 0 : i32
    return %c0_i32, %c0_i32_0 : i32, i32
  }
  func.func @transform_9(%arg0: i32) -> (i32, i32) {
    %c0_i32 = arith.constant 0 : i32
    %c0_i32_0 = arith.constant 0 : i32
    %c0_i32_1 = arith.constant 0 : i32
    return %c0_i32, %c0_i32_0 : i32, i32
  }
  func.func @transform_10(%arg0: i32) -> (i32, i32) {
    %c0_i32 = arith.constant 0 : i32
    %c0_i32_0 = arith.constant 0 : i32
    %c0_i32_1 = arith.constant 0 : i32
    return %c0_i32, %c0_i32_0 : i32, i32
  }
  func.func @transform_11(%arg0: i32) -> (i32, i32) {
    %c0_i32 = arith.constant 0 : i32
    %c0_i32_0 = arith.constant 0 : i32
    %c0_i32_1 = arith.constant 0 : i32
    return %c0_i32, %c0_i32_0 : i32, i32
  }
  func.func @transform_12(%arg0: i32) -> (i32, i32) {
    %c0_i32 = arith.constant 0 : i32
    %c0_i32_0 = arith.constant 0 : i32
    %c0_i32_1 = arith.constant 0 : i32
    return %c0_i32, %c0_i32_0 : i32, i32
  }
  func.func @transform_13(%arg0: i32) -> (i32, i32) {
    %c0_i32 = arith.constant 0 : i32
    %c0_i32_0 = arith.constant 0 : i32
    %c0_i32_1 = arith.constant 0 : i32
    return %c0_i32, %c0_i32_0 : i32, i32
  }
  func.func @transform_14(%arg0: i32) -> (i32, i32) {
    %c0_i32 = arith.constant 0 : i32
    %c0_i32_0 = arith.constant 0 : i32
    return %arg0, %c0_i32 : i32, i32
  }
  func.func @transform_15(%arg0: i32) -> (i32, i32) {
    %c0_i32 = arith.constant 0 : i32
    %c0_i32_0 = arith.constant 0 : i32
    return %arg0, %c0_i32 : i32, i32
  }
}

</mosaic_0001>

<llo_original>
// kernel: tpu_custom_call.1
$region0: #{tpu_custom_call.1}
  #allocation0 [shape = 'u32[]', space=smem, size = 0x4, offset = 0x4, fixed_abs, tag = 'smem constant byte address 0x4 - core index']
  #allocation1 [shape = 'u32[144,128]{1,0:T(1,128)}', space=vmem, size = 0x12000, scoped, tag = 'internal scratch']
  %s0 = inlined_call_operand.vmem [shape: bf16[256,256], index: 0, kind: input, shape index: {}]
  %s1 = inlined_call_operand.vmem [shape: bf16[256,32], index: 1, kind: input, shape index: {}]
  %s2 = inlined_call_operand.hbm [shape: bf16[256,128], index: 2, kind: input, shape index: {}]
  %s3 = inlined_call_operand.vmem [shape: f32[1,128], index: 3, kind: input, shape index: {}]
  %s4 = inlined_call_operand.vmem [shape: bf16[128,64], index: 4, kind: input, shape index: {}]
  %s5 = inlined_call_operand.vmem [shape: f32[1,64], index: 5, kind: input, shape index: {}]
  %s6 = inlined_call_operand.hbm [shape: bf16[64,64], index: 6, kind: input, shape index: {}]
  %s7 = inlined_call_operand.vmem [shape: f32[1,64], index: 7, kind: input, shape index: {}]
  %s8 = inlined_call_operand.hbm [shape: bf16[32,64], index: 8, kind: input, shape index: {}]
  %s9 = inlined_call_operand.vmem [shape: f32[1,64], index: 9, kind: input, shape index: {}]
  %s10 = inlined_call_operand.hbm [shape: bf16[64,128], index: 10, kind: input, shape index: {}]
  %s11 = inlined_call_operand.vmem [shape: f32[1,128], index: 11, kind: input, shape index: {}]
  %s12 = inlined_call_operand.hbm [shape: bf16[128,256], index: 12, kind: input, shape index: {}]
  %s13 = inlined_call_operand.vmem [shape: f32[1,256], index: 13, kind: input, shape index: {}]
  %s14 = inlined_call_operand.hbm [shape: bf16[256,256], index: 14, kind: output, shape index: {0}]
  %s15 = inlined_call_operand.hbm [shape: f32[256,128], index: 15, kind: output, shape index: {1}]
  %16 = xla_tuple %s14, %s15
  %s17 = sld [smem:[#allocation0]]
  $region117: #{tpu_custom_call.1} parent=0
    _
  %s19 = ssub.s32 1, %s17
  %s20 = scalar_select 0, %s19, %s17
  $region1: #{tpu_custom_call.1} parent=0
    #allocation2 [shape = 'u8[65536]{0}', space=vmem, size = 0x10000, scoped, tag = 'input window, operand 2, single buffered']
    #allocation3 [shape = 's32[2]{0}', space=sflag, size = 0x8, scoped, tag = 'scoped memory for tpu_custom_call.1']
    #allocation4 [shape = 's32[2]{0}', space=sflag, size = 0x8, scoped, tag = 'scoped memory for tpu_custom_call.1']
    #allocation5 [shape = 'u8[16384]{0}', space=vmem, size = 0x4000, scoped, tag = 'input window, operand 6, single buffered']
    #allocation6 [shape = 's32[1]{0}', space=sflag, size = 0x4, scoped, tag = 'scoped memory for tpu_custom_call.1']
    #allocation7 [shape = 'u8[8192]{0}', space=vmem, size = 0x2000, scoped, tag = 'input window, operand 8, single buffered']
    #allocation8 [shape = 'u8[16384]{0}', space=vmem, size = 0x4000, scoped, tag = 'input window, operand 10, single buffered']
    #allocation9 [shape = 's32[1]{0}', space=sflag, size = 0x4, scoped, tag = 'scoped memory for tpu_custom_call.1']
    #allocation10 [shape = 'u8[65536]{0}', space=vmem, size = 0x10000, scoped, tag = 'input window, operand 12, single buffered']
    #allocation11 [shape = 'u8[131072]{0}', space=vmem, size = 0x20000, scoped, tag = 'output window, operand 0']
    #allocation12 [shape = 'u8[131072]{0}', space=vmem, size = 0x20000, scoped, tag = 'output window, operand 1']
    #allocation13 [shape = 's32[2]{0}', space=sflag, size = 0x8, scoped, tag = 'scoped memory for tpu_custom_call.1']
    %21 = vsyncpa [#allocation3], 0
    %22 = vsyncpa [#allocation6], 0
    %23 = vsyncpa [#allocation9], 0
    %24 = vsyncpa [#allocation4], 0
    %s25 = scalar_lea.sflag [#allocation4], 1
    %26 = vsyncpa %s25, 0
    %27 = vsyncpa [#allocation13], 0
    %s28 = scalar_lea.sflag [#allocation13], 1
    %29 = vsyncpa %s28, 0
    loop: start=0, step=1, limit=4
    $region2: #{tpu_custom_call.1} parent=1 // loop_pre_header
      _
    $region3: #{tpu_custom_call.1} parent=1 // loop_header
      %s31 = sphi 0, %s35
      %p32 = scmp.ge.s32.totalorder %s31, 4
      %s41 = sphi 0, %s43
      %s44 = sphi 0, %s41
      %s45 = sphi 0, %s44
      %s61 = sphi 0, %s45
      %s67 = sphi 0, %s69
      %s70 = sphi 0, %s67
      %s71 = sphi 0, %s70
      %s87 = sphi 0, %s71
      %s91 = sphi 0, %s91
      %s93 = sphi 0, %s91
      %s94 = sphi 0, %s93
      %s108 = sphi 0, %s94
      %s112 = sphi 0, %s112
      %s114 = sphi 0, %s112
      %s115 = sphi 0, %s114
      %s129 = sphi 0, %s115
      %s133 = sphi 0, %s133
      %s135 = sphi 0, %s133
      %s136 = sphi 0, %s135
      %s150 = sphi 0, %s136
      %s154 = sphi 0, %s154
      %s156 = sphi 0, %s154
      %s157 = sphi 0, %s156
      %s171 = sphi 0, %s157
      %s175 = sphi 0, %s175
      %s177 = sphi 0, %s175
      %s178 = sphi 0, %s177
      %s192 = sphi 0, %s178
      %s196 = sphi 0, %s196
      %s198 = sphi 0, %s196
      %s199 = sphi 0, %s198
      %s213 = sphi 0, %s199
      %s217 = sphi 0, %s217
      %s219 = sphi 0, %s217
      %s220 = sphi 0, %s219
      %s234 = sphi 0, %s220
      %s238 = sphi 0, %s238
      %s240 = sphi 0, %s238
      %s241 = sphi 0, %s240
      %s255 = sphi 0, %s241
      %s259 = sphi 0, %s259
      %s261 = sphi 0, %s259
      %s262 = sphi 0, %s261
      %s276 = sphi 0, %s262
      %s280 = sphi 0, %s280
      %s282 = sphi 0, %s280
      %s283 = sphi 0, %s282
      %s297 = sphi 0, %s283
      %s301 = sphi 0, %s301
      %s303 = sphi 0, %s301
      %s304 = sphi 0, %s303
      %s318 = sphi 0, %s304
      %s322 = sphi 0, %s322
      %s324 = sphi 0, %s322
      %s325 = sphi 0, %s324
      %s339 = sphi 0, %s325
      %s345 = sphi 0, %s347
      %s348 = sphi 0, %s345
      %s349 = sphi 0, %s348
      %s365 = sphi 0, %s349
      %s371 = sphi 0, %s373
      %s374 = sphi 0, %s371
      %s375 = sphi 0, %s374
      %s391 = sphi 0, %s375
    $region4: #{tpu_custom_call.1} parent=1 // loop_header_branch
      %34 = sbr.rel (%p32) target = $region8
    $region5: #{tpu_custom_call.1} parent=1 // loop_body
      %s36 = ssub.s32 %s31, 1
      %s37 = ssub.s32 %s31, 2
      %s38 = sadd.s32 %s31, 1
      %s39 = ssub.s32 %s31, %s38
      %p40 = scmp.eq.s32.totalorder %s39, 0
      %s42 = sadd.s32 %s41, 1
      %s43 = scalar_select %p40, %s41, %s42
      %p46 = pneg %p40
      %p47 = scmp.eq.s32.totalorder %s31, 1
      %p48 = por %p46, %p47
      %p49 = scmp.ne.s32.totalorder %s41, %s44
      %p50 = scmp.eq.s32.totalorder %s31, 0
      %p51 = por %p49, %p50
      %p52 = scmp.ne.s32.totalorder %s41, %s44
      %p53 = scmp.eq.s32.totalorder %s36, 1
      %p54 = por %p52, %p53
      %p55 = scmp.ne.s32.totalorder %s44, %s45
      %p56 = scmp.eq.s32.totalorder %s36, 0
      %p57 = por %p55, %p56
      %p58 = scmp.ne.s32.totalorder %s44, %s45
      %p59 = scmp.eq.s32.totalorder %s37, 1
      %p60 = por %p58, %p59
      %p62 = scmp.ne.s32.totalorder %s45, %s61
      %p63 = scmp.eq.s32.totalorder %s37, 0
      %p64 = por %p62, %p63
      %s65 = ssub.s32 %s31, %s38
      %p66 = scmp.eq.s32.totalorder %s65, 0
      %s68 = sadd.s32 %s67, 1
      %s69 = scalar_select %p66, %s67, %s68
      %p72 = pneg %p66
      %p73 = scmp.eq.s32.totalorder %s31, 1
      %p74 = por %p72, %p73
      %p75 = scmp.ne.s32.totalorder %s67, %s70
      %p76 = scmp.eq.s32.totalorder %s31, 0
      %p77 = por %p75, %p76
      %p78 = scmp.ne.s32.totalorder %s67, %s70
      %p79 = scmp.eq.s32.totalorder %s36, 1
      %p80 = por %p78, %p79
      %p81 = scmp.ne.s32.totalorder %s70, %s71
      %p82 = scmp.eq.s32.totalorder %s36, 0
      %p83 = por %p81, %p82
      %p84 = scmp.ne.s32.totalorder %s70, %s71
      %p85 = scmp.eq.s32.totalorder %s37, 1
      %p86 = por %p84, %p85
      %p88 = scmp.ne.s32.totalorder %s71, %s87
      %p89 = scmp.eq.s32.totalorder %s37, 0
      %p90 = por %p88, %p89
      %s92 = sadd.s32 %s91, 1
      %p95 = scmp.eq.s32.totalorder %s31, 1
      %p96 = scmp.ne.s32.totalorder %s91, %s93
      %p97 = scmp.eq.s32.totalorder %s31, 0
      %p98 = por %p96, %p97
      %p99 = scmp.ne.s32.totalorder %s91, %s93
      %p100 = scmp.eq.s32.totalorder %s36, 1
      %p101 = por %p99, %p100
      %p102 = scmp.ne.s32.totalorder %s93, %s94
      %p103 = scmp.eq.s32.totalorder %s36, 0
      %p104 = por %p102, %p103
      %p105 = scmp.ne.s32.totalorder %s93, %s94
      %p106 = scmp.eq.s32.totalorder %s37, 1
      %p107 = por %p105, %p106
      %p109 = scmp.ne.s32.totalorder %s94, %s108
      %p110 = scmp.eq.s32.totalorder %s37, 0
      %p111 = por %p109, %p110
      %s113 = sadd.s32 %s112, 1
      %p116 = scmp.eq.s32.totalorder %s31, 1
      %p117 = scmp.ne.s32.totalorder %s112, %s114
      %p118 = scmp.eq.s32.totalorder %s31, 0
      %p119 = por %p117, %p118
      %p120 = scmp.ne.s32.totalorder %s112, %s114
      %p121 = scmp.eq.s32.totalorder %s36, 1
      %p122 = por %p120, %p121
      %p123 = scmp.ne.s32.totalorder %s114, %s115
      %p124 = scmp.eq.s32.totalorder %s36, 0
      %p125 = por %p123, %p124
      %p126 = scmp.ne.s32.totalorder %s114, %s115
      %p127 = scmp.eq.s32.totalorder %s37, 1
      %p128 = por %p126, %p127
      %p130 = scmp.ne.s32.totalorder %s115, %s129
      %p131 = scmp.eq.s32.totalorder %s37, 0
      %p132 = por %p130, %p131
      %s134 = sadd.s32 %s133, 1
      %p137 = scmp.eq.s32.totalorder %s31, 1
      %p138 = scmp.ne.s32.totalorder %s133, %s135
      %p139 = scmp.eq.s32.totalorder %s31, 0
      %p140 = por %p138, %p139
      %p141 = scmp.ne.s32.totalorder %s133, %s135
      %p142 = scmp.eq.s32.totalorder %s36, 1
      %p143 = por %p141, %p142
      %p144 = scmp.ne.s32.totalorder %s135, %s136
      %p145 = scmp.eq.s32.totalorder %s36, 0
      %p146 = por %p144, %p145
      %p147 = scmp.ne.s32.totalorder %s135, %s136
      %p148 = scmp.eq.s32.totalorder %s37, 1
      %p149 = por %p147, %p148
      %p151 = scmp.ne.s32.totalorder %s136, %s150
      %p152 = scmp.eq.s32.totalorder %s37, 0
      %p153 = por %p151, %p152
      %s155 = sadd.s32 %s154, 1
      %p158 = scmp.eq.s32.totalorder %s31, 1
      %p159 = scmp.ne.s32.totalorder %s154, %s156
      %p160 = scmp.eq.s32.totalorder %s31, 0
      %p161 = por %p159, %p160
      %p162 = scmp.ne.s32.totalorder %s154, %s156
      %p163 = scmp.eq.s32.totalorder %s36, 1
      %p164 = por %p162, %p163
      %p165 = scmp.ne.s32.totalorder %s156, %s157
      %p166 = scmp.eq.s32.totalorder %s36, 0
      %p167 = por %p165, %p166
      %p168 = scmp.ne.s32.totalorder %s156, %s157
      %p169 = scmp.eq.s32.totalorder %s37, 1
      %p170 = por %p168, %p169
      %p172 = scmp.ne.s32.totalorder %s157, %s171
      %p173 = scmp.eq.s32.totalorder %s37, 0
      %p174 = por %p172, %p173
      %s176 = sadd.s32 %s175, 1
      %p179 = scmp.eq.s32.totalorder %s31, 1
      %p180 = scmp.ne.s32.totalorder %s175, %s177
      %p181 = scmp.eq.s32.totalorder %s31, 0
      %p182 = por %p180, %p181
      %p183 = scmp.ne.s32.totalorder %s175, %s177
      %p184 = scmp.eq.s32.totalorder %s36, 1
      %p185 = por %p183, %p184
      %p186 = scmp.ne.s32.totalorder %s177, %s178
      %p187 = scmp.eq.s32.totalorder %s36, 0
      %p188 = por %p186, %p187
      %p189 = scmp.ne.s32.totalorder %s177, %s178
      %p190 = scmp.eq.s32.totalorder %s37, 1
      %p191 = por %p189, %p190
      %p193 = scmp.ne.s32.totalorder %s178, %s192
      %p194 = scmp.eq.s32.totalorder %s37, 0
      %p195 = por %p193, %p194
      %s197 = sadd.s32 %s196, 1
      %p200 = scmp.eq.s32.totalorder %s31, 1
      %p201 = scmp.ne.s32.totalorder %s196, %s198
      %p202 = scmp.eq.s32.totalorder %s31, 0
      %p203 = por %p201, %p202
      %p204 = scmp.ne.s32.totalorder %s196, %s198
      %p205 = scmp.eq.s32.totalorder %s36, 1
      %p206 = por %p204, %p205
      %p207 = scmp.ne.s32.totalorder %s198, %s199
      %p208 = scmp.eq.s32.totalorder %s36, 0
      %p209 = por %p207, %p208
      %p210 = scmp.ne.s32.totalorder %s198, %s199
      %p211 = scmp.eq.s32.totalorder %s37, 1
      %p212 = por %p210, %p211
      %p214 = scmp.ne.s32.totalorder %s199, %s213
      %p215 = scmp.eq.s32.totalorder %s37, 0
      %p216 = por %p214, %p215
      %s218 = sadd.s32 %s217, 1
      %p221 = scmp.eq.s32.totalorder %s31, 1
      %p222 = scmp.ne.s32.totalorder %s217, %s219
      %p223 = scmp.eq.s32.totalorder %s31, 0
      %p224 = por %p222, %p223
      %p225 = scmp.ne.s32.totalorder %s217, %s219
      %p226 = scmp.eq.s32.totalorder %s36, 1
      %p227 = por %p225, %p226
      %p228 = scmp.ne.s32.totalorder %s219, %s220
      %p229 = scmp.eq.s32.totalorder %s36, 0
      %p230 = por %p228, %p229
      %p231 = scmp.ne.s32.totalorder %s219, %s220
      %p232 = scmp.eq.s32.totalorder %s37, 1
      %p233 = por %p231, %p232
      %p235 = scmp.ne.s32.totalorder %s220, %s234
      %p236 = scmp.eq.s32.totalorder %s37, 0
      %p237 = por %p235, %p236
      %s239 = sadd.s32 %s238, 1
      %p242 = scmp.eq.s32.totalorder %s31, 1
      %p243 = scmp.ne.s32.totalorder %s238, %s240
      %p244 = scmp.eq.s32.totalorder %s31, 0
      %p245 = por %p243, %p244
      %p246 = scmp.ne.s32.totalorder %s238, %s240
      %p247 = scmp.eq.s32.totalorder %s36, 1
      %p248 = por %p246, %p247
      %p249 = scmp.ne.s32.totalorder %s240, %s241
      %p250 = scmp.eq.s32.totalorder %s36, 0
      %p251 = por %p249, %p250
      %p252 = scmp.ne.s32.totalorder %s240, %s241
      %p253 = scmp.eq.s32.totalorder %s37, 1
      %p254 = por %p252, %p253
      %p256 = scmp.ne.s32.totalorder %s241, %s255
      %p257 = scmp.eq.s32.totalorder %s37, 0
      %p258 = por %p256, %p257
      %s260 = sadd.s32 %s259, 1
      %p263 = scmp.eq.s32.totalorder %s31, 1
      %p264 = scmp.ne.s32.totalorder %s259, %s261
      %p265 = scmp.eq.s32.totalorder %s31, 0
      %p266 = por %p264, %p265
      %p267 = scmp.ne.s32.totalorder %s259, %s261
      %p268 = scmp.eq.s32.totalorder %s36, 1
      %p269 = por %p267, %p268
      %p270 = scmp.ne.s32.totalorder %s261, %s262
      %p271 = scmp.eq.s32.totalorder %s36, 0
      %p272 = por %p270, %p271
      %p273 = scmp.ne.s32.totalorder %s261, %s262
      %p274 = scmp.eq.s32.totalorder %s37, 1
      %p275 = por %p273, %p274
      %p277 = scmp.ne.s32.totalorder %s262, %s276
      %p278 = scmp.eq.s32.totalorder %s37, 0
      %p279 = por %p277, %p278
      %s281 = sadd.s32 %s280, 1
      %p284 = scmp.eq.s32.totalorder %s31, 1
      %p285 = scmp.ne.s32.totalorder %s280, %s282
      %p286 = scmp.eq.s32.totalorder %s31, 0
      %p287 = por %p285, %p286
      %p288 = scmp.ne.s32.totalorder %s280, %s282
      %p289 = scmp.eq.s32.totalorder %s36, 1
      %p290 = por %p288, %p289
      %p291 = scmp.ne.s32.totalorder %s282, %s283
      %p292 = scmp.eq.s32.totalorder %s36, 0
      %p293 = por %p291, %p292
      %p294 = scmp.ne.s32.totalorder %s282, %s283
      %p295 = scmp.eq.s32.totalorder %s37, 1
      %p296 = por %p294, %p295
      %p298 = scmp.ne.s32.totalorder %s283, %s297
      %p299 = scmp.eq.s32.totalorder %s37, 0
      %p300 = por %p298, %p299
      %s302 = sadd.s32 %s301, 1
      %p305 = scmp.eq.s32.totalorder %s31, 1
      %p306 = scmp.ne.s32.totalorder %s301, %s303
      %p307 = scmp.eq.s32.totalorder %s31, 0
      %p308 = por %p306, %p307
      %p309 = scmp.ne.s32.totalorder %s301, %s303
      %p310 = scmp.eq.s32.totalorder %s36, 1
      %p311 = por %p309, %p310
      %p312 = scmp.ne.s32.totalorder %s303, %s304
      %p313 = scmp.eq.s32.totalorder %s36, 0
      %p314 = por %p312, %p313
      %p315 = scmp.ne.s32.totalorder %s303, %s304
      %p316 = scmp.eq.s32.totalorder %s37, 1
      %p317 = por %p315, %p316
      %p319 = scmp.ne.s32.totalorder %s304, %s318
      %p320 = scmp.eq.s32.totalorder %s37, 0
      %p321 = por %p319, %p320
      %s323 = sadd.s32 %s322, 1
      %p326 = scmp.eq.s32.totalorder %s31, 1
      %p327 = scmp.ne.s32.totalorder %s322, %s324
      %p328 = scmp.eq.s32.totalorder %s31, 0
      %p329 = por %p327, %p328
      %p330 = scmp.ne.s32.totalorder %s322, %s324
      %p331 = scmp.eq.s32.totalorder %s36, 1
      %p332 = por %p330, %p331
      %p333 = scmp.ne.s32.totalorder %s324, %s325
      %p334 = scmp.eq.s32.totalorder %s36, 0
      %p335 = por %p333, %p334
      %p336 = scmp.ne.s32.totalorder %s324, %s325
      %p337 = scmp.eq.s32.totalorder %s37, 1
      %p338 = por %p336, %p337
      %p340 = scmp.ne.s32.totalorder %s325, %s339
      %p341 = scmp.eq.s32.totalorder %s37, 0
      %p342 = por %p340, %p341
      %s343 = ssub.s32 %s31, %s38
      %p344 = scmp.eq.s32.totalorder %s343, 0
      %s346 = sadd.s32 %s345, 1
      %s347 = scalar_select %p344, %s345, %s346
      %p350 = pneg %p344
      %p351 = scmp.eq.s32.totalorder %s31, 1
      %p352 = por %p350, %p351
      %p353 = scmp.ne.s32.totalorder %s345, %s348
      %p354 = scmp.eq.s32.totalorder %s31, 0
      %p355 = por %p353, %p354
      %p356 = scmp.ne.s32.totalorder %s345, %s348
      %p357 = scmp.eq.s32.totalorder %s36, 1
      %p358 = por %p356, %p357
      %p359 = scmp.ne.s32.totalorder %s348, %s349
      %p360 = scmp.eq.s32.totalorder %s36, 0
      %p361 = por %p359, %p360
      %p362 = scmp.ne.s32.totalorder %s348, %s349
      %p363 = scmp.eq.s32.totalorder %s37, 1
      %p364 = por %p362, %p363
      %p366 = scmp.ne.s32.totalorder %s349, %s365
      %p367 = scmp.eq.s32.totalorder %s37, 0
      %p368 = por %p366, %p367
      %s369 = ssub.s32 %s31, %s38
      %p370 = scmp.eq.s32.totalorder %s369, 0
      %s372 = sadd.s32 %s371, 1
      %s373 = scalar_select %p370, %s371, %s372
      %p376 = pneg %p370
      %p377 = scmp.eq.s32.totalorder %s31, 1
      %p378 = por %p376, %p377
      %p379 = scmp.ne.s32.totalorder %s371, %s374
      %p380 = scmp.eq.s32.totalorder %s31, 0
      %p381 = por %p379, %p380
      %p382 = scmp.ne.s32.totalorder %s371, %s374
      %p383 = scmp.eq.s32.totalorder %s36, 1
      %p384 = por %p382, %p383
      %p385 = scmp.ne.s32.totalorder %s374, %s375
      %p386 = scmp.eq.s32.totalorder %s36, 0
      %p387 = por %p385, %p386
      %p388 = scmp.ne.s32.totalorder %s374, %s375
      %p389 = scmp.eq.s32.totalorder %s37, 1
      %p390 = por %p388, %p389
      %p392 = scmp.ne.s32.totalorder %s375, %s391
      %p393 = scmp.eq.s32.totalorder %s37, 0
      %p394 = por %p392, %p393
      %p395 = scmp.le.s32.totalorder 1, %s31
      %p396 = scmp.lt.s32.totalorder %s31, 3
      %p397 = pnand %p395, %p396
      %p398 = pneg %p397
      // Predicated region
      $region9: #{tpu_custom_call.1} parent=5 // pred_check
        _
      $region10: #{tpu_custom_call.1} parent=5 // pred_check_branch
        %400 = sbr.rel (%p397) target = $region12
      $region11: #{tpu_custom_call.1} parent=5 // pred_region
        %s401 = ssub.s32 %s31, 1
        // Predicated region
        $region13: #{tpu_custom_call.1} parent=11 // pred_check
          %p402 = pneg %p104
        $region14: #{tpu_custom_call.1} parent=11 // pred_check_branch
          %404 = sbr.rel (%p402) target = $region16
        $region15: #{tpu_custom_call.1} parent=11 // pred_region
          %s406 = ssub.s32 2048, 2048
          %407 = vsyncadd [#allocation3], %s406
          %s408 = sshll.u32 [#allocation2], 4
          %s409 = int_to_ptr.vmem [resolvable:$true] %s408
          %414 = dma.hbm_to_vmem [thread:$0]  %s2, 2048, %s409, [#allocation3], 64, 64, 4
        $region16: #{tpu_custom_call.1} parent=11 // pred_fallthru
          _
        // Predicated region
        $region17: #{tpu_custom_call.1} parent=11 // pred_check
          %p415 = pneg %p125
        $region18: #{tpu_custom_call.1} parent=11 // pred_check_branch
          %417 = sbr.rel (%p415) target = $region20
        $region19: #{tpu_custom_call.1} parent=11 // pred_region
          _
        $region20: #{tpu_custom_call.1} parent=11 // pred_fallthru
          _
        // Predicated region
        $region21: #{tpu_custom_call.1} parent=11 // pred_check
          %p418 = pneg %p146
        $region22: #{tpu_custom_call.1} parent=11 // pred_check_branch
          %420 = sbr.rel (%p418) target = $region24
        $region23: #{tpu_custom_call.1} parent=11 // pred_region
          _
        $region24: #{tpu_custom_call.1} parent=11 // pred_fallthru
          _
        // Predicated region
        $region25: #{tpu_custom_call.1} parent=11 // pred_check
          %p421 = pneg %p167
        $region26: #{tpu_custom_call.1} parent=11 // pred_check_branch
          %423 = sbr.rel (%p421) target = $region28
        $region27: #{tpu_custom_call.1} parent=11 // pred_region
          _
        $region28: #{tpu_custom_call.1} parent=11 // pred_fallthru
          _
        // Predicated region
        $region29: #{tpu_custom_call.1} parent=11 // pred_check
          %p424 = pneg %p188
        $region30: #{tpu_custom_call.1} parent=11 // pred_check_branch
          %426 = sbr.rel (%p424) target = $region32
        $region31: #{tpu_custom_call.1} parent=11 // pred_region
          %s428 = ssub.s32 512, 512
          %429 = vsyncadd [#allocation6], %s428
          %s430 = sshll.u32 [#allocation5], 4
          %s431 = int_to_ptr.vmem [resolvable:$true] %s430
          %436 = dma.hbm_to_vmem [thread:$0]  %s6, 512, %s431, [#allocation6], 64, 64, 4
        $region32: #{tpu_custom_call.1} parent=11 // pred_fallthru
          _
        // Predicated region
        $region33: #{tpu_custom_call.1} parent=11 // pred_check
          %p437 = pneg %p209
        $region34: #{tpu_custom_call.1} parent=11 // pred_check_branch
          %439 = sbr.rel (%p437) target = $region36
        $region35: #{tpu_custom_call.1} parent=11 // pred_region
          _
        $region36: #{tpu_custom_call.1} parent=11 // pred_fallthru
          _
        // Predicated region
        $region37: #{tpu_custom_call.1} parent=11 // pred_check
          %p440 = pneg %p230
        $region38: #{tpu_custom_call.1} parent=11 // pred_check_branch
          %442 = sbr.rel (%p440) target = $region40
        $region39: #{tpu_custom_call.1} parent=11 // pred_region
          %s444 = ssub.s32 256, 256
          %445 = vsyncadd [#allocation6], %s444
          %s446 = sshll.u32 [#allocation7], 4
          %s447 = int_to_ptr.vmem [resolvable:$true] %s446
          %452 = dma.hbm_to_vmem [thread:$0]  %s8, 256, %s447, [#allocation6], 64, 64, 4
        $region40: #{tpu_custom_call.1} parent=11 // pred_fallthru
          _
        // Predicated region
        $region41: #{tpu_custom_call.1} parent=11 // pred_check
          %p453 = pneg %p251
        $region42: #{tpu_custom_call.1} parent=11 // pred_check_branch
          %455 = sbr.rel (%p453) target = $region44
        $region43: #{tpu_custom_call.1} parent=11 // pred_region
          _
        $region44: #{tpu_custom_call.1} parent=11 // pred_fallthru
          _
        // Predicated region
        $region45: #{tpu_custom_call.1} parent=11 // pred_check
          %p456 = pneg %p272
        $region46: #{tpu_custom_call.1} parent=11 // pred_check_branch
          %458 = sbr.rel (%p456) target = $region48
        $region47: #{tpu_custom_call.1} parent=11 // pred_region
          %s460 = ssub.s32 512, 512
          %461 = vsyncadd [#allocation9], %s460
          %s462 = sshll.u32 [#allocation8], 4
          %s463 = int_to_ptr.vmem [resolvable:$true] %s462
          %468 = dma.hbm_to_vmem [thread:$0]  %s10, 512, %s463, [#allocation9], 64, 64, 4
        $region48: #{tpu_custom_call.1} parent=11 // pred_fallthru
          _
        // Predicated region
        $region49: #{tpu_custom_call.1} parent=11 // pred_check
          %p469 = pneg %p293
        $region50: #{tpu_custom_call.1} parent=11 // pred_check_branch
          %471 = sbr.rel (%p469) target = $region52
        $region51: #{tpu_custom_call.1} parent=11 // pred_region
          _
        $region52: #{tpu_custom_call.1} parent=11 // pred_fallthru
          _
        // Predicated region
        $region53: #{tpu_custom_call.1} parent=11 // pred_check
          %p472 = pneg %p314
        $region54: #{tpu_custom_call.1} parent=11 // pred_check_branch
          %474 = sbr.rel (%p472) target = $region56
        $region55: #{tpu_custom_call.1} parent=11 // pred_region
          %s476 = ssub.s32 2048, 2048
          %477 = vsyncadd [#allocation9], %s476
          %s478 = sshll.u32 [#allocation10], 4
          %s479 = int_to_ptr.vmem [resolvable:$true] %s478
          %484 = dma.hbm_to_vmem [thread:$0]  %s12, 2048, %s479, [#allocation9], 128, 128, 8
        $region56: #{tpu_custom_call.1} parent=11 // pred_fallthru
          _
        // Predicated region
        $region57: #{tpu_custom_call.1} parent=11 // pred_check
          %p485 = pneg %p335
        $region58: #{tpu_custom_call.1} parent=11 // pred_check_branch
          %487 = sbr.rel (%p485) target = $region60
        $region59: #{tpu_custom_call.1} parent=11 // pred_region
          _
        $region60: #{tpu_custom_call.1} parent=11 // pred_fallthru
          _
      $region12: #{tpu_custom_call.1} parent=5 // pred_fallthru
        _
      %p488 = scmp.lt.s32.totalorder %s31, 2
      // Predicated region
      $region61: #{tpu_custom_call.1} parent=5 // pred_check
        %p489 = pneg %p488
      $region62: #{tpu_custom_call.1} parent=5 // pred_check_branch
        %491 = sbr.rel (%p489) target = $region64
      $region63: #{tpu_custom_call.1} parent=5 // pred_region
        // Predicated region
        $region65: #{tpu_custom_call.1} parent=63 // pred_check
          %p492 = pneg %p51
        $region66: #{tpu_custom_call.1} parent=63 // pred_check_branch
          %494 = sbr.rel (%p492) target = $region68
        $region67: #{tpu_custom_call.1} parent=63 // pred_region
          %s495 = smul.u32 16, %s31
          %p496 = scmp.lt.s32.totalorder %s495, 31
          %s497 = scalar_select %p496, %s495, 31
          %s498 = smul.addr %s497, 2
          %s499 = smul.addr %s498, 4
          %s500 = scalar_lea.vmem %s0, %s499
          %s501 = smul.u32 16, %s31
        $region68: #{tpu_custom_call.1} parent=63 // pred_fallthru
          _
        // Predicated region
        $region69: #{tpu_custom_call.1} parent=63 // pred_check
          %p502 = pneg %p77
        $region70: #{tpu_custom_call.1} parent=63 // pred_check_branch
          %504 = sbr.rel (%p502) target = $region72
        $region71: #{tpu_custom_call.1} parent=63 // pred_region
          %s505 = smul.u32 16, %s31
          %p506 = scmp.lt.s32.totalorder %s505, 31
          %s507 = scalar_select %p506, %s505, 31
          %s508 = smul.addr %s507, 4
          %s509 = scalar_lea.vmem %s1, %s508
          %s510 = smul.u32 16, %s31
        $region72: #{tpu_custom_call.1} parent=63 // pred_fallthru
          _
      $region64: #{tpu_custom_call.1} parent=5 // pred_fallthru
        _
      %p511 = scmp.le.s32.totalorder 1, %s31
      %p512 = scmp.lt.s32.totalorder %s31, 3
      %p513 = pnand %p511, %p512
      %p514 = pneg %p513
      // Predicated region
      $region73: #{tpu_custom_call.1} parent=5 // pred_check
        _
      $region74: #{tpu_custom_call.1} parent=5 // pred_check_branch
        %516 = sbr.rel (%p513) target = $region76
      $region75: #{tpu_custom_call.1} parent=5 // pred_region
        %s517 = ssub.s32 %s31, 1
        // Predicated region
        $region77: #{tpu_custom_call.1} parent=75 // pred_check
          %p518 = pneg %p104
        $region78: #{tpu_custom_call.1} parent=75 // pred_check_branch
          %520 = sbr.rel (%p518) target = $region80
        $region79: #{tpu_custom_call.1} parent=75 // pred_region
          %521 = dma.done [#allocation3], 2048
        $region80: #{tpu_custom_call.1} parent=75 // pred_fallthru
          _
        // Predicated region
        $region81: #{tpu_custom_call.1} parent=75 // pred_check
          %p522 = pneg %p188
        $region82: #{tpu_custom_call.1} parent=75 // pred_check_branch
          %524 = sbr.rel (%p522) target = $region84
        $region83: #{tpu_custom_call.1} parent=75 // pred_region
          %525 = dma.done [#allocation6], 512
        $region84: #{tpu_custom_call.1} parent=75 // pred_fallthru
          _
        // Predicated region
        $region85: #{tpu_custom_call.1} parent=75 // pred_check
          %p526 = pneg %p230
        $region86: #{tpu_custom_call.1} parent=75 // pred_check_branch
          %528 = sbr.rel (%p526) target = $region88
        $region87: #{tpu_custom_call.1} parent=75 // pred_region
          %529 = dma.done [#allocation6], 256
        $region88: #{tpu_custom_call.1} parent=75 // pred_fallthru
          _
        // Predicated region
        $region89: #{tpu_custom_call.1} parent=75 // pred_check
          %p530 = pneg %p272
        $region90: #{tpu_custom_call.1} parent=75 // pred_check_branch
          %532 = sbr.rel (%p530) target = $region92
        $region91: #{tpu_custom_call.1} parent=75 // pred_region
          %533 = dma.done [#allocation9], 512
        $region92: #{tpu_custom_call.1} parent=75 // pred_fallthru
          _
        // Predicated region
        $region93: #{tpu_custom_call.1} parent=75 // pred_check
          %p534 = pneg %p314
        $region94: #{tpu_custom_call.1} parent=75 // pred_check_branch
          %536 = sbr.rel (%p534) target = $region96
        $region95: #{tpu_custom_call.1} parent=75 // pred_region
          %537 = dma.done [#allocation9], 2048
        $region96: #{tpu_custom_call.1} parent=75 // pred_fallthru
          _
        %s538 = smul.u32 16, %s36
        %p539 = scmp.lt.s32.totalorder %s538, 31
        %s540 = scalar_select %p539, %s538, 31
        %s541 = smul.addr %s540, 2
        %s542 = smul.addr %s541, 4
        %s543 = scalar_lea.vmem %s0, %s542
        %p544 = pneg %p57
        %p545 = pneg %p54
        %s546 = smul.u32 16, %s36
        %p547 = scmp.lt.s32.totalorder %s546, 31
        %s548 = scalar_select %p547, %s546, 31
        %s549 = smul.addr %s548, 4
        %s550 = scalar_lea.vmem %s1, %s549
        %p551 = pneg %p83
        %p552 = pneg %p80
        %p553 = pneg %p104
        %p554 = pneg %p101
        %p555 = pneg %p125
        %p556 = pneg %p122
        %p557 = pneg %p146
        %p558 = pneg %p143
        %p559 = pneg %p167
        %p560 = pneg %p164
        %p561 = pneg %p188
        %p562 = pneg %p185
        %p563 = pneg %p209
        %p564 = pneg %p206
        %p565 = pneg %p230
        %p566 = pneg %p227
        %p567 = pneg %p251
        %p568 = pneg %p248
        %p569 = pneg %p272
        %p570 = pneg %p269
        %p571 = pneg %p293
        %p572 = pneg %p290
        %p573 = pneg %p314
        %p574 = pneg %p311
        %p575 = pneg %p335
        %p576 = pneg %p332
        %p577 = pneg %p361
        %p578 = pneg %p358
        %s579 = sand.u32 %s348, 1
        %s580 = scalar_lea.sflag [#allocation4], %s579
        %s581 = sand.u32 %s348, 1
        %s582 = smul.addr %s581, 128
        %s583 = scalar_lea.vmem [#allocation11], %s582
        %p584 = pneg %p387
        %p585 = pneg %p384
        %s586 = sand.u32 %s374, 1
        %s587 = scalar_lea.sflag [#allocation13], %s586
        %s588 = sand.u32 %s374, 1
        %s589 = smul.addr %s588, 128
        %s590 = scalar_lea.vmem [#allocation12], %s589
        %s591 = smul.u32 16, %s36
        %p592 = scmp.lt.s32.totalorder %s591, 31
        %s593 = scalar_select %p592, %s591, 31
        %s594 = smul.addr %s593, 2
        %s595 = smul.addr %s594, 4
        %s596 = scalar_lea.vmem %s0, %s595
        %s597 = smul.u32 16, %s36
        %s598 = smul.u32 16, %s36
        %p599 = scmp.lt.s32.totalorder %s598, 31
        %s600 = scalar_select %p599, %s598, 31
        %s601 = smul.addr %s600, 4
        %s602 = scalar_lea.vmem %s1, %s601
        %s603 = smul.u32 16, %s36
        %s604 = smul.u32 16, %s36
        %s605 = smul.u32 16, %s36
        %v607 = vld [vmem:[%s596] sm:$0xff]
        %v608 = vld [vmem:[%s596 + $0x8] sm:$0xff]
        %v609 = vld [vmem:[%s596 + $0x10] sm:$0xff]
        %v610 = vld [vmem:[%s596 + $0x18] sm:$0xff]
        %v611 = vld [vmem:[%s596 + $0x20] sm:$0xff]
        %v612 = vld [vmem:[%s596 + $0x28] sm:$0xff]
        %v613 = vld [vmem:[%s596 + $0x30] sm:$0xff]
        %v614 = vld [vmem:[%s596 + $0x38] sm:$0xff]
        %v615 = vld [vmem:[%s596 + $0x40] sm:$0xff]
        %v616 = vld [vmem:[%s596 + $0x48] sm:$0xff]
        %v617 = vld [vmem:[%s596 + $0x50] sm:$0xff]
        %v618 = vld [vmem:[%s596 + $0x58] sm:$0xff]
        %v619 = vld [vmem:[%s596 + $0x60] sm:$0xff]
        %v620 = vld [vmem:[%s596 + $0x68] sm:$0xff]
        %v621 = vld [vmem:[%s596 + $0x70] sm:$0xff]
        %v622 = vld [vmem:[%s596 + $0x78] sm:$0xff]
        %v623 = vld [vmem:[#allocation2] sm:$0xf]
        %v624 = vld [vmem:[#allocation2 + $0x4] sm:$0xf]
        %v625 = vld [vmem:[#allocation2 + $0x8] sm:$0xf]
        %v626 = vld [vmem:[#allocation2 + $0xc] sm:$0xf]
        %v627 = vld [vmem:[#allocation2 + $0x10] sm:$0xf]
        %v628 = vld [vmem:[#allocation2 + $0x14] sm:$0xf]
        %v629 = vld [vmem:[#allocation2 + $0x18] sm:$0xf]
        %v630 = vld [vmem:[#allocation2 + $0x1c] sm:$0xf]
        %v631 = vld [vmem:[#allocation2 + $0x20] sm:$0xf]
        %v632 = vld [vmem:[#allocation2 + $0x24] sm:$0xf]
        %v633 = vld [vmem:[#allocation2 + $0x28] sm:$0xf]
        %v634 = vld [vmem:[#allocation2 + $0x2c] sm:$0xf]
        %v635 = vld [vmem:[#allocation2 + $0x30] sm:$0xf]
        %v636 = vld [vmem:[#allocation2 + $0x34] sm:$0xf]
        %v637 = vld [vmem:[#allocation2 + $0x38] sm:$0xf]
        %v638 = vld [vmem:[#allocation2 + $0x3c] sm:$0xf]
        %v639 = vld [vmem:[#allocation2 + $0x40] sm:$0xf]
        %v640 = vld [vmem:[#allocation2 + $0x44] sm:$0xf]
        %v641 = vld [vmem:[#allocation2 + $0x48] sm:$0xf]
        %v642 = vld [vmem:[#allocation2 + $0x4c] sm:$0xf]
        %v643 = vld [vmem:[#allocation2 + $0x50] sm:$0xf]
        %v644 = vld [vmem:[#allocation2 + $0x54] sm:$0xf]
        %v645 = vld [vmem:[#allocation2 + $0x58] sm:$0xf]
        %v646 = vld [vmem:[#allocation2 + $0x5c] sm:$0xf]
        %v647 = vld [vmem:[#allocation2 + $0x60] sm:$0xf]
        %v648 = vld [vmem:[#allocation2 + $0x64] sm:$0xf]
        %v649 = vld [vmem:[#allocation2 + $0x68] sm:$0xf]
        %v650 = vld [vmem:[#allocation2 + $0x6c] sm:$0xf]
        %v651 = vld [vmem:[#allocation2 + $0x70] sm:$0xf]
        %v652 = vld [vmem:[#allocation2 + $0x74] sm:$0xf]
        %v653 = vld [vmem:[#allocation2 + $0x78] sm:$0xf]
        %v654 = vld [vmem:[#allocation2 + $0x7c] sm:$0xf]
        %v655 = vld [vmem:[%s3] sm:$0x1]
        %v657 = vlaneseq
        %v658 = vshrl.u32 %v657, 7
        %v659 = vsub.s32 0, %v658
        %v660 = vrot.slane %v655, %v659
        %v678 = vunpack.c.l.b16 %v607
        %v679 = vunpack.c.h.b16 %v607
        %v680 = vunpack.c.l.b16 %v608
        %v681 = vunpack.c.h.b16 %v608
        %v682 = vunpack.c.l.b16 %v609
        %v683 = vunpack.c.h.b16 %v609
        %v684 = vunpack.c.l.b16 %v610
        %v685 = vunpack.c.h.b16 %v610
        %v686 = vunpack.c.l.b16 %v611
        %v687 = vunpack.c.h.b16 %v611
        %v688 = vunpack.c.l.b16 %v612
        %v689 = vunpack.c.h.b16 %v612
        %v690 = vunpack.c.l.b16 %v613
        %v691 = vunpack.c.h.b16 %v613
        %v692 = vunpack.c.l.b16 %v614
        %v693 = vunpack.c.h.b16 %v614
        %v694 = vunpack.c.l.b16 %v615
        %v695 = vunpack.c.h.b16 %v615
        %v696 = vunpack.c.l.b16 %v616
        %v697 = vunpack.c.h.b16 %v616
        %v698 = vunpack.c.l.b16 %v617
        %v699 = vunpack.c.h.b16 %v617
        %v700 = vunpack.c.l.b16 %v618
        %v701 = vunpack.c.h.b16 %v618
        %v702 = vunpack.c.l.b16 %v619
        %v703 = vunpack.c.h.b16 %v619
        %v704 = vunpack.c.l.b16 %v620
        %v705 = vunpack.c.h.b16 %v620
        %v706 = vunpack.c.l.b16 %v621
        %v707 = vunpack.c.h.b16 %v621
        %v708 = vunpack.c.l.b16 %v622
        %v709 = vunpack.c.h.b16 %v622
        %v710 = vpack.c.b16 %v680, %v678
        %v711 = vpack.c.b16 %v681, %v679
        %v712 = vpack.c.b16 %v684, %v682
        %v713 = vpack.c.b16 %v685, %v683
        %v714 = vpack.c.b16 %v688, %v686
        %v715 = vpack.c.b16 %v689, %v687
        %v716 = vpack.c.b16 %v692, %v690
        %v717 = vpack.c.b16 %v693, %v691
        %v718 = vpack.c.b16 %v696, %v694
        %v719 = vpack.c.b16 %v697, %v695
        %v720 = vpack.c.b16 %v700, %v698
        %v721 = vpack.c.b16 %v701, %v699
        %v722 = vpack.c.b16 %v704, %v702
        %v723 = vpack.c.b16 %v705, %v703
        %v724 = vpack.c.b16 %v708, %v706
        %v725 = vpack.c.b16 %v709, %v707
        %v774 = vunpack.c.l.b16 %v623
        %v775 = vunpack.c.l.b16 %v624
        %v776 = vunpack.c.l.b16 %v625
        %v777 = vunpack.c.l.b16 %v626
        %v778 = vunpack.c.l.b16 %v627
        %v779 = vunpack.c.l.b16 %v628
        %v780 = vunpack.c.l.b16 %v629
        %v781 = vunpack.c.l.b16 %v630
        %v782 = vunpack.c.l.b16 %v631
        %v783 = vunpack.c.l.b16 %v632
        %v784 = vunpack.c.l.b16 %v633
        %v785 = vunpack.c.l.b16 %v634
        %v786 = vunpack.c.l.b16 %v635
        %v787 = vunpack.c.l.b16 %v636
        %v788 = vunpack.c.l.b16 %v637
        %v789 = vunpack.c.l.b16 %v638
        %v790 = vunpack.c.l.b16 %v639
        %v791 = vunpack.c.l.b16 %v640
        %v792 = vunpack.c.l.b16 %v641
        %v793 = vunpack.c.l.b16 %v642
        %v794 = vunpack.c.l.b16 %v643
        %v795 = vunpack.c.l.b16 %v644
        %v796 = vunpack.c.l.b16 %v645
        %v797 = vunpack.c.l.b16 %v646
        %v798 = vunpack.c.l.b16 %v647
        %v799 = vunpack.c.l.b16 %v648
        %v800 = vunpack.c.l.b16 %v649
        %v801 = vunpack.c.l.b16 %v650
        %v802 = vunpack.c.l.b16 %v651
        %v803 = vunpack.c.l.b16 %v652
        %v804 = vunpack.c.l.b16 %v653
        %v805 = vunpack.c.l.b16 %v654
        %v806 = vpack.c.b16 %v775, %v774
        %v807 = vpack.c.b16 %v777, %v776
        %v808 = vpack.c.b16 %v779, %v778
        %v809 = vpack.c.b16 %v781, %v780
        %v810 = vpack.c.b16 %v783, %v782
        %v811 = vpack.c.b16 %v785, %v784
        %v812 = vpack.c.b16 %v787, %v786
        %v813 = vpack.c.b16 %v789, %v788
        %v814 = vpack.c.b16 %v791, %v790
        %v815 = vpack.c.b16 %v793, %v792
        %v816 = vpack.c.b16 %v795, %v794
        %v817 = vpack.c.b16 %v797, %v796
        %v818 = vpack.c.b16 %v799, %v798
        %v819 = vpack.c.b16 %v801, %v800
        %v820 = vpack.c.b16 %v803, %v802
        %v821 = vpack.c.b16 %v805, %v804
        %838 = vmatprep.subr.bf16.mxu0 0
        %839 = vmatpush1.bf16.msra.mxu0 %v813
        %840 = vmatprep.subr.bf16.mxu0 0
        %841 = vmatpush1.bf16.msra.mxu0 %v812
        %842 = vmatprep.subr.bf16.mxu0 0
        %843 = vmatpush1.bf16.msra.mxu0 %v811
        %844 = vmatprep.subr.bf16.mxu0 0
        %845 = vmatpush1.bf16.msra.mxu0 %v810
        %846 = vmatprep.subr.bf16.mxu0 0
        %847 = vmatpush1.bf16.msra.mxu0 %v809
        %848 = vmatprep.subr.bf16.mxu0 0
        %849 = vmatpush1.bf16.msra.mxu0 %v808
        %850 = vmatprep.subr.bf16.mxu0 0
        %851 = vmatpush1.bf16.msra.mxu0 %v807
        %852 = vmatprep.subr.bf16.mxu0 0
        %853 = vmatpush1.bf16.msra.mxu0 %v806
        %854 = vmatprep.subr.bf16.mxu0 0
        %855 = vmatpush2.bf16.msra.mxu0 %v821
        %856 = vmatprep.subr.bf16.mxu0 0
        %857 = vmatpush2.bf16.msra.mxu0 %v820
        %858 = vmatprep.subr.bf16.mxu0 0
        %859 = vmatpush2.bf16.msra.mxu0 %v819
        %860 = vmatprep.subr.bf16.mxu0 0
        %861 = vmatpush2.bf16.msra.mxu0 %v818
        %862 = vmatprep.subr.bf16.mxu0 0
        %863 = vmatpush2.bf16.msra.mxu0 %v817
        %864 = vmatprep.subr.bf16.mxu0 0
        %865 = vmatpush2.bf16.msra.mxu0 %v816
        %866 = vmatprep.subr.bf16.mxu0 0
        %867 = vmatpush2.bf16.msra.mxu0 %v815
        %868 = vmatprep.subr.bf16.mxu0 0
        %869 = vmatpush2.bf16.msra.mxu0 %v814
        %870 = vmatprep.mubr.bf16.mxu0 %v711
        %871 = vmatmul.mubr.bf16.gmra.mxu0 %v710
        %v872 = vpop.f32.mrf.mxu0
        %v873 = vadd.f32 %v660, %v872
        %v874 = vpop.f32.mrf.mxu0
        %v875 = vpop.f32.mrf.mxu0
        %v876 = vadd.f32 %v660, %v875
        %v877 = vpop.f32.mrf.mxu0
        %878 = vmatprep.mubr.bf16.mxu0 %v713
        %879 = vmatmul.mubr.bf16.gmra.mxu0 %v712
        %v880 = vpop.f32.mrf.mxu0
        %v881 = vadd.f32 %v660, %v880
        %v882 = vpop.f32.mrf.mxu0
        %v883 = vpop.f32.mrf.mxu0
        %v884 = vadd.f32 %v660, %v883
        %v885 = vpop.f32.mrf.mxu0
        %886 = vmatprep.mubr.bf16.mxu0 %v715
        %887 = vmatmul.mubr.bf16.gmra.mxu0 %v714
        %v888 = vpop.f32.mrf.mxu0
        %v889 = vadd.f32 %v660, %v888
        %v890 = vpop.f32.mrf.mxu0
        %v891 = vpop.f32.mrf.mxu0
        %v892 = vadd.f32 %v660, %v891
        %v893 = vpop.f32.mrf.mxu0
        %894 = vmatprep.mubr.bf16.mxu0 %v717
        %895 = vmatmul.mubr.bf16.gmra.mxu0 %v716
        %v896 = vpop.f32.mrf.mxu0
        %v897 = vadd.f32 %v660, %v896
        %v898 = vpop.f32.mrf.mxu0
        %v899 = vpop.f32.mrf.mxu0
        %v900 = vadd.f32 %v660, %v899
        %v901 = vpop.f32.mrf.mxu0
        %902 = vmatprep.mubr.bf16.mxu0 %v719
        %903 = vmatmul.mubr.bf16.gmra.mxu0 %v718
        %v904 = vpop.f32.mrf.mxu0
        %v905 = vadd.f32 %v660, %v904
        %v906 = vpop.f32.mrf.mxu0
        %v907 = vpop.f32.mrf.mxu0
        %v908 = vadd.f32 %v660, %v907
        %v909 = vpop.f32.mrf.mxu0
        %910 = vmatprep.mubr.bf16.mxu0 %v721
        %911 = vmatmul.mubr.bf16.gmra.mxu0 %v720
        %v912 = vpop.f32.mrf.mxu0
        %v913 = vadd.f32 %v660, %v912
        %v914 = vpop.f32.mrf.mxu0
        %v915 = vpop.f32.mrf.mxu0
        %v916 = vadd.f32 %v660, %v915
        %v917 = vpop.f32.mrf.mxu0
        %918 = vmatprep.mubr.bf16.mxu0 %v723
        %919 = vmatmul.mubr.bf16.gmra.mxu0 %v722
        %v920 = vpop.f32.mrf.mxu0
        %v921 = vadd.f32 %v660, %v920
        %v922 = vpop.f32.mrf.mxu0
        %v923 = vpop.f32.mrf.mxu0
        %v924 = vadd.f32 %v660, %v923
        %v925 = vpop.f32.mrf.mxu0
        %926 = vmatprep.mubr.bf16.mxu0 %v725
        %927 = vmatmul.mubr.bf16.gmra.mxu0 %v724
        %v928 = vpop.f32.mrf.mxu0
        %v929 = vadd.f32 %v660, %v928
        %v930 = vpop.f32.mrf.mxu0
        %v931 = vpop.f32.mrf.mxu0
        %v932 = vadd.f32 %v660, %v931
        %v933 = vpop.f32.mrf.mxu0
        %934 = vdwg.mxu0
        %v935 = vmax.f32 %v873, 0.0
        %v936 = vmax.f32 %v876, 0.0
        %v937 = vmax.f32 %v881, 0.0
        %v938 = vmax.f32 %v884, 0.0
        %v939 = vmax.f32 %v889, 0.0
        %v940 = vmax.f32 %v892, 0.0
        %v941 = vmax.f32 %v897, 0.0
        %v942 = vmax.f32 %v900, 0.0
        %v943 = vmax.f32 %v905, 0.0
        %v944 = vmax.f32 %v908, 0.0
        %v945 = vmax.f32 %v913, 0.0
        %v946 = vmax.f32 %v916, 0.0
        %v947 = vmax.f32 %v921, 0.0
        %v948 = vmax.f32 %v924, 0.0
        %v949 = vmax.f32 %v929, 0.0
        %v950 = vmax.f32 %v932, 0.0
        %vm951 = vcmp.ne.f32.partialorder %v873, %v873
        %vm952 = vcmp.ne.f32.partialorder %v876, %v876
        %vm953 = vcmp.ne.f32.partialorder %v881, %v881
        %vm954 = vcmp.ne.f32.partialorder %v884, %v884
        %vm955 = vcmp.ne.f32.partialorder %v889, %v889
        %vm956 = vcmp.ne.f32.partialorder %v892, %v892
        %vm957 = vcmp.ne.f32.partialorder %v897, %v897
        %vm958 = vcmp.ne.f32.partialorder %v900, %v900
        %vm959 = vcmp.ne.f32.partialorder %v905, %v905
        %vm960 = vcmp.ne.f32.partialorder %v908, %v908
        %vm961 = vcmp.ne.f32.partialorder %v913, %v913
        %vm962 = vcmp.ne.f32.partialorder %v916, %v916
        %vm963 = vcmp.ne.f32.partialorder %v921, %v921
        %vm964 = vcmp.ne.f32.partialorder %v924, %v924
        %vm965 = vcmp.ne.f32.partialorder %v929, %v929
        %vm966 = vcmp.ne.f32.partialorder %v932, %v932
        %v967 = vadd.f32 %v873, 0.0
        %v968 = vadd.f32 %v876, 0.0
        %v969 = vadd.f32 %v881, 0.0
        %v970 = vadd.f32 %v884, 0.0
        %v971 = vadd.f32 %v889, 0.0
        %v972 = vadd.f32 %v892, 0.0
        %v973 = vadd.f32 %v897, 0.0
        %v974 = vadd.f32 %v900, 0.0
        %v975 = vadd.f32 %v905, 0.0
        %v976 = vadd.f32 %v908, 0.0
        %v977 = vadd.f32 %v913, 0.0
        %v978 = vadd.f32 %v916, 0.0
        %v979 = vadd.f32 %v921, 0.0
        %v980 = vadd.f32 %v924, 0.0
        %v981 = vadd.f32 %v929, 0.0
        %v982 = vadd.f32 %v932, 0.0
        %v983 = vand.u32 2147483647, %v873
        %v984 = vand.u32 2147483647, %v876
        %v985 = vand.u32 2147483647, %v881
        %v986 = vand.u32 2147483647, %v884
        %v987 = vand.u32 2147483647, %v889
        %v988 = vand.u32 2147483647, %v892
        %v989 = vand.u32 2147483647, %v897
        %v990 = vand.u32 2147483647, %v900
        %v991 = vand.u32 2147483647, %v905
        %v992 = vand.u32 2147483647, %v908
        %v993 = vand.u32 2147483647, %v913
        %v994 = vand.u32 2147483647, %v916
        %v995 = vand.u32 2147483647, %v921
        %v996 = vand.u32 2147483647, %v924
        %v997 = vand.u32 2147483647, %v929
        %v998 = vand.u32 2147483647, %v932
        %v999 = vsub.f32 0.0, %v983
        %v1000 = vsub.f32 0.0, %v984
        %v1001 = vsub.f32 0.0, %v985
        %v1002 = vsub.f32 0.0, %v986
        %v1003 = vsub.f32 0.0, %v987
        %v1004 = vsub.f32 0.0, %v988
        %v1005 = vsub.f32 0.0, %v989
        %v1006 = vsub.f32 0.0, %v990
        %v1007 = vsub.f32 0.0, %v991
        %v1008 = vsub.f32 0.0, %v992
        %v1009 = vsub.f32 0.0, %v993
        %v1010 = vsub.f32 0.0, %v994
        %v1011 = vsub.f32 0.0, %v995
        %v1012 = vsub.f32 0.0, %v996
        %v1013 = vsub.f32 0.0, %v997
        %v1014 = vsub.f32 0.0, %v998
        %v1015 = vmul.f32 %v999, 1.442695
        %v1016 = vpow.pop %v1015
        %v1017 = vmul.f32 %v1000, 1.442695
        %v1018 = vpow.pop %v1017
        %v1019 = vmul.f32 %v1001, 1.442695
        %v1020 = vpow.pop %v1019
        %v1021 = vmul.f32 %v1002, 1.442695
        %v1022 = vpow.pop %v1021
        %v1023 = vmul.f32 %v1003, 1.442695
        %v1024 = vpow.pop %v1023
        %v1025 = vmul.f32 %v1004, 1.442695
        %v1026 = vpow.pop %v1025
        %v1027 = vmul.f32 %v1005, 1.442695
        %v1028 = vpow.pop %v1027
        %v1029 = vmul.f32 %v1006, 1.442695
        %v1030 = vpow.pop %v1029
        %v1031 = vmul.f32 %v1007, 1.442695
        %v1032 = vpow.pop %v1031
        %v1033 = vmul.f32 %v1008, 1.442695
        %v1034 = vpow.pop %v1033
        %v1035 = vmul.f32 %v1009, 1.442695
        %v1036 = vpow.pop %v1035
        %v1037 = vmul.f32 %v1010, 1.442695
        %v1038 = vpow.pop %v1037
        %v1039 = vmul.f32 %v1011, 1.442695
        %v1040 = vpow.pop %v1039
        %v1041 = vmul.f32 %v1012, 1.442695
        %v1042 = vpow.pop %v1041
        %v1043 = vmul.f32 %v1013, 1.442695
        %v1044 = vpow.pop %v1043
        %v1045 = vmul.f32 %v1014, 1.442695
        %v1046 = vpow.pop %v1045
        %v1047 = vadd.f32 %v1016, 1.0
        %v1048 = vlog2.pop %v1047
        %v1049 = vmul.f32 %v1048, 0.6931472
        %v1050 = vmul.f32 -0.5, %v1016
        %v1051 = vadd.f32 %v1050, 1.0
        %v1052 = vmul.f32 %v1051, %v1016
        %v1053 = vand.u32 2147483647, %v1016
        %vm1054 = vcmp.lt.f32.partialorder %v1053, 0.0004427343
        %v1055 = vsel %vm1054, %v1052, %v1049
        %v1056 = vadd.f32 %v1018, 1.0
        %v1057 = vlog2.pop %v1056
        %v1058 = vmul.f32 %v1057, 0.6931472
        %v1059 = vmul.f32 -0.5, %v1018
        %v1060 = vadd.f32 %v1059, 1.0
        %v1061 = vmul.f32 %v1060, %v1018
        %v1062 = vand.u32 2147483647, %v1018
        %vm1063 = vcmp.lt.f32.partialorder %v1062, 0.0004427343
        %v1064 = vsel %vm1063, %v1061, %v1058
        %v1065 = vadd.f32 %v1020, 1.0
        %v1066 = vlog2.pop %v1065
        %v1067 = vmul.f32 %v1066, 0.6931472
        %v1068 = vmul.f32 -0.5, %v1020
        %v1069 = vadd.f32 %v1068, 1.0
        %v1070 = vmul.f32 %v1069, %v1020
        %v1071 = vand.u32 2147483647, %v1020
        %vm1072 = vcmp.lt.f32.partialorder %v1071, 0.0004427343
        %v1073 = vsel %vm1072, %v1070, %v1067
        %v1074 = vadd.f32 %v1022, 1.0
        %v1075 = vlog2.pop %v1074
        %v1076 = vmul.f32 %v1075, 0.6931472
        %v1077 = vmul.f32 -0.5, %v1022
        %v1078 = vadd.f32 %v1077, 1.0
        %v1079 = vmul.f32 %v1078, %v1022
        %v1080 = vand.u32 2147483647, %v1022
        %vm1081 = vcmp.lt.f32.partialorder %v1080, 0.0004427343
        %v1082 = vsel %vm1081, %v1079, %v1076
        %v1083 = vadd.f32 %v1024, 1.0
        %v1084 = vlog2.pop %v1083
        %v1085 = vmul.f32 %v1084, 0.6931472
        %v1086 = vmul.f32 -0.5, %v1024
        %v1087 = vadd.f32 %v1086, 1.0
        %v1088 = vmul.f32 %v1087, %v1024
        %v1089 = vand.u32 2147483647, %v1024
        %vm1090 = vcmp.lt.f32.partialorder %v1089, 0.0004427343
        %v1091 = vsel %vm1090, %v1088, %v1085
        %v1092 = vadd.f32 %v1026, 1.0
        %v1093 = vlog2.pop %v1092
        %v1094 = vmul.f32 %v1093, 0.6931472
        %v1095 = vmul.f32 -0.5, %v1026
        %v1096 = vadd.f32 %v1095, 1.0
        %v1097 = vmul.f32 %v1096, %v1026
        %v1098 = vand.u32 2147483647, %v1026
        %vm1099 = vcmp.lt.f32.partialorder %v1098, 0.0004427343
        %v1100 = vsel %vm1099, %v1097, %v1094
        %v1101 = vadd.f32 %v1028, 1.0
        %v1102 = vlog2.pop %v1101
        %v1103 = vmul.f32 %v1102, 0.6931472
        %v1104 = vmul.f32 -0.5, %v1028
        %v1105 = vadd.f32 %v1104, 1.0
        %v1106 = vmul.f32 %v1105, %v1028
        %v1107 = vand.u32 2147483647, %v1028
        %vm1108 = vcmp.lt.f32.partialorder %v1107, 0.0004427343
        %v1109 = vsel %vm1108, %v1106, %v1103
        %v1110 = vadd.f32 %v1030, 1.0
        %v1111 = vlog2.pop %v1110
        %v1112 = vmul.f32 %v1111, 0.6931472
        %v1113 = vmul.f32 -0.5, %v1030
        %v1114 = vadd.f32 %v1113, 1.0
        %v1115 = vmul.f32 %v1114, %v1030
        %v1116 = vand.u32 2147483647, %v1030
        %vm1117 = vcmp.lt.f32.partialorder %v1116, 0.0004427343
        %v1118 = vsel %vm1117, %v1115, %v1112
        %v1119 = vadd.f32 %v1032, 1.0
        %v1120 = vlog2.pop %v1119
        %v1121 = vmul.f32 %v1120, 0.6931472
        %v1122 = vmul.f32 -0.5, %v1032
        %v1123 = vadd.f32 %v1122, 1.0
        %v1124 = vmul.f32 %v1123, %v1032
        %v1125 = vand.u32 2147483647, %v1032
        %vm1126 = vcmp.lt.f32.partialorder %v1125, 0.0004427343
        %v1127 = vsel %vm1126, %v1124, %v1121
        %v1128 = vadd.f32 %v1034, 1.0
        %v1129 = vlog2.pop %v1128
        %v1130 = vmul.f32 %v1129, 0.6931472
        %v1131 = vmul.f32 -0.5, %v1034
        %v1132 = vadd.f32 %v1131, 1.0
        %v1133 = vmul.f32 %v1132, %v1034
        %v1134 = vand.u32 2147483647, %v1034
        %vm1135 = vcmp.lt.f32.partialorder %v1134, 0.0004427343
        %v1136 = vsel %vm1135, %v1133, %v1130
        %v1137 = vadd.f32 %v1036, 1.0
        %v1138 = vlog2.pop %v1137
        %v1139 = vmul.f32 %v1138, 0.6931472
        %v1140 = vmul.f32 -0.5, %v1036
        %v1141 = vadd.f32 %v1140, 1.0
        %v1142 = vmul.f32 %v1141, %v1036
        %v1143 = vand.u32 2147483647, %v1036
        %vm1144 = vcmp.lt.f32.partialorder %v1143, 0.0004427343
        %v1145 = vsel %vm1144, %v1142, %v1139
        %v1146 = vadd.f32 %v1038, 1.0
        %v1147 = vlog2.pop %v1146
        %v1148 = vmul.f32 %v1147, 0.6931472
        %v1149 = vmul.f32 -0.5, %v1038
        %v1150 = vadd.f32 %v1149, 1.0
        %v1151 = vmul.f32 %v1150, %v1038
        %v1152 = vand.u32 2147483647, %v1038
        %vm1153 = vcmp.lt.f32.partialorder %v1152, 0.0004427343
        %v1154 = vsel %vm1153, %v1151, %v1148
        %v1155 = vadd.f32 %v1040, 1.0
        %v1156 = vlog2.pop %v1155
        %v1157 = vmul.f32 %v1156, 0.6931472
        %v1158 = vmul.f32 -0.5, %v1040
        %v1159 = vadd.f32 %v1158, 1.0
        %v1160 = vmul.f32 %v1159, %v1040
        %v1161 = vand.u32 2147483647, %v1040
        %vm1162 = vcmp.lt.f32.partialorder %v1161, 0.0004427343
        %v1163 = vsel %vm1162, %v1160, %v1157
        %v1164 = vadd.f32 %v1042, 1.0
        %v1165 = vlog2.pop %v1164
        %v1166 = vmul.f32 %v1165, 0.6931472
        %v1167 = vmul.f32 -0.5, %v1042
        %v1168 = vadd.f32 %v1167, 1.0
        %v1169 = vmul.f32 %v1168, %v1042
        %v1170 = vand.u32 2147483647, %v1042
        %vm1171 = vcmp.lt.f32.partialorder %v1170, 0.0004427343
        %v1172 = vsel %vm1171, %v1169, %v1166
        %v1173 = vadd.f32 %v1044, 1.0
        %v1174 = vlog2.pop %v1173
        %v1175 = vmul.f32 %v1174, 0.6931472
        %v1176 = vmul.f32 -0.5, %v1044
        %v1177 = vadd.f32 %v1176, 1.0
        %v1178 = vmul.f32 %v1177, %v1044
        %v1179 = vand.u32 2147483647, %v1044
        %vm1180 = vcmp.lt.f32.partialorder %v1179, 0.0004427343
        %v1181 = vsel %vm1180, %v1178, %v1175
        %v1182 = vadd.f32 %v1046, 1.0
        %v1183 = vlog2.pop %v1182
        %v1184 = vmul.f32 %v1183, 0.6931472
        %v1185 = vmul.f32 -0.5, %v1046
        %v1186 = vadd.f32 %v1185, 1.0
        %v1187 = vmul.f32 %v1186, %v1046
        %v1188 = vand.u32 2147483647, %v1046
        %vm1189 = vcmp.lt.f32.partialorder %v1188, 0.0004427343
        %v1190 = vsel %vm1189, %v1187, %v1184
        %v1191 = vadd.f32 %v935, %v1055
        %v1192 = vadd.f32 %v936, %v1064
        %v1193 = vadd.f32 %v937, %v1073
        %v1194 = vadd.f32 %v938, %v1082
        %v1195 = vadd.f32 %v939, %v1091
        %v1196 = vadd.f32 %v940, %v1100
        %v1197 = vadd.f32 %v941, %v1109
        %v1198 = vadd.f32 %v942, %v1118
        %v1199 = vadd.f32 %v943, %v1127
        %v1200 = vadd.f32 %v944, %v1136
        %v1201 = vadd.f32 %v945, %v1145
        %v1202 = vadd.f32 %v946, %v1154
        %v1203 = vadd.f32 %v947, %v1163
        %v1204 = vadd.f32 %v948, %v1172
        %v1205 = vadd.f32 %v949, %v1181
        %v1206 = vadd.f32 %v950, %v1190
        %v1207 = vsel %vm951, %v967, %v1191
        %v1208 = vsel %vm952, %v968, %v1192
        %v1209 = vsel %vm953, %v969, %v1193
        %v1210 = vsel %vm954, %v970, %v1194
        %v1211 = vsel %vm955, %v971, %v1195
        %v1212 = vsel %vm956, %v972, %v1196
        %v1213 = vsel %vm957, %v973, %v1197
        %v1214 = vsel %vm958, %v974, %v1198
        %v1215 = vsel %vm959, %v975, %v1199
        %v1216 = vsel %vm960, %v976, %v1200
        %v1217 = vsel %vm961, %v977, %v1201
        %v1218 = vsel %vm962, %v978, %v1202
        %v1219 = vsel %vm963, %v979, %v1203
        %v1220 = vsel %vm964, %v980, %v1204
        %v1221 = vsel %vm965, %v981, %v1205
        %v1222 = vsel %vm966, %v982, %v1206
        %v1223 = vpack.c.bf16 %v1208, %v1207
        %v1224 = vpack.c.bf16 %v1210, %v1209
        %v1225 = vpack.c.bf16 %v1212, %v1211
        %v1226 = vpack.c.bf16 %v1214, %v1213
        %v1227 = vpack.c.bf16 %v1216, %v1215
        %v1228 = vpack.c.bf16 %v1218, %v1217
        %v1229 = vpack.c.bf16 %v1220, %v1219
        %v1230 = vpack.c.bf16 %v1222, %v1221
        %v1231 = vld [vmem:[%s4] sm:$0xf]
        %v1232 = vld [vmem:[%s4 + $0x4] sm:$0xf]
        %v1233 = vld [vmem:[%s4 + $0x8] sm:$0xf]
        %v1234 = vld [vmem:[%s4 + $0xc] sm:$0xf]
        %v1235 = vld [vmem:[%s4 + $0x10] sm:$0xf]
        %v1236 = vld [vmem:[%s4 + $0x14] sm:$0xf]
        %v1237 = vld [vmem:[%s4 + $0x18] sm:$0xf]
        %v1238 = vld [vmem:[%s4 + $0x1c] sm:$0xf]
        %v1239 = vld [vmem:[%s4 + $0x20] sm:$0xf]
        %v1240 = vld [vmem:[%s4 + $0x24] sm:$0xf]
        %v1241 = vld [vmem:[%s4 + $0x28] sm:$0xf]
        %v1242 = vld [vmem:[%s4 + $0x2c] sm:$0xf]
        %v1243 = vld [vmem:[%s4 + $0x30] sm:$0xf]
        %v1244 = vld [vmem:[%s4 + $0x34] sm:$0xf]
        %v1245 = vld [vmem:[%s4 + $0x38] sm:$0xf]
        %v1246 = vld [vmem:[%s4 + $0x3c] sm:$0xf]
        %v1247 = vld [vmem:[%s5] sm:$0x1]
        %v1249 = vlaneseq
        %v1250 = vshrl.u32 %v1249, 7
        %v1251 = vsub.s32 0, %v1250
        %v1252 = vrot.slane %v1247, %v1251
        %v1270 = vunpack.c.l.b16 %v1231
        %v1271 = vunpack.c.l.b16 %v1232
        %v1272 = vunpack.c.l.b16 %v1233
        %v1273 = vunpack.c.l.b16 %v1234
        %v1274 = vunpack.c.l.b16 %v1235
        %v1275 = vunpack.c.l.b16 %v1236
        %v1276 = vunpack.c.l.b16 %v1237
        %v1277 = vunpack.c.l.b16 %v1238
        %v1278 = vunpack.c.l.b16 %v1239
        %v1279 = vunpack.c.l.b16 %v1240
        %v1280 = vunpack.c.l.b16 %v1241
        %v1281 = vunpack.c.l.b16 %v1242
        %v1282 = vunpack.c.l.b16 %v1243
        %v1283 = vunpack.c.l.b16 %v1244
        %v1284 = vunpack.c.l.b16 %v1245
        %v1285 = vunpack.c.l.b16 %v1246
        %v1286 = vpack.c.b16 %v1271, %v1270
        %v1287 = vpack.c.b16 %v1273, %v1272
        %v1288 = vpack.c.b16 %v1275, %v1274
        %v1289 = vpack.c.b16 %v1277, %v1276
        %v1290 = vpack.c.b16 %v1279, %v1278
        %v1291 = vpack.c.b16 %v1281, %v1280
        %v1292 = vpack.c.b16 %v1283, %v1282
        %v1293 = vpack.c.b16 %v1285, %v1284
        %1302 = vmatprep.subr.bf16.mxu0 0
        %1303 = vmatpush1.bf16.msra.mxu0 %v1293
        %1304 = vmatprep.subr.bf16.mxu0 0
        %1305 = vmatpush1.bf16.msra.mxu0 %v1292
        %1306 = vmatprep.subr.bf16.mxu0 0
        %1307 = vmatpush1.bf16.msra.mxu0 %v1291
        %1308 = vmatprep.subr.bf16.mxu0 0
        %1309 = vmatpush1.bf16.msra.mxu0 %v1290
        %1310 = vmatprep.subr.bf16.mxu0 0
        %1311 = vmatpush1.bf16.msra.mxu0 %v1289
        %1312 = vmatprep.subr.bf16.mxu0 0
        %1313 = vmatpush1.bf16.msra.mxu0 %v1288
        %1314 = vmatprep.subr.bf16.mxu0 0
        %1315 = vmatpush1.bf16.msra.mxu0 %v1287
        %1316 = vmatprep.subr.bf16.mxu0 0
        %1317 = vmatpush1.bf16.msra.mxu0 %v1286
        %1318 = vmatprep.subr.bf16.mxu0 0
        %1319 = vmatpush2.bf16.msra.mxu0 0
        %1320 = vmatprep.subr.bf16.mxu0 0
        %1321 = vmatpush2.bf16.msra.mxu0 0
        %1322 = vmatprep.subr.bf16.mxu0 0
        %1323 = vmatpush2.bf16.msra.mxu0 0
        %1324 = vmatprep.subr.bf16.mxu0 0
        %1325 = vmatpush2.bf16.msra.mxu0 0
        %1326 = vmatprep.subr.bf16.mxu0 0
        %1327 = vmatpush2.bf16.msra.mxu0 0
        %1328 = vmatprep.subr.bf16.mxu0 0
        %1329 = vmatpush2.bf16.msra.mxu0 0
        %1330 = vmatprep.subr.bf16.mxu0 0
        %1331 = vmatpush2.bf16.msra.mxu0 0
        %1332 = vmatprep.subr.bf16.mxu0 0
        %1333 = vmatpush2.bf16.msra.mxu0 0
        %1334 = vmatprep.mubr.bf16.mxu0 0
        %1335 = vmatmul.mubr.bf16.gmra.mxu0 %v1223
        %v1336 = vpop.f32.mrf.mxu0
        %v1337 = vadd.f32 %v1252, %v1336
        %v1338 = vpop.f32.mrf.mxu0
        %v1339 = vpop.f32.mrf.mxu0
        %v1340 = vadd.f32 %v1252, %v1339
        %v1341 = vpop.f32.mrf.mxu0
        %1342 = vmatprep.mubr.bf16.mxu0 0
        %1343 = vmatmul.mubr.bf16.gmra.mxu0 %v1224
        %v1344 = vpop.f32.mrf.mxu0
        %v1345 = vadd.f32 %v1252, %v1344
        %v1346 = vpop.f32.mrf.mxu0
        %v1347 = vpop.f32.mrf.mxu0
        %v1348 = vadd.f32 %v1252, %v1347
        %v1349 = vpop.f32.mrf.mxu0
        %1350 = vmatprep.mubr.bf16.mxu0 0
        %1351 = vmatmul.mubr.bf16.gmra.mxu0 %v1225
        %v1352 = vpop.f32.mrf.mxu0
        %v1353 = vadd.f32 %v1252, %v1352
        %v1354 = vpop.f32.mrf.mxu0
        %v1355 = vpop.f32.mrf.mxu0
        %v1356 = vadd.f32 %v1252, %v1355
        %v1357 = vpop.f32.mrf.mxu0
        %1358 = vmatprep.mubr.bf16.mxu0 0
        %1359 = vmatmul.mubr.bf16.gmra.mxu0 %v1226
        %v1360 = vpop.f32.mrf.mxu0
        %v1361 = vadd.f32 %v1252, %v1360
        %v1362 = vpop.f32.mrf.mxu0
        %v1363 = vpop.f32.mrf.mxu0
        %v1364 = vadd.f32 %v1252, %v1363
        %v1365 = vpop.f32.mrf.mxu0
        %1366 = vmatprep.mubr.bf16.mxu0 0
        %1367 = vmatmul.mubr.bf16.gmra.mxu0 %v1227
        %v1368 = vpop.f32.mrf.mxu0
        %v1369 = vadd.f32 %v1252, %v1368
        %v1370 = vpop.f32.mrf.mxu0
        %v1371 = vpop.f32.mrf.mxu0
        %v1372 = vadd.f32 %v1252, %v1371
        %v1373 = vpop.f32.mrf.mxu0
        %1374 = vmatprep.mubr.bf16.mxu0 0
        %1375 = vmatmul.mubr.bf16.gmra.mxu0 %v1228
        %v1376 = vpop.f32.mrf.mxu0
        %v1377 = vadd.f32 %v1252, %v1376
        %v1378 = vpop.f32.mrf.mxu0
        %v1379 = vpop.f32.mrf.mxu0
        %v1380 = vadd.f32 %v1252, %v1379
        %v1381 = vpop.f32.mrf.mxu0
        %1382 = vmatprep.mubr.bf16.mxu0 0
        %1383 = vmatmul.mubr.bf16.gmra.mxu0 %v1229
        %v1384 = vpop.f32.mrf.mxu0
        %v1385 = vadd.f32 %v1252, %v1384
        %v1386 = vpop.f32.mrf.mxu0
        %v1387 = vpop.f32.mrf.mxu0
        %v1388 = vadd.f32 %v1252, %v1387
        %v1389 = vpop.f32.mrf.mxu0
        %1390 = vmatprep.mubr.bf16.mxu0 0
        %1391 = vmatmul.mubr.bf16.gmra.mxu0 %v1230
        %v1392 = vpop.f32.mrf.mxu0
        %v1393 = vadd.f32 %v1252, %v1392
        %v1394 = vpop.f32.mrf.mxu0
        %v1395 = vpop.f32.mrf.mxu0
        %v1396 = vadd.f32 %v1252, %v1395
        %v1397 = vpop.f32.mrf.mxu0
        %1398 = vdwg.mxu0
        %v1399 = vpack.c.bf16 %v1340, %v1337
        %v1400 = vpack.c.bf16 %v1348, %v1345
        %v1401 = vpack.c.bf16 %v1356, %v1353
        %v1402 = vpack.c.bf16 %v1364, %v1361
        %v1403 = vpack.c.bf16 %v1372, %v1369
        %v1404 = vpack.c.bf16 %v1380, %v1377
        %v1405 = vpack.c.bf16 %v1388, %v1385
        %v1406 = vpack.c.bf16 %v1396, %v1393
        %v1407 = vld [vmem:[#allocation5] sm:$0xf]
        %v1408 = vld [vmem:[#allocation5 + $0x4] sm:$0xf]
        %v1409 = vld [vmem:[#allocation5 + $0x8] sm:$0xf]
        %v1410 = vld [vmem:[#allocation5 + $0xc] sm:$0xf]
        %v1411 = vld [vmem:[#allocation5 + $0x10] sm:$0xf]
        %v1412 = vld [vmem:[#allocation5 + $0x14] sm:$0xf]
        %v1413 = vld [vmem:[#allocation5 + $0x18] sm:$0xf]
        %v1414 = vld [vmem:[#allocation5 + $0x1c] sm:$0xf]
        %v1415 = vld [vmem:[%s7] sm:$0x1]
        %v1417 = vlaneseq
        %v1418 = vshrl.u32 %v1417, 7
        %v1419 = vsub.s32 0, %v1418
        %v1420 = vrot.slane %v1415, %v1419
        %v1430 = vunpack.c.l.b16 %v1407
        %v1431 = vunpack.c.l.b16 %v1408
        %v1432 = vunpack.c.l.b16 %v1409
        %v1433 = vunpack.c.l.b16 %v1410
        %v1434 = vunpack.c.l.b16 %v1411
        %v1435 = vunpack.c.l.b16 %v1412
        %v1436 = vunpack.c.l.b16 %v1413
        %v1437 = vunpack.c.l.b16 %v1414
        %v1438 = vpack.c.b16 %v1431, %v1430
        %v1439 = vpack.c.b16 %v1433, %v1432
        %v1440 = vpack.c.b16 %v1435, %v1434
        %v1441 = vpack.c.b16 %v1437, %v1436
        %vm1446 = vcmask 523264
        %v1448 = vsel %vm1446, %v1399, 0
        %v1451 = vsel %vm1446, %v1400, 0
        %v1454 = vsel %vm1446, %v1401, 0
        %v1457 = vsel %vm1446, %v1402, 0
        %v1460 = vsel %vm1446, %v1403, 0
        %v1463 = vsel %vm1446, %v1404, 0
        %v1466 = vsel %vm1446, %v1405, 0
        %v1469 = vsel %vm1446, %v1406, 0
        %1471 = vmatprep.subr.bf16.mxu0 0
        %1472 = vmatpush1.bf16.msra.mxu0 0
        %1473 = vmatprep.subr.bf16.mxu0 0
        %1474 = vmatpush1.bf16.msra.mxu0 0
        %1475 = vmatprep.subr.bf16.mxu0 0
        %1476 = vmatpush1.bf16.msra.mxu0 0
        %1477 = vmatprep.subr.bf16.mxu0 0
        %1478 = vmatpush1.bf16.msra.mxu0 0
        %1479 = vmatprep.subr.bf16.mxu0 0
        %1480 = vmatpush1.bf16.msra.mxu0 %v1441
        %1481 = vmatprep.subr.bf16.mxu0 0
        %1482 = vmatpush1.bf16.msra.mxu0 %v1440
        %1483 = vmatprep.subr.bf16.mxu0 0
        %1484 = vmatpush1.bf16.msra.mxu0 %v1439
        %1485 = vmatprep.subr.bf16.mxu0 0
        %1486 = vmatpush1.bf16.msra.mxu0 %v1438
        %1487 = vmatprep.subr.bf16.mxu0 0
        %1488 = vmatpush2.bf16.msra.mxu0 0
        %1489 = vmatprep.subr.bf16.mxu0 0
        %1490 = vmatpush2.bf16.msra.mxu0 0
        %1491 = vmatprep.subr.bf16.mxu0 0
        %1492 = vmatpush2.bf16.msra.mxu0 0
        %1493 = vmatprep.subr.bf16.mxu0 0
        %1494 = vmatpush2.bf16.msra.mxu0 0
        %1495 = vmatprep.subr.bf16.mxu0 0
        %1496 = vmatpush2.bf16.msra.mxu0 0
        %1497 = vmatprep.subr.bf16.mxu0 0
        %1498 = vmatpush2.bf16.msra.mxu0 0
        %1499 = vmatprep.subr.bf16.mxu0 0
        %1500 = vmatpush2.bf16.msra.mxu0 0
        %1501 = vmatprep.subr.bf16.mxu0 0
        %1502 = vmatpush2.bf16.msra.mxu0 0
        %1503 = vmatprep.mubr.bf16.mxu0 0
        %1504 = vmatmul.mubr.bf16.gmra.mxu0 %v1448
        %v1505 = vpop.f32.mrf.mxu0
        %v1506 = vadd.f32 %v1420, %v1505
        %v1507 = vpop.f32.mrf.mxu0
        %v1508 = vpop.f32.mrf.mxu0
        %v1509 = vadd.f32 %v1420, %v1508
        %v1510 = vpop.f32.mrf.mxu0
        %1511 = vmatprep.mubr.bf16.mxu0 0
        %1512 = vmatmul.mubr.bf16.gmra.mxu0 %v1451
        %v1513 = vpop.f32.mrf.mxu0
        %v1514 = vadd.f32 %v1420, %v1513
        %v1515 = vpop.f32.mrf.mxu0
        %v1516 = vpop.f32.mrf.mxu0
        %v1517 = vadd.f32 %v1420, %v1516
        %v1518 = vpop.f32.mrf.mxu0
        %1519 = vmatprep.mubr.bf16.mxu0 0
        %1520 = vmatmul.mubr.bf16.gmra.mxu0 %v1454
        %v1521 = vpop.f32.mrf.mxu0
        %v1522 = vadd.f32 %v1420, %v1521
        %v1523 = vpop.f32.mrf.mxu0
        %v1524 = vpop.f32.mrf.mxu0
        %v1525 = vadd.f32 %v1420, %v1524
        %v1526 = vpop.f32.mrf.mxu0
        %1527 = vmatprep.mubr.bf16.mxu0 0
        %1528 = vmatmul.mubr.bf16.gmra.mxu0 %v1457
        %v1529 = vpop.f32.mrf.mxu0
        %v1530 = vadd.f32 %v1420, %v1529
        %v1531 = vpop.f32.mrf.mxu0
        %v1532 = vpop.f32.mrf.mxu0
        %v1533 = vadd.f32 %v1420, %v1532
        %v1534 = vpop.f32.mrf.mxu0
        %1535 = vmatprep.mubr.bf16.mxu0 0
        %1536 = vmatmul.mubr.bf16.gmra.mxu0 %v1460
        %v1537 = vpop.f32.mrf.mxu0
        %v1538 = vadd.f32 %v1420, %v1537
        %v1539 = vpop.f32.mrf.mxu0
        %v1540 = vpop.f32.mrf.mxu0
        %v1541 = vadd.f32 %v1420, %v1540
        %v1542 = vpop.f32.mrf.mxu0
        %1543 = vmatprep.mubr.bf16.mxu0 0
        %1544 = vmatmul.mubr.bf16.gmra.mxu0 %v1463
        %v1545 = vpop.f32.mrf.mxu0
        %v1546 = vadd.f32 %v1420, %v1545
        %v1547 = vpop.f32.mrf.mxu0
        %v1548 = vpop.f32.mrf.mxu0
        %v1549 = vadd.f32 %v1420, %v1548
        %v1550 = vpop.f32.mrf.mxu0
        %1551 = vmatprep.mubr.bf16.mxu0 0
        %1552 = vmatmul.mubr.bf16.gmra.mxu0 %v1466
        %v1553 = vpop.f32.mrf.mxu0
        %v1554 = vadd.f32 %v1420, %v1553
        %v1555 = vpop.f32.mrf.mxu0
        %v1556 = vpop.f32.mrf.mxu0
        %v1557 = vadd.f32 %v1420, %v1556
        %v1558 = vpop.f32.mrf.mxu0
        %1559 = vmatprep.mubr.bf16.mxu0 0
        %1560 = vmatmul.mubr.bf16.gmra.mxu0 %v1469
        %v1561 = vpop.f32.mrf.mxu0
        %v1562 = vadd.f32 %v1420, %v1561
        %v1563 = vpop.f32.mrf.mxu0
        %v1564 = vpop.f32.mrf.mxu0
        %v1565 = vadd.f32 %v1420, %v1564
        %v1566 = vpop.f32.mrf.mxu0
        %1567 = vdwg.mxu0
        %v1568 = vmax.f32 %v1506, 0.0
        %v1569 = vmax.f32 %v1509, 0.0
        %v1570 = vmax.f32 %v1514, 0.0
        %v1571 = vmax.f32 %v1517, 0.0
        %v1572 = vmax.f32 %v1522, 0.0
        %v1573 = vmax.f32 %v1525, 0.0
        %v1574 = vmax.f32 %v1530, 0.0
        %v1575 = vmax.f32 %v1533, 0.0
        %v1576 = vmax.f32 %v1538, 0.0
        %v1577 = vmax.f32 %v1541, 0.0
        %v1578 = vmax.f32 %v1546, 0.0
        %v1579 = vmax.f32 %v1549, 0.0
        %v1580 = vmax.f32 %v1554, 0.0
        %v1581 = vmax.f32 %v1557, 0.0
        %v1582 = vmax.f32 %v1562, 0.0
        %v1583 = vmax.f32 %v1565, 0.0
        %vm1584 = vcmp.ne.f32.partialorder %v1506, %v1506
        %vm1585 = vcmp.ne.f32.partialorder %v1509, %v1509
        %vm1586 = vcmp.ne.f32.partialorder %v1514, %v1514
        %vm1587 = vcmp.ne.f32.partialorder %v1517, %v1517
        %vm1588 = vcmp.ne.f32.partialorder %v1522, %v1522
        %vm1589 = vcmp.ne.f32.partialorder %v1525, %v1525
        %vm1590 = vcmp.ne.f32.partialorder %v1530, %v1530
        %vm1591 = vcmp.ne.f32.partialorder %v1533, %v1533
        %vm1592 = vcmp.ne.f32.partialorder %v1538, %v1538
        %vm1593 = vcmp.ne.f32.partialorder %v1541, %v1541
        %vm1594 = vcmp.ne.f32.partialorder %v1546, %v1546
        %vm1595 = vcmp.ne.f32.partialorder %v1549, %v1549
        %vm1596 = vcmp.ne.f32.partialorder %v1554, %v1554
        %vm1597 = vcmp.ne.f32.partialorder %v1557, %v1557
        %vm1598 = vcmp.ne.f32.partialorder %v1562, %v1562
        %vm1599 = vcmp.ne.f32.partialorder %v1565, %v1565
        %v1600 = vadd.f32 %v1506, 0.0
        %v1601 = vadd.f32 %v1509, 0.0
        %v1602 = vadd.f32 %v1514, 0.0
        %v1603 = vadd.f32 %v1517, 0.0
        %v1604 = vadd.f32 %v1522, 0.0
        %v1605 = vadd.f32 %v1525, 0.0
        %v1606 = vadd.f32 %v1530, 0.0
        %v1607 = vadd.f32 %v1533, 0.0
        %v1608 = vadd.f32 %v1538, 0.0
        %v1609 = vadd.f32 %v1541, 0.0
        %v1610 = vadd.f32 %v1546, 0.0
        %v1611 = vadd.f32 %v1549, 0.0
        %v1612 = vadd.f32 %v1554, 0.0
        %v1613 = vadd.f32 %v1557, 0.0
        %v1614 = vadd.f32 %v1562, 0.0
        %v1615 = vadd.f32 %v1565, 0.0
        %v1616 = vand.u32 2147483647, %v1506
        %v1617 = vand.u32 2147483647, %v1509
        %v1618 = vand.u32 2147483647, %v1514
        %v1619 = vand.u32 2147483647, %v1517
        %v1620 = vand.u32 2147483647, %v1522
        %v1621 = vand.u32 2147483647, %v1525
        %v1622 = vand.u32 2147483647, %v1530
        %v1623 = vand.u32 2147483647, %v1533
        %v1624 = vand.u32 2147483647, %v1538
        %v1625 = vand.u32 2147483647, %v1541
        %v1626 = vand.u32 2147483647, %v1546
        %v1627 = vand.u32 2147483647, %v1549
        %v1628 = vand.u32 2147483647, %v1554
        %v1629 = vand.u32 2147483647, %v1557
        %v1630 = vand.u32 2147483647, %v1562
        %v1631 = vand.u32 2147483647, %v1565
        %v1632 = vsub.f32 0.0, %v1616
        %v1633 = vsub.f32 0.0, %v1617
        %v1634 = vsub.f32 0.0, %v1618
        %v1635 = vsub.f32 0.0, %v1619
        %v1636 = vsub.f32 0.0, %v1620
        %v1637 = vsub.f32 0.0, %v1621
        %v1638 = vsub.f32 0.0, %v1622
        %v1639 = vsub.f32 0.0, %v1623
        %v1640 = vsub.f32 0.0, %v1624
        %v1641 = vsub.f32 0.0, %v1625
        %v1642 = vsub.f32 0.0, %v1626
        %v1643 = vsub.f32 0.0, %v1627
        %v1644 = vsub.f32 0.0, %v1628
        %v1645 = vsub.f32 0.0, %v1629
        %v1646 = vsub.f32 0.0, %v1630
        %v1647 = vsub.f32 0.0, %v1631
        %v1648 = vmul.f32 %v1632, 1.442695
        %v1649 = vpow.pop %v1648
        %v1650 = vmul.f32 %v1633, 1.442695
        %v1651 = vpow.pop %v1650
        %v1652 = vmul.f32 %v1634, 1.442695
        %v1653 = vpow.pop %v1652
        %v1654 = vmul.f32 %v1635, 1.442695
        %v1655 = vpow.pop %v1654
        %v1656 = vmul.f32 %v1636, 1.442695
        %v1657 = vpow.pop %v1656
        %v1658 = vmul.f32 %v1637, 1.442695
        %v1659 = vpow.pop %v1658
        %v1660 = vmul.f32 %v1638, 1.442695
        %v1661 = vpow.pop %v1660
        %v1662 = vmul.f32 %v1639, 1.442695
        %v1663 = vpow.pop %v1662
        %v1664 = vmul.f32 %v1640, 1.442695
        %v1665 = vpow.pop %v1664
        %v1666 = vmul.f32 %v1641, 1.442695
        %v1667 = vpow.pop %v1666
        %v1668 = vmul.f32 %v1642, 1.442695
        %v1669 = vpow.pop %v1668
        %v1670 = vmul.f32 %v1643, 1.442695
        %v1671 = vpow.pop %v1670
        %v1672 = vmul.f32 %v1644, 1.442695
        %v1673 = vpow.pop %v1672
        %v1674 = vmul.f32 %v1645, 1.442695
        %v1675 = vpow.pop %v1674
        %v1676 = vmul.f32 %v1646, 1.442695
        %v1677 = vpow.pop %v1676
        %v1678 = vmul.f32 %v1647, 1.442695
        %v1679 = vpow.pop %v1678
        %v1680 = vadd.f32 %v1649, 1.0
        %v1681 = vlog2.pop %v1680
        %v1682 = vmul.f32 %v1681, 0.6931472
        %v1683 = vmul.f32 -0.5, %v1649
        %v1684 = vadd.f32 %v1683, 1.0
        %v1685 = vmul.f32 %v1684, %v1649
        %v1686 = vand.u32 2147483647, %v1649
        %vm1687 = vcmp.lt.f32.partialorder %v1686, 0.0004427343
        %v1688 = vsel %vm1687, %v1685, %v1682
        %v1689 = vadd.f32 %v1651, 1.0
        %v1690 = vlog2.pop %v1689
        %v1691 = vmul.f32 %v1690, 0.6931472
        %v1692 = vmul.f32 -0.5, %v1651
        %v1693 = vadd.f32 %v1692, 1.0
        %v1694 = vmul.f32 %v1693, %v1651
        %v1695 = vand.u32 2147483647, %v1651
        %vm1696 = vcmp.lt.f32.partialorder %v1695, 0.0004427343
        %v1697 = vsel %vm1696, %v1694, %v1691
        %v1698 = vadd.f32 %v1653, 1.0
        %v1699 = vlog2.pop %v1698
        %v1700 = vmul.f32 %v1699, 0.6931472
        %v1701 = vmul.f32 -0.5, %v1653
        %v1702 = vadd.f32 %v1701, 1.0
        %v1703 = vmul.f32 %v1702, %v1653
        %v1704 = vand.u32 2147483647, %v1653
        %vm1705 = vcmp.lt.f32.partialorder %v1704, 0.0004427343
        %v1706 = vsel %vm1705, %v1703, %v1700
        %v1707 = vadd.f32 %v1655, 1.0
        %v1708 = vlog2.pop %v1707
        %v1709 = vmul.f32 %v1708, 0.6931472
        %v1710 = vmul.f32 -0.5, %v1655
        %v1711 = vadd.f32 %v1710, 1.0
        %v1712 = vmul.f32 %v1711, %v1655
        %v1713 = vand.u32 2147483647, %v1655
        %vm1714 = vcmp.lt.f32.partialorder %v1713, 0.0004427343
        %v1715 = vsel %vm1714, %v1712, %v1709
        %v1716 = vadd.f32 %v1657, 1.0
        %v1717 = vlog2.pop %v1716
        %v1718 = vmul.f32 %v1717, 0.6931472
        %v1719 = vmul.f32 -0.5, %v1657
        %v1720 = vadd.f32 %v1719, 1.0
        %v1721 = vmul.f32 %v1720, %v1657
        %v1722 = vand.u32 2147483647, %v1657
        %vm1723 = vcmp.lt.f32.partialorder %v1722, 0.0004427343
        %v1724 = vsel %vm1723, %v1721, %v1718
        %v1725 = vadd.f32 %v1659, 1.0
        %v1726 = vlog2.pop %v1725
        %v1727 = vmul.f32 %v1726, 0.6931472
        %v1728 = vmul.f32 -0.5, %v1659
        %v1729 = vadd.f32 %v1728, 1.0
        %v1730 = vmul.f32 %v1729, %v1659
        %v1731 = vand.u32 2147483647, %v1659
        %vm1732 = vcmp.lt.f32.partialorder %v1731, 0.0004427343
        %v1733 = vsel %vm1732, %v1730, %v1727
        %v1734 = vadd.f32 %v1661, 1.0
        %v1735 = vlog2.pop %v1734
        %v1736 = vmul.f32 %v1735, 0.6931472
        %v1737 = vmul.f32 -0.5, %v1661
        %v1738 = vadd.f32 %v1737, 1.0
        %v1739 = vmul.f32 %v1738, %v1661
        %v1740 = vand.u32 2147483647, %v1661
        %vm1741 = vcmp.lt.f32.partialorder %v1740, 0.0004427343
        %v1742 = vsel %vm1741, %v1739, %v1736
        %v1743 = vadd.f32 %v1663, 1.0
        %v1744 = vlog2.pop %v1743
        %v1745 = vmul.f32 %v1744, 0.6931472
        %v1746 = vmul.f32 -0.5, %v1663
        %v1747 = vadd.f32 %v1746, 1.0
        %v1748 = vmul.f32 %v1747, %v1663
        %v1749 = vand.u32 2147483647, %v1663
        %vm1750 = vcmp.lt.f32.partialorder %v1749, 0.0004427343
        %v1751 = vsel %vm1750, %v1748, %v1745
        %v1752 = vadd.f32 %v1665, 1.0
        %v1753 = vlog2.pop %v1752
        %v1754 = vmul.f32 %v1753, 0.6931472
        %v1755 = vmul.f32 -0.5, %v1665
        %v1756 = vadd.f32 %v1755, 1.0
        %v1757 = vmul.f32 %v1756, %v1665
        %v1758 = vand.u32 2147483647, %v1665
        %vm1759 = vcmp.lt.f32.partialorder %v1758, 0.0004427343
        %v1760 = vsel %vm1759, %v1757, %v1754
        %v1761 = vadd.f32 %v1667, 1.0
        %v1762 = vlog2.pop %v1761
        %v1763 = vmul.f32 %v1762, 0.6931472
        %v1764 = vmul.f32 -0.5, %v1667
        %v1765 = vadd.f32 %v1764, 1.0
        %v1766 = vmul.f32 %v1765, %v1667
        %v1767 = vand.u32 2147483647, %v1667
        %vm1768 = vcmp.lt.f32.partialorder %v1767, 0.0004427343
        %v1769 = vsel %vm1768, %v1766, %v1763
        %v1770 = vadd.f32 %v1669, 1.0
        %v1771 = vlog2.pop %v1770
        %v1772 = vmul.f32 %v1771, 0.6931472
        %v1773 = vmul.f32 -0.5, %v1669
        %v1774 = vadd.f32 %v1773, 1.0
        %v1775 = vmul.f32 %v1774, %v1669
        %v1776 = vand.u32 2147483647, %v1669
        %vm1777 = vcmp.lt.f32.partialorder %v1776, 0.0004427343
        %v1778 = vsel %vm1777, %v1775, %v1772
        %v1779 = vadd.f32 %v1671, 1.0
        %v1780 = vlog2.pop %v1779
        %v1781 = vmul.f32 %v1780, 0.6931472
        %v1782 = vmul.f32 -0.5, %v1671
        %v1783 = vadd.f32 %v1782, 1.0
        %v1784 = vmul.f32 %v1783, %v1671
        %v1785 = vand.u32 2147483647, %v1671
        %vm1786 = vcmp.lt.f32.partialorder %v1785, 0.0004427343
        %v1787 = vsel %vm1786, %v1784, %v1781
        %v1788 = vadd.f32 %v1673, 1.0
        %v1789 = vlog2.pop %v1788
        %v1790 = vmul.f32 %v1789, 0.6931472
        %v1791 = vmul.f32 -0.5, %v1673
        %v1792 = vadd.f32 %v1791, 1.0
        %v1793 = vmul.f32 %v1792, %v1673
        %v1794 = vand.u32 2147483647, %v1673
        %vm1795 = vcmp.lt.f32.partialorder %v1794, 0.0004427343
        %v1796 = vsel %vm1795, %v1793, %v1790
        %v1797 = vadd.f32 %v1675, 1.0
        %v1798 = vlog2.pop %v1797
        %v1799 = vmul.f32 %v1798, 0.6931472
        %v1800 = vmul.f32 -0.5, %v1675
        %v1801 = vadd.f32 %v1800, 1.0
        %v1802 = vmul.f32 %v1801, %v1675
        %v1803 = vand.u32 2147483647, %v1675
        %vm1804 = vcmp.lt.f32.partialorder %v1803, 0.0004427343
        %v1805 = vsel %vm1804, %v1802, %v1799
        %v1806 = vadd.f32 %v1677, 1.0
        %v1807 = vlog2.pop %v1806
        %v1808 = vmul.f32 %v1807, 0.6931472
        %v1809 = vmul.f32 -0.5, %v1677
        %v1810 = vadd.f32 %v1809, 1.0
        %v1811 = vmul.f32 %v1810, %v1677
        %v1812 = vand.u32 2147483647, %v1677
        %vm1813 = vcmp.lt.f32.partialorder %v1812, 0.0004427343
        %v1814 = vsel %vm1813, %v1811, %v1808
        %v1815 = vadd.f32 %v1679, 1.0
        %v1816 = vlog2.pop %v1815
        %v1817 = vmul.f32 %v1816, 0.6931472
        %v1818 = vmul.f32 -0.5, %v1679
        %v1819 = vadd.f32 %v1818, 1.0
        %v1820 = vmul.f32 %v1819, %v1679
        %v1821 = vand.u32 2147483647, %v1679
        %vm1822 = vcmp.lt.f32.partialorder %v1821, 0.0004427343
        %v1823 = vsel %vm1822, %v1820, %v1817
        %v1824 = vadd.f32 %v1568, %v1688
        %v1825 = vadd.f32 %v1569, %v1697
        %v1826 = vadd.f32 %v1570, %v1706
        %v1827 = vadd.f32 %v1571, %v1715
        %v1828 = vadd.f32 %v1572, %v1724
        %v1829 = vadd.f32 %v1573, %v1733
        %v1830 = vadd.f32 %v1574, %v1742
        %v1831 = vadd.f32 %v1575, %v1751
        %v1832 = vadd.f32 %v1576, %v1760
        %v1833 = vadd.f32 %v1577, %v1769
        %v1834 = vadd.f32 %v1578, %v1778
        %v1835 = vadd.f32 %v1579, %v1787
        %v1836 = vadd.f32 %v1580, %v1796
        %v1837 = vadd.f32 %v1581, %v1805
        %v1838 = vadd.f32 %v1582, %v1814
        %v1839 = vadd.f32 %v1583, %v1823
        %v1840 = vsel %vm1584, %v1600, %v1824
        %v1841 = vsel %vm1585, %v1601, %v1825
        %v1842 = vsel %vm1586, %v1602, %v1826
        %v1843 = vsel %vm1587, %v1603, %v1827
        %v1844 = vsel %vm1588, %v1604, %v1828
        %v1845 = vsel %vm1589, %v1605, %v1829
        %v1846 = vsel %vm1590, %v1606, %v1830
        %v1847 = vsel %vm1591, %v1607, %v1831
        %v1848 = vsel %vm1592, %v1608, %v1832
        %v1849 = vsel %vm1593, %v1609, %v1833
        %v1850 = vsel %vm1594, %v1610, %v1834
        %v1851 = vsel %vm1595, %v1611, %v1835
        %v1852 = vsel %vm1596, %v1612, %v1836
        %v1853 = vsel %vm1597, %v1613, %v1837
        %v1854 = vsel %vm1598, %v1614, %v1838
        %v1855 = vsel %vm1599, %v1615, %v1839
        %v1856 = vmul.f32 %v1840, 0.5
        %v1857 = vmul.f32 %v1841, 0.5
        %v1858 = vmul.f32 %v1842, 0.5
        %v1859 = vmul.f32 %v1843, 0.5
        %v1860 = vmul.f32 %v1844, 0.5
        %v1861 = vmul.f32 %v1845, 0.5
        %v1862 = vmul.f32 %v1846, 0.5
        %v1863 = vmul.f32 %v1847, 0.5
        %v1864 = vmul.f32 %v1848, 0.5
        %v1865 = vmul.f32 %v1849, 0.5
        %v1866 = vmul.f32 %v1850, 0.5
        %v1867 = vmul.f32 %v1851, 0.5
        %v1868 = vmul.f32 %v1852, 0.5
        %v1869 = vmul.f32 %v1853, 0.5
        %v1870 = vmul.f32 %v1854, 0.5
        %v1871 = vmul.f32 %v1855, 0.5
        %v1872 = vmul.f32 %v1856, 1.442695
        %v1873 = vpow.pop %v1872
        %v1874 = vmul.f32 %v1857, 1.442695
        %v1875 = vpow.pop %v1874
        %v1876 = vmul.f32 %v1858, 1.442695
        %v1877 = vpow.pop %v1876
        %v1878 = vmul.f32 %v1859, 1.442695
        %v1879 = vpow.pop %v1878
        %v1880 = vmul.f32 %v1860, 1.442695
        %v1881 = vpow.pop %v1880
        %v1882 = vmul.f32 %v1861, 1.442695
        %v1883 = vpow.pop %v1882
        %v1884 = vmul.f32 %v1862, 1.442695
        %v1885 = vpow.pop %v1884
        %v1886 = vmul.f32 %v1863, 1.442695
        %v1887 = vpow.pop %v1886
        %v1888 = vmul.f32 %v1864, 1.442695
        %v1889 = vpow.pop %v1888
        %v1890 = vmul.f32 %v1865, 1.442695
        %v1891 = vpow.pop %v1890
        %v1892 = vmul.f32 %v1866, 1.442695
        %v1893 = vpow.pop %v1892
        %v1894 = vmul.f32 %v1867, 1.442695
        %v1895 = vpow.pop %v1894
        %v1896 = vmul.f32 %v1868, 1.442695
        %v1897 = vpow.pop %v1896
        %v1898 = vmul.f32 %v1869, 1.442695
        %v1899 = vpow.pop %v1898
        %v1900 = vmul.f32 %v1870, 1.442695
        %v1901 = vpow.pop %v1900
        %v1902 = vmul.f32 %v1871, 1.442695
        %v1903 = vpow.pop %v1902
        %v1904 = vld [vmem:[%s602] sm:$0xf]
        %v1905 = vld [vmem:[%s602 + $0x4] sm:$0xf]
        %v1906 = vld [vmem:[%s602 + $0x8] sm:$0xf]
        %v1907 = vld [vmem:[%s602 + $0xc] sm:$0xf]
        %v1908 = vld [vmem:[%s602 + $0x10] sm:$0xf]
        %v1909 = vld [vmem:[%s602 + $0x14] sm:$0xf]
        %v1910 = vld [vmem:[%s602 + $0x18] sm:$0xf]
        %v1911 = vld [vmem:[%s602 + $0x1c] sm:$0xf]
        %v1912 = vld [vmem:[%s602 + $0x20] sm:$0xf]
        %v1913 = vld [vmem:[%s602 + $0x24] sm:$0xf]
        %v1914 = vld [vmem:[%s602 + $0x28] sm:$0xf]
        %v1915 = vld [vmem:[%s602 + $0x2c] sm:$0xf]
        %v1916 = vld [vmem:[%s602 + $0x30] sm:$0xf]
        %v1917 = vld [vmem:[%s602 + $0x34] sm:$0xf]
        %v1918 = vld [vmem:[%s602 + $0x38] sm:$0xf]
        %v1919 = vld [vmem:[%s602 + $0x3c] sm:$0xf]
        %v1920 = vunpack.c.l.bf16 %v1904
        %v1921 = vunpack.c.l.bf16 %v1905
        %v1922 = vunpack.c.l.bf16 %v1906
        %v1923 = vunpack.c.l.bf16 %v1907
        %v1924 = vunpack.c.l.bf16 %v1908
        %v1925 = vunpack.c.l.bf16 %v1909
        %v1926 = vunpack.c.l.bf16 %v1910
        %v1927 = vunpack.c.l.bf16 %v1911
        %v1928 = vunpack.c.l.bf16 %v1912
        %v1929 = vunpack.c.l.bf16 %v1913
        %v1930 = vunpack.c.l.bf16 %v1914
        %v1931 = vunpack.c.l.bf16 %v1915
        %v1932 = vunpack.c.l.bf16 %v1916
        %v1933 = vunpack.c.l.bf16 %v1917
        %v1934 = vunpack.c.l.bf16 %v1918
        %v1935 = vunpack.c.l.bf16 %v1919
        %1952 = vrot.lane.b32.xlu0 %v1920, 32
        %v1953 = vpop.permute.xlu0 %1952
        %1954 = vrot.lane.b32.xlu0 %v1921, 32
        %v1955 = vpop.permute.xlu0 %1954
        %1956 = vrot.lane.b32.xlu0 %v1922, 32
        %v1957 = vpop.permute.xlu0 %1956
        %1958 = vrot.lane.b32.xlu0 %v1923, 32
        %v1959 = vpop.permute.xlu0 %1958
        %1960 = vrot.lane.b32.xlu0 %v1924, 32
        %v1961 = vpop.permute.xlu0 %1960
        %1962 = vrot.lane.b32.xlu0 %v1925, 32
        %v1963 = vpop.permute.xlu0 %1962
        %1964 = vrot.lane.b32.xlu0 %v1926, 32
        %v1965 = vpop.permute.xlu0 %1964
        %1966 = vrot.lane.b32.xlu0 %v1927, 32
        %v1967 = vpop.permute.xlu0 %1966
        %1968 = vrot.lane.b32.xlu0 %v1928, 32
        %v1969 = vpop.permute.xlu0 %1968
        %1970 = vrot.lane.b32.xlu0 %v1929, 32
        %v1971 = vpop.permute.xlu0 %1970
        %1972 = vrot.lane.b32.xlu0 %v1930, 32
        %v1973 = vpop.permute.xlu0 %1972
        %1974 = vrot.lane.b32.xlu0 %v1931, 32
        %v1975 = vpop.permute.xlu0 %1974
        %1976 = vrot.lane.b32.xlu0 %v1932, 32
        %v1977 = vpop.permute.xlu0 %1976
        %1978 = vrot.lane.b32.xlu0 %v1933, 32
        %v1979 = vpop.permute.xlu0 %1978
        %1980 = vrot.lane.b32.xlu0 %v1934, 32
        %v1981 = vpop.permute.xlu0 %1980
        %1982 = vrot.lane.b32.xlu0 %v1935, 32
        %v1983 = vpop.permute.xlu0 %1982
        %v2000 = vmul.f32 %v1873, %v1953
        %v2001 = vmul.f32 %v1875, %v1955
        %v2002 = vmul.f32 %v1877, %v1957
        %v2003 = vmul.f32 %v1879, %v1959
        %v2004 = vmul.f32 %v1881, %v1961
        %v2005 = vmul.f32 %v1883, %v1963
        %v2006 = vmul.f32 %v1885, %v1965
        %v2007 = vmul.f32 %v1887, %v1967
        %v2008 = vmul.f32 %v1889, %v1969
        %v2009 = vmul.f32 %v1891, %v1971
        %v2010 = vmul.f32 %v1893, %v1973
        %v2011 = vmul.f32 %v1895, %v1975
        %v2012 = vmul.f32 %v1897, %v1977
        %v2013 = vmul.f32 %v1899, %v1979
        %v2014 = vmul.f32 %v1901, %v1981
        %v2015 = vmul.f32 %v1903, %v1983
        %2032 = vrot.lane.b32.xlu0 %v2000, 96
        %v2033 = vpop.permute.xlu0 %2032
        %2034 = vrot.lane.b32.xlu0 %v2001, 96
        %v2035 = vpop.permute.xlu0 %2034
        %2036 = vrot.lane.b32.xlu0 %v2002, 96
        %v2037 = vpop.permute.xlu0 %2036
        %2038 = vrot.lane.b32.xlu0 %v2003, 96
        %v2039 = vpop.permute.xlu0 %2038
        %2040 = vrot.lane.b32.xlu0 %v2004, 96
        %v2041 = vpop.permute.xlu0 %2040
        %2042 = vrot.lane.b32.xlu0 %v2005, 96
        %v2043 = vpop.permute.xlu0 %2042
        %2044 = vrot.lane.b32.xlu0 %v2006, 96
        %v2045 = vpop.permute.xlu0 %2044
        %2046 = vrot.lane.b32.xlu0 %v2007, 96
        %v2047 = vpop.permute.xlu0 %2046
        %2048 = vrot.lane.b32.xlu0 %v2008, 96
        %v2049 = vpop.permute.xlu0 %2048
        %2050 = vrot.lane.b32.xlu0 %v2009, 96
        %v2051 = vpop.permute.xlu0 %2050
        %2052 = vrot.lane.b32.xlu0 %v2010, 96
        %v2053 = vpop.permute.xlu0 %2052
        %2054 = vrot.lane.b32.xlu0 %v2011, 96
        %v2055 = vpop.permute.xlu0 %2054
        %2056 = vrot.lane.b32.xlu0 %v2012, 96
        %v2057 = vpop.permute.xlu0 %2056
        %2058 = vrot.lane.b32.xlu0 %v2013, 96
        %v2059 = vpop.permute.xlu0 %2058
        %2060 = vrot.lane.b32.xlu0 %v2014, 96
        %v2061 = vpop.permute.xlu0 %2060
        %2062 = vrot.lane.b32.xlu0 %v2015, 96
        %v2063 = vpop.permute.xlu0 %2062
        %v2080 = vadd.f32 %v1506, %v2033
        %v2081 = vadd.f32 %v1509, %v2035
        %v2082 = vadd.f32 %v1514, %v2037
        %v2083 = vadd.f32 %v1517, %v2039
        %v2084 = vadd.f32 %v1522, %v2041
        %v2085 = vadd.f32 %v1525, %v2043
        %v2086 = vadd.f32 %v1530, %v2045
        %v2087 = vadd.f32 %v1533, %v2047
        %v2088 = vadd.f32 %v1538, %v2049
        %v2089 = vadd.f32 %v1541, %v2051
        %v2090 = vadd.f32 %v1546, %v2053
        %v2091 = vadd.f32 %v1549, %v2055
        %v2092 = vadd.f32 %v1554, %v2057
        %v2093 = vadd.f32 %v1557, %v2059
        %v2094 = vadd.f32 %v1562, %v2061
        %v2095 = vadd.f32 %v1565, %v2063
        %v2096 = vpack.c.bf16 %v2081, %v2080
        %v2097 = vpack.c.bf16 %v2083, %v2082
        %v2098 = vpack.c.bf16 %v2085, %v2084
        %v2099 = vpack.c.bf16 %v2087, %v2086
        %v2100 = vpack.c.bf16 %v2089, %v2088
        %v2101 = vpack.c.bf16 %v2091, %v2090
        %v2102 = vpack.c.bf16 %v2093, %v2092
        %v2103 = vpack.c.bf16 %v2095, %v2094
        %v2104 = vld [vmem:[#allocation7] sm:$0xf]
        %v2105 = vld [vmem:[#allocation7 + $0x4] sm:$0xf]
        %v2106 = vld [vmem:[#allocation7 + $0x8] sm:$0xf]
        %v2107 = vld [vmem:[#allocation7 + $0xc] sm:$0xf]
        %v2108 = vld [vmem:[%s9] sm:$0x1]
        %v2110 = vlaneseq
        %v2111 = vshrl.u32 %v2110, 7
        %v2112 = vsub.s32 0, %v2111
        %v2113 = vrot.slane %v2108, %v2112
        %v2119 = vunpack.c.l.b16 %v2104
        %v2120 = vunpack.c.l.b16 %v2105
        %v2121 = vunpack.c.l.b16 %v2106
        %v2122 = vunpack.c.l.b16 %v2107
        %v2123 = vpack.c.b16 %v2120, %v2119
        %v2124 = vpack.c.b16 %v2122, %v2121
        %vm2127 = vcmask 261120
        %v2129 = vsel %vm2127, %v2096, 0
        %v2132 = vsel %vm2127, %v2097, 0
        %v2135 = vsel %vm2127, %v2098, 0
        %v2138 = vsel %vm2127, %v2099, 0
        %v2141 = vsel %vm2127, %v2100, 0
        %v2144 = vsel %vm2127, %v2101, 0
        %v2147 = vsel %vm2127, %v2102, 0
        %v2150 = vsel %vm2127, %v2103, 0
        %2152 = vmatprep.subr.bf16.mxu0 0
        %2153 = vmatpush1.bf16.msra.mxu0 0
        %2154 = vmatprep.subr.bf16.mxu0 0
        %2155 = vmatpush1.bf16.msra.mxu0 0
        %2156 = vmatprep.subr.bf16.mxu0 0
        %2157 = vmatpush1.bf16.msra.mxu0 0
        %2158 = vmatprep.subr.bf16.mxu0 0
        %2159 = vmatpush1.bf16.msra.mxu0 0
        %2160 = vmatprep.subr.bf16.mxu0 0
        %2161 = vmatpush1.bf16.msra.mxu0 0
        %2162 = vmatprep.subr.bf16.mxu0 0
        %2163 = vmatpush1.bf16.msra.mxu0 0
        %2164 = vmatprep.subr.bf16.mxu0 0
        %2165 = vmatpush1.bf16.msra.mxu0 %v2124
        %2166 = vmatprep.subr.bf16.mxu0 0
        %2167 = vmatpush1.bf16.msra.mxu0 %v2123
        %2168 = vmatprep.subr.bf16.mxu0 0
        %2169 = vmatpush2.bf16.msra.mxu0 0
        %2170 = vmatprep.subr.bf16.mxu0 0
        %2171 = vmatpush2.bf16.msra.mxu0 0
        %2172 = vmatprep.subr.bf16.mxu0 0
        %2173 = vmatpush2.bf16.msra.mxu0 0
        %2174 = vmatprep.subr.bf16.mxu0 0
        %2175 = vmatpush2.bf16.msra.mxu0 0
        %2176 = vmatprep.subr.bf16.mxu0 0
        %2177 = vmatpush2.bf16.msra.mxu0 0
        %2178 = vmatprep.subr.bf16.mxu0 0
        %2179 = vmatpush2.bf16.msra.mxu0 0
        %2180 = vmatprep.subr.bf16.mxu0 0
        %2181 = vmatpush2.bf16.msra.mxu0 0
        %2182 = vmatprep.subr.bf16.mxu0 0
        %2183 = vmatpush2.bf16.msra.mxu0 0
        %2184 = vmatprep.mubr.bf16.mxu0 0
        %2185 = vmatmul.mubr.bf16.gmra.mxu0 %v2129
        %v2186 = vpop.f32.mrf.mxu0
        %v2187 = vadd.f32 %v2113, %v2186
        %v2188 = vpop.f32.mrf.mxu0
        %v2189 = vpop.f32.mrf.mxu0
        %v2190 = vadd.f32 %v2113, %v2189
        %v2191 = vpop.f32.mrf.mxu0
        %2192 = vmatprep.mubr.bf16.mxu0 0
        %2193 = vmatmul.mubr.bf16.gmra.mxu0 %v2132
        %v2194 = vpop.f32.mrf.mxu0
        %v2195 = vadd.f32 %v2113, %v2194
        %v2196 = vpop.f32.mrf.mxu0
        %v2197 = vpop.f32.mrf.mxu0
        %v2198 = vadd.f32 %v2113, %v2197
        %v2199 = vpop.f32.mrf.mxu0
        %2200 = vmatprep.mubr.bf16.mxu0 0
        %2201 = vmatmul.mubr.bf16.gmra.mxu0 %v2135
        %v2202 = vpop.f32.mrf.mxu0
        %v2203 = vadd.f32 %v2113, %v2202
        %v2204 = vpop.f32.mrf.mxu0
        %v2205 = vpop.f32.mrf.mxu0
        %v2206 = vadd.f32 %v2113, %v2205
        %v2207 = vpop.f32.mrf.mxu0
        %2208 = vmatprep.mubr.bf16.mxu0 0
        %2209 = vmatmul.mubr.bf16.gmra.mxu0 %v2138
        %v2210 = vpop.f32.mrf.mxu0
        %v2211 = vadd.f32 %v2113, %v2210
        %v2212 = vpop.f32.mrf.mxu0
        %v2213 = vpop.f32.mrf.mxu0
        %v2214 = vadd.f32 %v2113, %v2213
        %v2215 = vpop.f32.mrf.mxu0
        %2216 = vmatprep.mubr.bf16.mxu0 0
        %2217 = vmatmul.mubr.bf16.gmra.mxu0 %v2141
        %v2218 = vpop.f32.mrf.mxu0
        %v2219 = vadd.f32 %v2113, %v2218
        %v2220 = vpop.f32.mrf.mxu0
        %v2221 = vpop.f32.mrf.mxu0
        %v2222 = vadd.f32 %v2113, %v2221
        %v2223 = vpop.f32.mrf.mxu0
        %2224 = vmatprep.mubr.bf16.mxu0 0
        %2225 = vmatmul.mubr.bf16.gmra.mxu0 %v2144
        %v2226 = vpop.f32.mrf.mxu0
        %v2227 = vadd.f32 %v2113, %v2226
        %v2228 = vpop.f32.mrf.mxu0
        %v2229 = vpop.f32.mrf.mxu0
        %v2230 = vadd.f32 %v2113, %v2229
        %v2231 = vpop.f32.mrf.mxu0
        %2232 = vmatprep.mubr.bf16.mxu0 0
        %2233 = vmatmul.mubr.bf16.gmra.mxu0 %v2147
        %v2234 = vpop.f32.mrf.mxu0
        %v2235 = vadd.f32 %v2113, %v2234
        %v2236 = vpop.f32.mrf.mxu0
        %v2237 = vpop.f32.mrf.mxu0
        %v2238 = vadd.f32 %v2113, %v2237
        %v2239 = vpop.f32.mrf.mxu0
        %2240 = vmatprep.mubr.bf16.mxu0 0
        %2241 = vmatmul.mubr.bf16.gmra.mxu0 %v2150
        %v2242 = vpop.f32.mrf.mxu0
        %v2243 = vadd.f32 %v2113, %v2242
        %v2244 = vpop.f32.mrf.mxu0
        %v2245 = vpop.f32.mrf.mxu0
        %v2246 = vadd.f32 %v2113, %v2245
        %v2247 = vpop.f32.mrf.mxu0
        %2248 = vdwg.mxu0
        %v2249 = vmax.f32 %v2187, 0.0
        %v2250 = vmax.f32 %v2190, 0.0
        %v2251 = vmax.f32 %v2195, 0.0
        %v2252 = vmax.f32 %v2198, 0.0
        %v2253 = vmax.f32 %v2203, 0.0
        %v2254 = vmax.f32 %v2206, 0.0
        %v2255 = vmax.f32 %v2211, 0.0
        %v2256 = vmax.f32 %v2214, 0.0
        %v2257 = vmax.f32 %v2219, 0.0
        %v2258 = vmax.f32 %v2222, 0.0
        %v2259 = vmax.f32 %v2227, 0.0
        %v2260 = vmax.f32 %v2230, 0.0
        %v2261 = vmax.f32 %v2235, 0.0
        %v2262 = vmax.f32 %v2238, 0.0
        %v2263 = vmax.f32 %v2243, 0.0
        %v2264 = vmax.f32 %v2246, 0.0
        %vm2265 = vcmp.ne.f32.partialorder %v2187, %v2187
        %vm2266 = vcmp.ne.f32.partialorder %v2190, %v2190
        %vm2267 = vcmp.ne.f32.partialorder %v2195, %v2195
        %vm2268 = vcmp.ne.f32.partialorder %v2198, %v2198
        %vm2269 = vcmp.ne.f32.partialorder %v2203, %v2203
        %vm2270 = vcmp.ne.f32.partialorder %v2206, %v2206
        %vm2271 = vcmp.ne.f32.partialorder %v2211, %v2211
        %vm2272 = vcmp.ne.f32.partialorder %v2214, %v2214
        %vm2273 = vcmp.ne.f32.partialorder %v2219, %v2219
        %vm2274 = vcmp.ne.f32.partialorder %v2222, %v2222
        %vm2275 = vcmp.ne.f32.partialorder %v2227, %v2227
        %vm2276 = vcmp.ne.f32.partialorder %v2230, %v2230
        %vm2277 = vcmp.ne.f32.partialorder %v2235, %v2235
        %vm2278 = vcmp.ne.f32.partialorder %v2238, %v2238
        %vm2279 = vcmp.ne.f32.partialorder %v2243, %v2243
        %vm2280 = vcmp.ne.f32.partialorder %v2246, %v2246
        %v2281 = vadd.f32 %v2187, 0.0
        %v2282 = vadd.f32 %v2190, 0.0
        %v2283 = vadd.f32 %v2195, 0.0
        %v2284 = vadd.f32 %v2198, 0.0
        %v2285 = vadd.f32 %v2203, 0.0
        %v2286 = vadd.f32 %v2206, 0.0
        %v2287 = vadd.f32 %v2211, 0.0
        %v2288 = vadd.f32 %v2214, 0.0
        %v2289 = vadd.f32 %v2219, 0.0
        %v2290 = vadd.f32 %v2222, 0.0
        %v2291 = vadd.f32 %v2227, 0.0
        %v2292 = vadd.f32 %v2230, 0.0
        %v2293 = vadd.f32 %v2235, 0.0
        %v2294 = vadd.f32 %v2238, 0.0
        %v2295 = vadd.f32 %v2243, 0.0
        %v2296 = vadd.f32 %v2246, 0.0
        %v2297 = vand.u32 2147483647, %v2187
        %v2298 = vand.u32 2147483647, %v2190
        %v2299 = vand.u32 2147483647, %v2195
        %v2300 = vand.u32 2147483647, %v2198
        %v2301 = vand.u32 2147483647, %v2203
        %v2302 = vand.u32 2147483647, %v2206
        %v2303 = vand.u32 2147483647, %v2211
        %v2304 = vand.u32 2147483647, %v2214
        %v2305 = vand.u32 2147483647, %v2219
        %v2306 = vand.u32 2147483647, %v2222
        %v2307 = vand.u32 2147483647, %v2227
        %v2308 = vand.u32 2147483647, %v2230
        %v2309 = vand.u32 2147483647, %v2235
        %v2310 = vand.u32 2147483647, %v2238
        %v2311 = vand.u32 2147483647, %v2243
        %v2312 = vand.u32 2147483647, %v2246
        %v2313 = vsub.f32 0.0, %v2297
        %v2314 = vsub.f32 0.0, %v2298
        %v2315 = vsub.f32 0.0, %v2299
        %v2316 = vsub.f32 0.0, %v2300
        %v2317 = vsub.f32 0.0, %v2301
        %v2318 = vsub.f32 0.0, %v2302
        %v2319 = vsub.f32 0.0, %v2303
        %v2320 = vsub.f32 0.0, %v2304
        %v2321 = vsub.f32 0.0, %v2305
        %v2322 = vsub.f32 0.0, %v2306
        %v2323 = vsub.f32 0.0, %v2307
        %v2324 = vsub.f32 0.0, %v2308
        %v2325 = vsub.f32 0.0, %v2309
        %v2326 = vsub.f32 0.0, %v2310
        %v2327 = vsub.f32 0.0, %v2311
        %v2328 = vsub.f32 0.0, %v2312
        %v2329 = vmul.f32 %v2313, 1.442695
        %v2330 = vpow.pop %v2329
        %v2331 = vmul.f32 %v2314, 1.442695
        %v2332 = vpow.pop %v2331
        %v2333 = vmul.f32 %v2315, 1.442695
        %v2334 = vpow.pop %v2333
        %v2335 = vmul.f32 %v2316, 1.442695
        %v2336 = vpow.pop %v2335
        %v2337 = vmul.f32 %v2317, 1.442695
        %v2338 = vpow.pop %v2337
        %v2339 = vmul.f32 %v2318, 1.442695
        %v2340 = vpow.pop %v2339
        %v2341 = vmul.f32 %v2319, 1.442695
        %v2342 = vpow.pop %v2341
        %v2343 = vmul.f32 %v2320, 1.442695
        %v2344 = vpow.pop %v2343
        %v2345 = vmul.f32 %v2321, 1.442695
        %v2346 = vpow.pop %v2345
        %v2347 = vmul.f32 %v2322, 1.442695
        %v2348 = vpow.pop %v2347
        %v2349 = vmul.f32 %v2323, 1.442695
        %v2350 = vpow.pop %v2349
        %v2351 = vmul.f32 %v2324, 1.442695
        %v2352 = vpow.pop %v2351
        %v2353 = vmul.f32 %v2325, 1.442695
        %v2354 = vpow.pop %v2353
        %v2355 = vmul.f32 %v2326, 1.442695
        %v2356 = vpow.pop %v2355
        %v2357 = vmul.f32 %v2327, 1.442695
        %v2358 = vpow.pop %v2357
        %v2359 = vmul.f32 %v2328, 1.442695
        %v2360 = vpow.pop %v2359
        %v2361 = vadd.f32 %v2330, 1.0
        %v2362 = vlog2.pop %v2361
        %v2363 = vmul.f32 %v2362, 0.6931472
        %v2364 = vmul.f32 -0.5, %v2330
        %v2365 = vadd.f32 %v2364, 1.0
        %v2366 = vmul.f32 %v2365, %v2330
        %v2367 = vand.u32 2147483647, %v2330
        %vm2368 = vcmp.lt.f32.partialorder %v2367, 0.0004427343
        %v2369 = vsel %vm2368, %v2366, %v2363
        %v2370 = vadd.f32 %v2332, 1.0
        %v2371 = vlog2.pop %v2370
        %v2372 = vmul.f32 %v2371, 0.6931472
        %v2373 = vmul.f32 -0.5, %v2332
        %v2374 = vadd.f32 %v2373, 1.0
        %v2375 = vmul.f32 %v2374, %v2332
        %v2376 = vand.u32 2147483647, %v2332
        %vm2377 = vcmp.lt.f32.partialorder %v2376, 0.0004427343
        %v2378 = vsel %vm2377, %v2375, %v2372
        %v2379 = vadd.f32 %v2334, 1.0
        %v2380 = vlog2.pop %v2379
        %v2381 = vmul.f32 %v2380, 0.6931472
        %v2382 = vmul.f32 -0.5, %v2334
        %v2383 = vadd.f32 %v2382, 1.0
        %v2384 = vmul.f32 %v2383, %v2334
        %v2385 = vand.u32 2147483647, %v2334
        %vm2386 = vcmp.lt.f32.partialorder %v2385, 0.0004427343
        %v2387 = vsel %vm2386, %v2384, %v2381
        %v2388 = vadd.f32 %v2336, 1.0
        %v2389 = vlog2.pop %v2388
        %v2390 = vmul.f32 %v2389, 0.6931472
        %v2391 = vmul.f32 -0.5, %v2336
        %v2392 = vadd.f32 %v2391, 1.0
        %v2393 = vmul.f32 %v2392, %v2336
        %v2394 = vand.u32 2147483647, %v2336
        %vm2395 = vcmp.lt.f32.partialorder %v2394, 0.0004427343
        %v2396 = vsel %vm2395, %v2393, %v2390
        %v2397 = vadd.f32 %v2338, 1.0
        %v2398 = vlog2.pop %v2397
        %v2399 = vmul.f32 %v2398, 0.6931472
        %v2400 = vmul.f32 -0.5, %v2338
        %v2401 = vadd.f32 %v2400, 1.0
        %v2402 = vmul.f32 %v2401, %v2338
        %v2403 = vand.u32 2147483647, %v2338
        %vm2404 = vcmp.lt.f32.partialorder %v2403, 0.0004427343
        %v2405 = vsel %vm2404, %v2402, %v2399
        %v2406 = vadd.f32 %v2340, 1.0
        %v2407 = vlog2.pop %v2406
        %v2408 = vmul.f32 %v2407, 0.6931472
        %v2409 = vmul.f32 -0.5, %v2340
        %v2410 = vadd.f32 %v2409, 1.0
        %v2411 = vmul.f32 %v2410, %v2340
        %v2412 = vand.u32 2147483647, %v2340
        %vm2413 = vcmp.lt.f32.partialorder %v2412, 0.0004427343
        %v2414 = vsel %vm2413, %v2411, %v2408
        %v2415 = vadd.f32 %v2342, 1.0
        %v2416 = vlog2.pop %v2415
        %v2417 = vmul.f32 %v2416, 0.6931472
        %v2418 = vmul.f32 -0.5, %v2342
        %v2419 = vadd.f32 %v2418, 1.0
        %v2420 = vmul.f32 %v2419, %v2342
        %v2421 = vand.u32 2147483647, %v2342
        %vm2422 = vcmp.lt.f32.partialorder %v2421, 0.0004427343
        %v2423 = vsel %vm2422, %v2420, %v2417
        %v2424 = vadd.f32 %v2344, 1.0
        %v2425 = vlog2.pop %v2424
        %v2426 = vmul.f32 %v2425, 0.6931472
        %v2427 = vmul.f32 -0.5, %v2344
        %v2428 = vadd.f32 %v2427, 1.0
        %v2429 = vmul.f32 %v2428, %v2344
        %v2430 = vand.u32 2147483647, %v2344
        %vm2431 = vcmp.lt.f32.partialorder %v2430, 0.0004427343
        %v2432 = vsel %vm2431, %v2429, %v2426
        %v2433 = vadd.f32 %v2346, 1.0
        %v2434 = vlog2.pop %v2433
        %v2435 = vmul.f32 %v2434, 0.6931472
        %v2436 = vmul.f32 -0.5, %v2346
        %v2437 = vadd.f32 %v2436, 1.0
        %v2438 = vmul.f32 %v2437, %v2346
        %v2439 = vand.u32 2147483647, %v2346
        %vm2440 = vcmp.lt.f32.partialorder %v2439, 0.0004427343
        %v2441 = vsel %vm2440, %v2438, %v2435
        %v2442 = vadd.f32 %v2348, 1.0
        %v2443 = vlog2.pop %v2442
        %v2444 = vmul.f32 %v2443, 0.6931472
        %v2445 = vmul.f32 -0.5, %v2348
        %v2446 = vadd.f32 %v2445, 1.0
        %v2447 = vmul.f32 %v2446, %v2348
        %v2448 = vand.u32 2147483647, %v2348
        %vm2449 = vcmp.lt.f32.partialorder %v2448, 0.0004427343
        %v2450 = vsel %vm2449, %v2447, %v2444
        %v2451 = vadd.f32 %v2350, 1.0
        %v2452 = vlog2.pop %v2451
        %v2453 = vmul.f32 %v2452, 0.6931472
        %v2454 = vmul.f32 -0.5, %v2350
        %v2455 = vadd.f32 %v2454, 1.0
        %v2456 = vmul.f32 %v2455, %v2350
        %v2457 = vand.u32 2147483647, %v2350
        %vm2458 = vcmp.lt.f32.partialorder %v2457, 0.0004427343
        %v2459 = vsel %vm2458, %v2456, %v2453
        %v2460 = vadd.f32 %v2352, 1.0
        %v2461 = vlog2.pop %v2460
        %v2462 = vmul.f32 %v2461, 0.6931472
        %v2463 = vmul.f32 -0.5, %v2352
        %v2464 = vadd.f32 %v2463, 1.0
        %v2465 = vmul.f32 %v2464, %v2352
        %v2466 = vand.u32 2147483647, %v2352
        %vm2467 = vcmp.lt.f32.partialorder %v2466, 0.0004427343
        %v2468 = vsel %vm2467, %v2465, %v2462
        %v2469 = vadd.f32 %v2354, 1.0
        %v2470 = vlog2.pop %v2469
        %v2471 = vmul.f32 %v2470, 0.6931472
        %v2472 = vmul.f32 -0.5, %v2354
        %v2473 = vadd.f32 %v2472, 1.0
        %v2474 = vmul.f32 %v2473, %v2354
        %v2475 = vand.u32 2147483647, %v2354
        %vm2476 = vcmp.lt.f32.partialorder %v2475, 0.0004427343
        %v2477 = vsel %vm2476, %v2474, %v2471
        %v2478 = vadd.f32 %v2356, 1.0
        %v2479 = vlog2.pop %v2478
        %v2480 = vmul.f32 %v2479, 0.6931472
        %v2481 = vmul.f32 -0.5, %v2356
        %v2482 = vadd.f32 %v2481, 1.0
        %v2483 = vmul.f32 %v2482, %v2356
        %v2484 = vand.u32 2147483647, %v2356
        %vm2485 = vcmp.lt.f32.partialorder %v2484, 0.0004427343
        %v2486 = vsel %vm2485, %v2483, %v2480
        %v2487 = vadd.f32 %v2358, 1.0
        %v2488 = vlog2.pop %v2487
        %v2489 = vmul.f32 %v2488, 0.6931472
        %v2490 = vmul.f32 -0.5, %v2358
        %v2491 = vadd.f32 %v2490, 1.0
        %v2492 = vmul.f32 %v2491, %v2358
        %v2493 = vand.u32 2147483647, %v2358
        %vm2494 = vcmp.lt.f32.partialorder %v2493, 0.0004427343
        %v2495 = vsel %vm2494, %v2492, %v2489
        %v2496 = vadd.f32 %v2360, 1.0
        %v2497 = vlog2.pop %v2496
        %v2498 = vmul.f32 %v2497, 0.6931472
        %v2499 = vmul.f32 -0.5, %v2360
        %v2500 = vadd.f32 %v2499, 1.0
        %v2501 = vmul.f32 %v2500, %v2360
        %v2502 = vand.u32 2147483647, %v2360
        %vm2503 = vcmp.lt.f32.partialorder %v2502, 0.0004427343
        %v2504 = vsel %vm2503, %v2501, %v2498
        %v2505 = vadd.f32 %v2249, %v2369
        %v2506 = vadd.f32 %v2250, %v2378
        %v2507 = vadd.f32 %v2251, %v2387
        %v2508 = vadd.f32 %v2252, %v2396
        %v2509 = vadd.f32 %v2253, %v2405
        %v2510 = vadd.f32 %v2254, %v2414
        %v2511 = vadd.f32 %v2255, %v2423
        %v2512 = vadd.f32 %v2256, %v2432
        %v2513 = vadd.f32 %v2257, %v2441
        %v2514 = vadd.f32 %v2258, %v2450
        %v2515 = vadd.f32 %v2259, %v2459
        %v2516 = vadd.f32 %v2260, %v2468
        %v2517 = vadd.f32 %v2261, %v2477
        %v2518 = vadd.f32 %v2262, %v2486
        %v2519 = vadd.f32 %v2263, %v2495
        %v2520 = vadd.f32 %v2264, %v2504
        %v2521 = vsel %vm2265, %v2281, %v2505
        %v2522 = vsel %vm2266, %v2282, %v2506
        %v2523 = vsel %vm2267, %v2283, %v2507
        %v2524 = vsel %vm2268, %v2284, %v2508
        %v2525 = vsel %vm2269, %v2285, %v2509
        %v2526 = vsel %vm2270, %v2286, %v2510
        %v2527 = vsel %vm2271, %v2287, %v2511
        %v2528 = vsel %vm2272, %v2288, %v2512
        %v2529 = vsel %vm2273, %v2289, %v2513
        %v2530 = vsel %vm2274, %v2290, %v2514
        %v2531 = vsel %vm2275, %v2291, %v2515
        %v2532 = vsel %vm2276, %v2292, %v2516
        %v2533 = vsel %vm2277, %v2293, %v2517
        %v2534 = vsel %vm2278, %v2294, %v2518
        %v2535 = vsel %vm2279, %v2295, %v2519
        %v2536 = vsel %vm2280, %v2296, %v2520
        %v2537 = vpack.c.bf16 %v2522, %v2521
        %v2538 = vpack.c.bf16 %v2524, %v2523
        %v2539 = vpack.c.bf16 %v2526, %v2525
        %v2540 = vpack.c.bf16 %v2528, %v2527
        %v2541 = vpack.c.bf16 %v2530, %v2529
        %v2542 = vpack.c.bf16 %v2532, %v2531
        %v2543 = vpack.c.bf16 %v2534, %v2533
        %v2544 = vpack.c.bf16 %v2536, %v2535
        %v2545 = vld [vmem:[#allocation8] sm:$0xf]
        %v2546 = vld [vmem:[#allocation8 + $0x4] sm:$0xf]
        %v2547 = vld [vmem:[#allocation8 + $0x8] sm:$0xf]
        %v2548 = vld [vmem:[#allocation8 + $0xc] sm:$0xf]
        %v2549 = vld [vmem:[#allocation8 + $0x10] sm:$0xf]
        %v2550 = vld [vmem:[#allocation8 + $0x14] sm:$0xf]
        %v2551 = vld [vmem:[#allocation8 + $0x18] sm:$0xf]
        %v2552 = vld [vmem:[#allocation8 + $0x1c] sm:$0xf]
        %v2553 = vld [vmem:[%s11] sm:$0x1]
        %v2555 = vlaneseq
        %v2556 = vshrl.u32 %v2555, 7
        %v2557 = vsub.s32 0, %v2556
        %v2558 = vrot.slane %v2553, %v2557
        %v2568 = vunpack.c.l.b16 %v2545
        %v2569 = vunpack.c.l.b16 %v2546
        %v2570 = vunpack.c.l.b16 %v2547
        %v2571 = vunpack.c.l.b16 %v2548
        %v2572 = vunpack.c.l.b16 %v2549
        %v2573 = vunpack.c.l.b16 %v2550
        %v2574 = vunpack.c.l.b16 %v2551
        %v2575 = vunpack.c.l.b16 %v2552
        %v2576 = vpack.c.b16 %v2569, %v2568
        %v2577 = vpack.c.b16 %v2571, %v2570
        %v2578 = vpack.c.b16 %v2573, %v2572
        %v2579 = vpack.c.b16 %v2575, %v2574
        %v2585 = vsel %vm1446, %v2537, 0
        %v2588 = vsel %vm1446, %v2538, 0
        %v2591 = vsel %vm1446, %v2539, 0
        %v2594 = vsel %vm1446, %v2540, 0
        %v2597 = vsel %vm1446, %v2541, 0
        %v2600 = vsel %vm1446, %v2542, 0
        %v2603 = vsel %vm1446, %v2543, 0
        %v2606 = vsel %vm1446, %v2544, 0
        %2608 = vmatprep.subr.bf16.mxu0 0
        %2609 = vmatpush1.bf16.msra.mxu0 0
        %2610 = vmatprep.subr.bf16.mxu0 0
        %2611 = vmatpush1.bf16.msra.mxu0 0
        %2612 = vmatprep.subr.bf16.mxu0 0
        %2613 = vmatpush1.bf16.msra.mxu0 0
        %2614 = vmatprep.subr.bf16.mxu0 0
        %2615 = vmatpush1.bf16.msra.mxu0 0
        %2616 = vmatprep.subr.bf16.mxu0 0
        %2617 = vmatpush1.bf16.msra.mxu0 %v2579
        %2618 = vmatprep.subr.bf16.mxu0 0
        %2619 = vmatpush1.bf16.msra.mxu0 %v2578
        %2620 = vmatprep.subr.bf16.mxu0 0
        %2621 = vmatpush1.bf16.msra.mxu0 %v2577
        %2622 = vmatprep.subr.bf16.mxu0 0
        %2623 = vmatpush1.bf16.msra.mxu0 %v2576
        %2624 = vmatprep.subr.bf16.mxu0 0
        %2625 = vmatpush2.bf16.msra.mxu0 0
        %2626 = vmatprep.subr.bf16.mxu0 0
        %2627 = vmatpush2.bf16.msra.mxu0 0
        %2628 = vmatprep.subr.bf16.mxu0 0
        %2629 = vmatpush2.bf16.msra.mxu0 0
        %2630 = vmatprep.subr.bf16.mxu0 0
        %2631 = vmatpush2.bf16.msra.mxu0 0
        %2632 = vmatprep.subr.bf16.mxu0 0
        %2633 = vmatpush2.bf16.msra.mxu0 0
        %2634 = vmatprep.subr.bf16.mxu0 0
        %2635 = vmatpush2.bf16.msra.mxu0 0
        %2636 = vmatprep.subr.bf16.mxu0 0
        %2637 = vmatpush2.bf16.msra.mxu0 0
        %2638 = vmatprep.subr.bf16.mxu0 0
        %2639 = vmatpush2.bf16.msra.mxu0 0
        %2640 = vmatprep.mubr.bf16.mxu0 0
        %2641 = vmatmul.mubr.bf16.gmra.mxu0 %v2585
        %v2642 = vpop.f32.mrf.mxu0
        %v2643 = vadd.f32 %v2558, %v2642
        %v2644 = vpop.f32.mrf.mxu0
        %v2645 = vpop.f32.mrf.mxu0
        %v2646 = vadd.f32 %v2558, %v2645
        %v2647 = vpop.f32.mrf.mxu0
        %2648 = vmatprep.mubr.bf16.mxu0 0
        %2649 = vmatmul.mubr.bf16.gmra.mxu0 %v2588
        %v2650 = vpop.f32.mrf.mxu0
        %v2651 = vadd.f32 %v2558, %v2650
        %v2652 = vpop.f32.mrf.mxu0
        %v2653 = vpop.f32.mrf.mxu0
        %v2654 = vadd.f32 %v2558, %v2653
        %v2655 = vpop.f32.mrf.mxu0
        %2656 = vmatprep.mubr.bf16.mxu0 0
        %2657 = vmatmul.mubr.bf16.gmra.mxu0 %v2591
        %v2658 = vpop.f32.mrf.mxu0
        %v2659 = vadd.f32 %v2558, %v2658
        %v2660 = vpop.f32.mrf.mxu0
        %v2661 = vpop.f32.mrf.mxu0
        %v2662 = vadd.f32 %v2558, %v2661
        %v2663 = vpop.f32.mrf.mxu0
        %2664 = vmatprep.mubr.bf16.mxu0 0
        %2665 = vmatmul.mubr.bf16.gmra.mxu0 %v2594
        %v2666 = vpop.f32.mrf.mxu0
        %v2667 = vadd.f32 %v2558, %v2666
        %v2668 = vpop.f32.mrf.mxu0
        %v2669 = vpop.f32.mrf.mxu0
        %v2670 = vadd.f32 %v2558, %v2669
        %v2671 = vpop.f32.mrf.mxu0
        %2672 = vmatprep.mubr.bf16.mxu0 0
        %2673 = vmatmul.mubr.bf16.gmra.mxu0 %v2597
        %v2674 = vpop.f32.mrf.mxu0
        %v2675 = vadd.f32 %v2558, %v2674
        %v2676 = vpop.f32.mrf.mxu0
        %v2677 = vpop.f32.mrf.mxu0
        %v2678 = vadd.f32 %v2558, %v2677
        %v2679 = vpop.f32.mrf.mxu0
        %2680 = vmatprep.mubr.bf16.mxu0 0
        %2681 = vmatmul.mubr.bf16.gmra.mxu0 %v2600
        %v2682 = vpop.f32.mrf.mxu0
        %v2683 = vadd.f32 %v2558, %v2682
        %v2684 = vpop.f32.mrf.mxu0
        %v2685 = vpop.f32.mrf.mxu0
        %v2686 = vadd.f32 %v2558, %v2685
        %v2687 = vpop.f32.mrf.mxu0
        %2688 = vmatprep.mubr.bf16.mxu0 0
        %2689 = vmatmul.mubr.bf16.gmra.mxu0 %v2603
        %v2690 = vpop.f32.mrf.mxu0
        %v2691 = vadd.f32 %v2558, %v2690
        %v2692 = vpop.f32.mrf.mxu0
        %v2693 = vpop.f32.mrf.mxu0
        %v2694 = vadd.f32 %v2558, %v2693
        %v2695 = vpop.f32.mrf.mxu0
        %2696 = vmatprep.mubr.bf16.mxu0 0
        %2697 = vmatmul.mubr.bf16.gmra.mxu0 %v2606
        %v2698 = vpop.f32.mrf.mxu0
        %v2699 = vadd.f32 %v2558, %v2698
        %v2700 = vpop.f32.mrf.mxu0
        %v2701 = vpop.f32.mrf.mxu0
        %v2702 = vadd.f32 %v2558, %v2701
        %v2703 = vpop.f32.mrf.mxu0
        %2704 = vdwg.mxu0
        %v2705 = vmax.f32 %v2643, 0.0
        %v2706 = vmax.f32 %v2646, 0.0
        %v2707 = vmax.f32 %v2651, 0.0
        %v2708 = vmax.f32 %v2654, 0.0
        %v2709 = vmax.f32 %v2659, 0.0
        %v2710 = vmax.f32 %v2662, 0.0
        %v2711 = vmax.f32 %v2667, 0.0
        %v2712 = vmax.f32 %v2670, 0.0
        %v2713 = vmax.f32 %v2675, 0.0
        %v2714 = vmax.f32 %v2678, 0.0
        %v2715 = vmax.f32 %v2683, 0.0
        %v2716 = vmax.f32 %v2686, 0.0
        %v2717 = vmax.f32 %v2691, 0.0
        %v2718 = vmax.f32 %v2694, 0.0
        %v2719 = vmax.f32 %v2699, 0.0
        %v2720 = vmax.f32 %v2702, 0.0
        %vm2721 = vcmp.ne.f32.partialorder %v2643, %v2643
        %vm2722 = vcmp.ne.f32.partialorder %v2646, %v2646
        %vm2723 = vcmp.ne.f32.partialorder %v2651, %v2651
        %vm2724 = vcmp.ne.f32.partialorder %v2654, %v2654
        %vm2725 = vcmp.ne.f32.partialorder %v2659, %v2659
        %vm2726 = vcmp.ne.f32.partialorder %v2662, %v2662
        %vm2727 = vcmp.ne.f32.partialorder %v2667, %v2667
        %vm2728 = vcmp.ne.f32.partialorder %v2670, %v2670
        %vm2729 = vcmp.ne.f32.partialorder %v2675, %v2675
        %vm2730 = vcmp.ne.f32.partialorder %v2678, %v2678
        %vm2731 = vcmp.ne.f32.partialorder %v2683, %v2683
        %vm2732 = vcmp.ne.f32.partialorder %v2686, %v2686
        %vm2733 = vcmp.ne.f32.partialorder %v2691, %v2691
        %vm2734 = vcmp.ne.f32.partialorder %v2694, %v2694
        %vm2735 = vcmp.ne.f32.partialorder %v2699, %v2699
        %vm2736 = vcmp.ne.f32.partialorder %v2702, %v2702
        %v2737 = vadd.f32 %v2643, 0.0
        %v2738 = vadd.f32 %v2646, 0.0
        %v2739 = vadd.f32 %v2651, 0.0
        %v2740 = vadd.f32 %v2654, 0.0
        %v2741 = vadd.f32 %v2659, 0.0
        %v2742 = vadd.f32 %v2662, 0.0
        %v2743 = vadd.f32 %v2667, 0.0
        %v2744 = vadd.f32 %v2670, 0.0
        %v2745 = vadd.f32 %v2675, 0.0
        %v2746 = vadd.f32 %v2678, 0.0
        %v2747 = vadd.f32 %v2683, 0.0
        %v2748 = vadd.f32 %v2686, 0.0
        %v2749 = vadd.f32 %v2691, 0.0
        %v2750 = vadd.f32 %v2694, 0.0
        %v2751 = vadd.f32 %v2699, 0.0
        %v2752 = vadd.f32 %v2702, 0.0
        %v2753 = vand.u32 2147483647, %v2643
        %v2754 = vand.u32 2147483647, %v2646
        %v2755 = vand.u32 2147483647, %v2651
        %v2756 = vand.u32 2147483647, %v2654
        %v2757 = vand.u32 2147483647, %v2659
        %v2758 = vand.u32 2147483647, %v2662
        %v2759 = vand.u32 2147483647, %v2667
        %v2760 = vand.u32 2147483647, %v2670
        %v2761 = vand.u32 2147483647, %v2675
        %v2762 = vand.u32 2147483647, %v2678
        %v2763 = vand.u32 2147483647, %v2683
        %v2764 = vand.u32 2147483647, %v2686
        %v2765 = vand.u32 2147483647, %v2691
        %v2766 = vand.u32 2147483647, %v2694
        %v2767 = vand.u32 2147483647, %v2699
        %v2768 = vand.u32 2147483647, %v2702
        %v2769 = vsub.f32 0.0, %v2753
        %v2770 = vsub.f32 0.0, %v2754
        %v2771 = vsub.f32 0.0, %v2755
        %v2772 = vsub.f32 0.0, %v2756
        %v2773 = vsub.f32 0.0, %v2757
        %v2774 = vsub.f32 0.0, %v2758
        %v2775 = vsub.f32 0.0, %v2759
        %v2776 = vsub.f32 0.0, %v2760
        %v2777 = vsub.f32 0.0, %v2761
        %v2778 = vsub.f32 0.0, %v2762
        %v2779 = vsub.f32 0.0, %v2763
        %v2780 = vsub.f32 0.0, %v2764
        %v2781 = vsub.f32 0.0, %v2765
        %v2782 = vsub.f32 0.0, %v2766
        %v2783 = vsub.f32 0.0, %v2767
        %v2784 = vsub.f32 0.0, %v2768
        %v2785 = vmul.f32 %v2769, 1.442695
        %v2786 = vpow.pop %v2785
        %v2787 = vmul.f32 %v2770, 1.442695
        %v2788 = vpow.pop %v2787
        %v2789 = vmul.f32 %v2771, 1.442695
        %v2790 = vpow.pop %v2789
        %v2791 = vmul.f32 %v2772, 1.442695
        %v2792 = vpow.pop %v2791
        %v2793 = vmul.f32 %v2773, 1.442695
        %v2794 = vpow.pop %v2793
        %v2795 = vmul.f32 %v2774, 1.442695
        %v2796 = vpow.pop %v2795
        %v2797 = vmul.f32 %v2775, 1.442695
        %v2798 = vpow.pop %v2797
        %v2799 = vmul.f32 %v2776, 1.442695
        %v2800 = vpow.pop %v2799
        %v2801 = vmul.f32 %v2777, 1.442695
        %v2802 = vpow.pop %v2801
        %v2803 = vmul.f32 %v2778, 1.442695
        %v2804 = vpow.pop %v2803
        %v2805 = vmul.f32 %v2779, 1.442695
        %v2806 = vpow.pop %v2805
        %v2807 = vmul.f32 %v2780, 1.442695
        %v2808 = vpow.pop %v2807
        %v2809 = vmul.f32 %v2781, 1.442695
        %v2810 = vpow.pop %v2809
        %v2811 = vmul.f32 %v2782, 1.442695
        %v2812 = vpow.pop %v2811
        %v2813 = vmul.f32 %v2783, 1.442695
        %v2814 = vpow.pop %v2813
        %v2815 = vmul.f32 %v2784, 1.442695
        %v2816 = vpow.pop %v2815
        %v2817 = vadd.f32 %v2786, 1.0
        %v2818 = vlog2.pop %v2817
        %v2819 = vmul.f32 %v2818, 0.6931472
        %v2820 = vmul.f32 -0.5, %v2786
        %v2821 = vadd.f32 %v2820, 1.0
        %v2822 = vmul.f32 %v2821, %v2786
        %v2823 = vand.u32 2147483647, %v2786
        %vm2824 = vcmp.lt.f32.partialorder %v2823, 0.0004427343
        %v2825 = vsel %vm2824, %v2822, %v2819
        %v2826 = vadd.f32 %v2788, 1.0
        %v2827 = vlog2.pop %v2826
        %v2828 = vmul.f32 %v2827, 0.6931472
        %v2829 = vmul.f32 -0.5, %v2788
        %v2830 = vadd.f32 %v2829, 1.0
        %v2831 = vmul.f32 %v2830, %v2788
        %v2832 = vand.u32 2147483647, %v2788
        %vm2833 = vcmp.lt.f32.partialorder %v2832, 0.0004427343
        %v2834 = vsel %vm2833, %v2831, %v2828
        %v2835 = vadd.f32 %v2790, 1.0
        %v2836 = vlog2.pop %v2835
        %v2837 = vmul.f32 %v2836, 0.6931472
        %v2838 = vmul.f32 -0.5, %v2790
        %v2839 = vadd.f32 %v2838, 1.0
        %v2840 = vmul.f32 %v2839, %v2790
        %v2841 = vand.u32 2147483647, %v2790
        %vm2842 = vcmp.lt.f32.partialorder %v2841, 0.0004427343
        %v2843 = vsel %vm2842, %v2840, %v2837
        %v2844 = vadd.f32 %v2792, 1.0
        %v2845 = vlog2.pop %v2844
        %v2846 = vmul.f32 %v2845, 0.6931472
        %v2847 = vmul.f32 -0.5, %v2792
        %v2848 = vadd.f32 %v2847, 1.0
        %v2849 = vmul.f32 %v2848, %v2792
        %v2850 = vand.u32 2147483647, %v2792
        %vm2851 = vcmp.lt.f32.partialorder %v2850, 0.0004427343
        %v2852 = vsel %vm2851, %v2849, %v2846
        %v2853 = vadd.f32 %v2794, 1.0
        %v2854 = vlog2.pop %v2853
        %v2855 = vmul.f32 %v2854, 0.6931472
        %v2856 = vmul.f32 -0.5, %v2794
        %v2857 = vadd.f32 %v2856, 1.0
        %v2858 = vmul.f32 %v2857, %v2794
        %v2859 = vand.u32 2147483647, %v2794
        %vm2860 = vcmp.lt.f32.partialorder %v2859, 0.0004427343
        %v2861 = vsel %vm2860, %v2858, %v2855
        %v2862 = vadd.f32 %v2796, 1.0
        %v2863 = vlog2.pop %v2862
        %v2864 = vmul.f32 %v2863, 0.6931472
        %v2865 = vmul.f32 -0.5, %v2796
        %v2866 = vadd.f32 %v2865, 1.0
        %v2867 = vmul.f32 %v2866, %v2796
        %v2868 = vand.u32 2147483647, %v2796
        %vm2869 = vcmp.lt.f32.partialorder %v2868, 0.0004427343
        %v2870 = vsel %vm2869, %v2867, %v2864
        %v2871 = vadd.f32 %v2798, 1.0
        %v2872 = vlog2.pop %v2871
        %v2873 = vmul.f32 %v2872, 0.6931472
        %v2874 = vmul.f32 -0.5, %v2798
        %v2875 = vadd.f32 %v2874, 1.0
        %v2876 = vmul.f32 %v2875, %v2798
        %v2877 = vand.u32 2147483647, %v2798
        %vm2878 = vcmp.lt.f32.partialorder %v2877, 0.0004427343
        %v2879 = vsel %vm2878, %v2876, %v2873
        %v2880 = vadd.f32 %v2800, 1.0
        %v2881 = vlog2.pop %v2880
        %v2882 = vmul.f32 %v2881, 0.6931472
        %v2883 = vmul.f32 -0.5, %v2800
        %v2884 = vadd.f32 %v2883, 1.0
        %v2885 = vmul.f32 %v2884, %v2800
        %v2886 = vand.u32 2147483647, %v2800
        %vm2887 = vcmp.lt.f32.partialorder %v2886, 0.0004427343
        %v2888 = vsel %vm2887, %v2885, %v2882
        %v2889 = vadd.f32 %v2802, 1.0
        %v2890 = vlog2.pop %v2889
        %v2891 = vmul.f32 %v2890, 0.6931472
        %v2892 = vmul.f32 -0.5, %v2802
        %v2893 = vadd.f32 %v2892, 1.0
        %v2894 = vmul.f32 %v2893, %v2802
        %v2895 = vand.u32 2147483647, %v2802
        %vm2896 = vcmp.lt.f32.partialorder %v2895, 0.0004427343
        %v2897 = vsel %vm2896, %v2894, %v2891
        %v2898 = vadd.f32 %v2804, 1.0
        %v2899 = vlog2.pop %v2898
        %v2900 = vmul.f32 %v2899, 0.6931472
        %v2901 = vmul.f32 -0.5, %v2804
        %v2902 = vadd.f32 %v2901, 1.0
        %v2903 = vmul.f32 %v2902, %v2804
        %v2904 = vand.u32 2147483647, %v2804
        %vm2905 = vcmp.lt.f32.partialorder %v2904, 0.0004427343
        %v2906 = vsel %vm2905, %v2903, %v2900
        %v2907 = vadd.f32 %v2806, 1.0
        %v2908 = vlog2.pop %v2907
        %v2909 = vmul.f32 %v2908, 0.6931472
        %v2910 = vmul.f32 -0.5, %v2806
        %v2911 = vadd.f32 %v2910, 1.0
        %v2912 = vmul.f32 %v2911, %v2806
        %v2913 = vand.u32 2147483647, %v2806
        %vm2914 = vcmp.lt.f32.partialorder %v2913, 0.0004427343
        %v2915 = vsel %vm2914, %v2912, %v2909
        %v2916 = vadd.f32 %v2808, 1.0
        %v2917 = vlog2.pop %v2916
        %v2918 = vmul.f32 %v2917, 0.6931472
        %v2919 = vmul.f32 -0.5, %v2808
        %v2920 = vadd.f32 %v2919, 1.0
        %v2921 = vmul.f32 %v2920, %v2808
        %v2922 = vand.u32 2147483647, %v2808
        %vm2923 = vcmp.lt.f32.partialorder %v2922, 0.0004427343
        %v2924 = vsel %vm2923, %v2921, %v2918
        %v2925 = vadd.f32 %v2810, 1.0
        %v2926 = vlog2.pop %v2925
        %v2927 = vmul.f32 %v2926, 0.6931472
        %v2928 = vmul.f32 -0.5, %v2810
        %v2929 = vadd.f32 %v2928, 1.0
        %v2930 = vmul.f32 %v2929, %v2810
        %v2931 = vand.u32 2147483647, %v2810
        %vm2932 = vcmp.lt.f32.partialorder %v2931, 0.0004427343
        %v2933 = vsel %vm2932, %v2930, %v2927
        %v2934 = vadd.f32 %v2812, 1.0
        %v2935 = vlog2.pop %v2934
        %v2936 = vmul.f32 %v2935, 0.6931472
        %v2937 = vmul.f32 -0.5, %v2812
        %v2938 = vadd.f32 %v2937, 1.0
        %v2939 = vmul.f32 %v2938, %v2812
        %v2940 = vand.u32 2147483647, %v2812
        %vm2941 = vcmp.lt.f32.partialorder %v2940, 0.0004427343
        %v2942 = vsel %vm2941, %v2939, %v2936
        %v2943 = vadd.f32 %v2814, 1.0
        %v2944 = vlog2.pop %v2943
        %v2945 = vmul.f32 %v2944, 0.6931472
        %v2946 = vmul.f32 -0.5, %v2814
        %v2947 = vadd.f32 %v2946, 1.0
        %v2948 = vmul.f32 %v2947, %v2814
        %v2949 = vand.u32 2147483647, %v2814
        %vm2950 = vcmp.lt.f32.partialorder %v2949, 0.0004427343
        %v2951 = vsel %vm2950, %v2948, %v2945
        %v2952 = vadd.f32 %v2816, 1.0
        %v2953 = vlog2.pop %v2952
        %v2954 = vmul.f32 %v2953, 0.6931472
        %v2955 = vmul.f32 -0.5, %v2816
        %v2956 = vadd.f32 %v2955, 1.0
        %v2957 = vmul.f32 %v2956, %v2816
        %v2958 = vand.u32 2147483647, %v2816
        %vm2959 = vcmp.lt.f32.partialorder %v2958, 0.0004427343
        %v2960 = vsel %vm2959, %v2957, %v2954
        %v2961 = vadd.f32 %v2705, %v2825
        %v2962 = vadd.f32 %v2706, %v2834
        %v2963 = vadd.f32 %v2707, %v2843
        %v2964 = vadd.f32 %v2708, %v2852
        %v2965 = vadd.f32 %v2709, %v2861
        %v2966 = vadd.f32 %v2710, %v2870
        %v2967 = vadd.f32 %v2711, %v2879
        %v2968 = vadd.f32 %v2712, %v2888
        %v2969 = vadd.f32 %v2713, %v2897
        %v2970 = vadd.f32 %v2714, %v2906
        %v2971 = vadd.f32 %v2715, %v2915
        %v2972 = vadd.f32 %v2716, %v2924
        %v2973 = vadd.f32 %v2717, %v2933
        %v2974 = vadd.f32 %v2718, %v2942
        %v2975 = vadd.f32 %v2719, %v2951
        %v2976 = vadd.f32 %v2720, %v2960
        %v2977 = vsel %vm2721, %v2737, %v2961
        %v2978 = vsel %vm2722, %v2738, %v2962
        %v2979 = vsel %vm2723, %v2739, %v2963
        %v2980 = vsel %vm2724, %v2740, %v2964
        %v2981 = vsel %vm2725, %v2741, %v2965
        %v2982 = vsel %vm2726, %v2742, %v2966
        %v2983 = vsel %vm2727, %v2743, %v2967
        %v2984 = vsel %vm2728, %v2744, %v2968
        %v2985 = vsel %vm2729, %v2745, %v2969
        %v2986 = vsel %vm2730, %v2746, %v2970
        %v2987 = vsel %vm2731, %v2747, %v2971
        %v2988 = vsel %vm2732, %v2748, %v2972
        %v2989 = vsel %vm2733, %v2749, %v2973
        %v2990 = vsel %vm2734, %v2750, %v2974
        %v2991 = vsel %vm2735, %v2751, %v2975
        %v2992 = vsel %vm2736, %v2752, %v2976
        %v2993 = vpack.c.bf16 %v2978, %v2977
        %v2994 = vpack.c.bf16 %v2980, %v2979
        %v2995 = vpack.c.bf16 %v2982, %v2981
        %v2996 = vpack.c.bf16 %v2984, %v2983
        %v2997 = vpack.c.bf16 %v2986, %v2985
        %v2998 = vpack.c.bf16 %v2988, %v2987
        %v2999 = vpack.c.bf16 %v2990, %v2989
        %v3000 = vpack.c.bf16 %v2992, %v2991
        %v3001 = vld [vmem:[#allocation10] sm:$0xff]
        %v3002 = vld [vmem:[#allocation10 + $0x8] sm:$0xff]
        %v3003 = vld [vmem:[#allocation10 + $0x10] sm:$0xff]
        %v3004 = vld [vmem:[#allocation10 + $0x18] sm:$0xff]
        %v3005 = vld [vmem:[#allocation10 + $0x20] sm:$0xff]
        %v3006 = vld [vmem:[#allocation10 + $0x28] sm:$0xff]
        %v3007 = vld [vmem:[#allocation10 + $0x30] sm:$0xff]
        %v3008 = vld [vmem:[#allocation10 + $0x38] sm:$0xff]
        %v3009 = vld [vmem:[#allocation10 + $0x40] sm:$0xff]
        %v3010 = vld [vmem:[#allocation10 + $0x48] sm:$0xff]
        %v3011 = vld [vmem:[#allocation10 + $0x50] sm:$0xff]
        %v3012 = vld [vmem:[#allocation10 + $0x58] sm:$0xff]
        %v3013 = vld [vmem:[#allocation10 + $0x60] sm:$0xff]
        %v3014 = vld [vmem:[#allocation10 + $0x68] sm:$0xff]
        %v3015 = vld [vmem:[#allocation10 + $0x70] sm:$0xff]
        %v3016 = vld [vmem:[#allocation10 + $0x78] sm:$0xff]
        %v3017 = vld [vmem:[%s13] sm:$0x3]
        %v3019 = vlaneseq
        %v3020 = vshrl.u32 %v3019, 7
        %v3021 = vsub.s32 0, %v3020
        %v3022 = vrot.slane %v3017, %v3021
        %v3023 = vlaneseq
        %v3024 = vshrl.u32 %v3023, 7
        %v3025 = vsub.s32 1, %v3024
        %v3026 = vrot.slane %v3017, %v3025
        %v3045 = vunpack.c.l.b16 %v3001
        %v3046 = vunpack.c.h.b16 %v3001
        %v3047 = vunpack.c.l.b16 %v3002
        %v3048 = vunpack.c.h.b16 %v3002
        %v3049 = vunpack.c.l.b16 %v3003
        %v3050 = vunpack.c.h.b16 %v3003
        %v3051 = vunpack.c.l.b16 %v3004
        %v3052 = vunpack.c.h.b16 %v3004
        %v3053 = vunpack.c.l.b16 %v3005
        %v3054 = vunpack.c.h.b16 %v3005
        %v3055 = vunpack.c.l.b16 %v3006
        %v3056 = vunpack.c.h.b16 %v3006
        %v3057 = vunpack.c.l.b16 %v3007
        %v3058 = vunpack.c.h.b16 %v3007
        %v3059 = vunpack.c.l.b16 %v3008
        %v3060 = vunpack.c.h.b16 %v3008
        %v3061 = vunpack.c.l.b16 %v3009
        %v3062 = vunpack.c.h.b16 %v3009
        %v3063 = vunpack.c.l.b16 %v3010
        %v3064 = vunpack.c.h.b16 %v3010
        %v3065 = vunpack.c.l.b16 %v3011
        %v3066 = vunpack.c.h.b16 %v3011
        %v3067 = vunpack.c.l.b16 %v3012
        %v3068 = vunpack.c.h.b16 %v3012
        %v3069 = vunpack.c.l.b16 %v3013
        %v3070 = vunpack.c.h.b16 %v3013
        %v3071 = vunpack.c.l.b16 %v3014
        %v3072 = vunpack.c.h.b16 %v3014
        %v3073 = vunpack.c.l.b16 %v3015
        %v3074 = vunpack.c.h.b16 %v3015
        %v3075 = vunpack.c.l.b16 %v3016
        %v3076 = vunpack.c.h.b16 %v3016
        %v3077 = vpack.c.b16 %v3047, %v3045
        %v3078 = vpack.c.b16 %v3048, %v3046
        %v3079 = vpack.c.b16 %v3051, %v3049
        %v3080 = vpack.c.b16 %v3052, %v3050
        %v3081 = vpack.c.b16 %v3055, %v3053
        %v3082 = vpack.c.b16 %v3056, %v3054
        %v3083 = vpack.c.b16 %v3059, %v3057
        %v3084 = vpack.c.b16 %v3060, %v3058
        %v3085 = vpack.c.b16 %v3063, %v3061
        %v3086 = vpack.c.b16 %v3064, %v3062
        %v3087 = vpack.c.b16 %v3067, %v3065
        %v3088 = vpack.c.b16 %v3068, %v3066
        %v3089 = vpack.c.b16 %v3071, %v3069
        %v3090 = vpack.c.b16 %v3072, %v3070
        %v3091 = vpack.c.b16 %v3075, %v3073
        %v3092 = vpack.c.b16 %v3076, %v3074
        %3109 = vmatprep.subr.bf16.mxu0 %v3092
        %3110 = vmatpush1.bf16.msra.mxu0 %v3091
        %3111 = vmatprep.subr.bf16.mxu0 %v3090
        %3112 = vmatpush1.bf16.msra.mxu0 %v3089
        %3113 = vmatprep.subr.bf16.mxu0 %v3088
        %3114 = vmatpush1.bf16.msra.mxu0 %v3087
        %3115 = vmatprep.subr.bf16.mxu0 %v3086
        %3116 = vmatpush1.bf16.msra.mxu0 %v3085
        %3117 = vmatprep.subr.bf16.mxu0 %v3084
        %3118 = vmatpush1.bf16.msra.mxu0 %v3083
        %3119 = vmatprep.subr.bf16.mxu0 %v3082
        %3120 = vmatpush1.bf16.msra.mxu0 %v3081
        %3121 = vmatprep.subr.bf16.mxu0 %v3080
        %3122 = vmatpush1.bf16.msra.mxu0 %v3079
        %3123 = vmatprep.subr.bf16.mxu0 %v3078
        %3124 = vmatpush1.bf16.msra.mxu0 %v3077
        %3125 = vmatprep.subr.bf16.mxu0 0
        %3126 = vmatpush2.bf16.msra.mxu0 0
        %3127 = vmatprep.subr.bf16.mxu0 0
        %3128 = vmatpush2.bf16.msra.mxu0 0
        %3129 = vmatprep.subr.bf16.mxu0 0
        %3130 = vmatpush2.bf16.msra.mxu0 0
        %3131 = vmatprep.subr.bf16.mxu0 0
        %3132 = vmatpush2.bf16.msra.mxu0 0
        %3133 = vmatprep.subr.bf16.mxu0 0
        %3134 = vmatpush2.bf16.msra.mxu0 0
        %3135 = vmatprep.subr.bf16.mxu0 0
        %3136 = vmatpush2.bf16.msra.mxu0 0
        %3137 = vmatprep.subr.bf16.mxu0 0
        %3138 = vmatpush2.bf16.msra.mxu0 0
        %3139 = vmatprep.subr.bf16.mxu0 0
        %3140 = vmatpush2.bf16.msra.mxu0 0
        %3141 = vmatprep.mubr.bf16.mxu0 0
        %3142 = vmatmul.mubr.bf16.gmra.mxu0 %v2993
        %v3143 = vpop.f32.mrf.mxu0
        %v3144 = vadd.f32 %v3022, %v3143
        %v3145 = vpop.f32.mrf.mxu0
        %v3146 = vadd.f32 %v3026, %v3145
        %v3147 = vpop.f32.mrf.mxu0
        %v3148 = vadd.f32 %v3022, %v3147
        %v3149 = vpop.f32.mrf.mxu0
        %v3150 = vadd.f32 %v3026, %v3149
        %3151 = vmatprep.mubr.bf16.mxu0 0
        %3152 = vmatmul.mubr.bf16.gmra.mxu0 %v2994
        %v3153 = vpop.f32.mrf.mxu0
        %v3154 = vadd.f32 %v3022, %v3153
        %v3155 = vpop.f32.mrf.mxu0
        %v3156 = vadd.f32 %v3026, %v3155
        %v3157 = vpop.f32.mrf.mxu0
        %v3158 = vadd.f32 %v3022, %v3157
        %v3159 = vpop.f32.mrf.mxu0
        %v3160 = vadd.f32 %v3026, %v3159
        %3161 = vmatprep.mubr.bf16.mxu0 0
        %3162 = vmatmul.mubr.bf16.gmra.mxu0 %v2995
        %v3163 = vpop.f32.mrf.mxu0
        %v3164 = vadd.f32 %v3022, %v3163
        %v3165 = vpop.f32.mrf.mxu0
        %v3166 = vadd.f32 %v3026, %v3165
        %v3167 = vpop.f32.mrf.mxu0
        %v3168 = vadd.f32 %v3022, %v3167
        %v3169 = vpop.f32.mrf.mxu0
        %v3170 = vadd.f32 %v3026, %v3169
        %3171 = vmatprep.mubr.bf16.mxu0 0
        %3172 = vmatmul.mubr.bf16.gmra.mxu0 %v2996
        %v3173 = vpop.f32.mrf.mxu0
        %v3174 = vadd.f32 %v3022, %v3173
        %v3175 = vpop.f32.mrf.mxu0
        %v3176 = vadd.f32 %v3026, %v3175
        %v3177 = vpop.f32.mrf.mxu0
        %v3178 = vadd.f32 %v3022, %v3177
        %v3179 = vpop.f32.mrf.mxu0
        %v3180 = vadd.f32 %v3026, %v3179
        %3181 = vmatprep.mubr.bf16.mxu0 0
        %3182 = vmatmul.mubr.bf16.gmra.mxu0 %v2997
        %v3183 = vpop.f32.mrf.mxu0
        %v3184 = vadd.f32 %v3022, %v3183
        %v3185 = vpop.f32.mrf.mxu0
        %v3186 = vadd.f32 %v3026, %v3185
        %v3187 = vpop.f32.mrf.mxu0
        %v3188 = vadd.f32 %v3022, %v3187
        %v3189 = vpop.f32.mrf.mxu0
        %v3190 = vadd.f32 %v3026, %v3189
        %3191 = vmatprep.mubr.bf16.mxu0 0
        %3192 = vmatmul.mubr.bf16.gmra.mxu0 %v2998
        %v3193 = vpop.f32.mrf.mxu0
        %v3194 = vadd.f32 %v3022, %v3193
        %v3195 = vpop.f32.mrf.mxu0
        %v3196 = vadd.f32 %v3026, %v3195
        %v3197 = vpop.f32.mrf.mxu0
        %v3198 = vadd.f32 %v3022, %v3197
        %v3199 = vpop.f32.mrf.mxu0
        %v3200 = vadd.f32 %v3026, %v3199
        %3201 = vmatprep.mubr.bf16.mxu0 0
        %3202 = vmatmul.mubr.bf16.gmra.mxu0 %v2999
        %v3203 = vpop.f32.mrf.mxu0
        %v3204 = vadd.f32 %v3022, %v3203
        %v3205 = vpop.f32.mrf.mxu0
        %v3206 = vadd.f32 %v3026, %v3205
        %v3207 = vpop.f32.mrf.mxu0
        %v3208 = vadd.f32 %v3022, %v3207
        %v3209 = vpop.f32.mrf.mxu0
        %v3210 = vadd.f32 %v3026, %v3209
        %3211 = vmatprep.mubr.bf16.mxu0 0
        %3212 = vmatmul.mubr.bf16.gmra.mxu0 %v3000
        %v3213 = vpop.f32.mrf.mxu0
        %v3214 = vadd.f32 %v3022, %v3213
        %v3215 = vpop.f32.mrf.mxu0
        %v3216 = vadd.f32 %v3026, %v3215
        %v3217 = vpop.f32.mrf.mxu0
        %v3218 = vadd.f32 %v3022, %v3217
        %v3219 = vpop.f32.mrf.mxu0
        %v3220 = vadd.f32 %v3026, %v3219
        %3221 = vdwg.mxu0
        %v3222 = vxor.u32 %v3144, 2147483648
        %v3223 = vxor.u32 %v3146, 2147483648
        %v3224 = vxor.u32 %v3148, 2147483648
        %v3225 = vxor.u32 %v3150, 2147483648
        %v3226 = vxor.u32 %v3154, 2147483648
        %v3227 = vxor.u32 %v3156, 2147483648
        %v3228 = vxor.u32 %v3158, 2147483648
        %v3229 = vxor.u32 %v3160, 2147483648
        %v3230 = vxor.u32 %v3164, 2147483648
        %v3231 = vxor.u32 %v3166, 2147483648
        %v3232 = vxor.u32 %v3168, 2147483648
        %v3233 = vxor.u32 %v3170, 2147483648
        %v3234 = vxor.u32 %v3174, 2147483648
        %v3235 = vxor.u32 %v3176, 2147483648
        %v3236 = vxor.u32 %v3178, 2147483648
        %v3237 = vxor.u32 %v3180, 2147483648
        %v3238 = vxor.u32 %v3184, 2147483648
        %v3239 = vxor.u32 %v3186, 2147483648
        %v3240 = vxor.u32 %v3188, 2147483648
        %v3241 = vxor.u32 %v3190, 2147483648
        %v3242 = vxor.u32 %v3194, 2147483648
        %v3243 = vxor.u32 %v3196, 2147483648
        %v3244 = vxor.u32 %v3198, 2147483648
        %v3245 = vxor.u32 %v3200, 2147483648
        %v3246 = vxor.u32 %v3204, 2147483648
        %v3247 = vxor.u32 %v3206, 2147483648
        %v3248 = vxor.u32 %v3208, 2147483648
        %v3249 = vxor.u32 %v3210, 2147483648
        %v3250 = vxor.u32 %v3214, 2147483648
        %v3251 = vxor.u32 %v3216, 2147483648
        %v3252 = vxor.u32 %v3218, 2147483648
        %v3253 = vxor.u32 %v3220, 2147483648
        %v3254 = vmul.f32 %v3222, 1.442695
        %v3255 = vpow.pop %v3254
        %v3256 = vmul.f32 %v3223, 1.442695
        %v3257 = vpow.pop %v3256
        %v3258 = vmul.f32 %v3224, 1.442695
        %v3259 = vpow.pop %v3258
        %v3260 = vmul.f32 %v3225, 1.442695
        %v3261 = vpow.pop %v3260
        %v3262 = vmul.f32 %v3226, 1.442695
        %v3263 = vpow.pop %v3262
        %v3264 = vmul.f32 %v3227, 1.442695
        %v3265 = vpow.pop %v3264
        %v3266 = vmul.f32 %v3228, 1.442695
        %v3267 = vpow.pop %v3266
        %v3268 = vmul.f32 %v3229, 1.442695
        %v3269 = vpow.pop %v3268
        %v3270 = vmul.f32 %v3230, 1.442695
        %v3271 = vpow.pop %v3270
        %v3272 = vmul.f32 %v3231, 1.442695
        %v3273 = vpow.pop %v3272
        %v3274 = vmul.f32 %v3232, 1.442695
        %v3275 = vpow.pop %v3274
        %v3276 = vmul.f32 %v3233, 1.442695
        %v3277 = vpow.pop %v3276
        %v3278 = vmul.f32 %v3234, 1.442695
        %v3279 = vpow.pop %v3278
        %v3280 = vmul.f32 %v3235, 1.442695
        %v3281 = vpow.pop %v3280
        %v3282 = vmul.f32 %v3236, 1.442695
        %v3283 = vpow.pop %v3282
        %v3284 = vmul.f32 %v3237, 1.442695
        %v3285 = vpow.pop %v3284
        %v3286 = vmul.f32 %v3238, 1.442695
        %v3287 = vpow.pop %v3286
        %v3288 = vmul.f32 %v3239, 1.442695
        %v3289 = vpow.pop %v3288
        %v3290 = vmul.f32 %v3240, 1.442695
        %v3291 = vpow.pop %v3290
        %v3292 = vmul.f32 %v3241, 1.442695
        %v3293 = vpow.pop %v3292
        %v3294 = vmul.f32 %v3242, 1.442695
        %v3295 = vpow.pop %v3294
        %v3296 = vmul.f32 %v3243, 1.442695
        %v3297 = vpow.pop %v3296
        %v3298 = vmul.f32 %v3244, 1.442695
        %v3299 = vpow.pop %v3298
        %v3300 = vmul.f32 %v3245, 1.442695
        %v3301 = vpow.pop %v3300
        %v3302 = vmul.f32 %v3246, 1.442695
        %v3303 = vpow.pop %v3302
        %v3304 = vmul.f32 %v3247, 1.442695
        %v3305 = vpow.pop %v3304
        %v3306 = vmul.f32 %v3248, 1.442695
        %v3307 = vpow.pop %v3306
        %v3308 = vmul.f32 %v3249, 1.442695
        %v3309 = vpow.pop %v3308
        %v3310 = vmul.f32 %v3250, 1.442695
        %v3311 = vpow.pop %v3310
        %v3312 = vmul.f32 %v3251, 1.442695
        %v3313 = vpow.pop %v3312
        %v3314 = vmul.f32 %v3252, 1.442695
        %v3315 = vpow.pop %v3314
        %v3316 = vmul.f32 %v3253, 1.442695
        %v3317 = vpow.pop %v3316
        %v3318 = vadd.f32 %v3255, 1.0
        %v3319 = vadd.f32 %v3257, 1.0
        %v3320 = vadd.f32 %v3259, 1.0
        %v3321 = vadd.f32 %v3261, 1.0
        %v3322 = vadd.f32 %v3263, 1.0
        %v3323 = vadd.f32 %v3265, 1.0
        %v3324 = vadd.f32 %v3267, 1.0
        %v3325 = vadd.f32 %v3269, 1.0
        %v3326 = vadd.f32 %v3271, 1.0
        %v3327 = vadd.f32 %v3273, 1.0
        %v3328 = vadd.f32 %v3275, 1.0
        %v3329 = vadd.f32 %v3277, 1.0
        %v3330 = vadd.f32 %v3279, 1.0
        %v3331 = vadd.f32 %v3281, 1.0
        %v3332 = vadd.f32 %v3283, 1.0
        %v3333 = vadd.f32 %v3285, 1.0
        %v3334 = vadd.f32 %v3287, 1.0
        %v3335 = vadd.f32 %v3289, 1.0
        %v3336 = vadd.f32 %v3291, 1.0
        %v3337 = vadd.f32 %v3293, 1.0
        %v3338 = vadd.f32 %v3295, 1.0
        %v3339 = vadd.f32 %v3297, 1.0
        %v3340 = vadd.f32 %v3299, 1.0
        %v3341 = vadd.f32 %v3301, 1.0
        %v3342 = vadd.f32 %v3303, 1.0
        %v3343 = vadd.f32 %v3305, 1.0
        %v3344 = vadd.f32 %v3307, 1.0
        %v3345 = vadd.f32 %v3309, 1.0
        %v3346 = vadd.f32 %v3311, 1.0
        %v3347 = vadd.f32 %v3313, 1.0
        %v3348 = vadd.f32 %v3315, 1.0
        %v3349 = vadd.f32 %v3317, 1.0
        %v3350 = vrcp.pop %v3318
        %v3351 = vmul.f32 1.0, %v3350
        %v3352 = vrcp.pop %v3319
        %v3353 = vmul.f32 1.0, %v3352
        %v3354 = vrcp.pop %v3320
        %v3355 = vmul.f32 1.0, %v3354
        %v3356 = vrcp.pop %v3321
        %v3357 = vmul.f32 1.0, %v3356
        %v3358 = vrcp.pop %v3322
        %v3359 = vmul.f32 1.0, %v3358
        %v3360 = vrcp.pop %v3323
        %v3361 = vmul.f32 1.0, %v3360
        %v3362 = vrcp.pop %v3324
        %v3363 = vmul.f32 1.0, %v3362
        %v3364 = vrcp.pop %v3325
        %v3365 = vmul.f32 1.0, %v3364
        %v3366 = vrcp.pop %v3326
        %v3367 = vmul.f32 1.0, %v3366
        %v3368 = vrcp.pop %v3327
        %v3369 = vmul.f32 1.0, %v3368
        %v3370 = vrcp.pop %v3328
        %v3371 = vmul.f32 1.0, %v3370
        %v3372 = vrcp.pop %v3329
        %v3373 = vmul.f32 1.0, %v3372
        %v3374 = vrcp.pop %v3330
        %v3375 = vmul.f32 1.0, %v3374
        %v3376 = vrcp.pop %v3331
        %v3377 = vmul.f32 1.0, %v3376
        %v3378 = vrcp.pop %v3332
        %v3379 = vmul.f32 1.0, %v3378
        %v3380 = vrcp.pop %v3333
        %v3381 = vmul.f32 1.0, %v3380
        %v3382 = vrcp.pop %v3334
        %v3383 = vmul.f32 1.0, %v3382
        %v3384 = vrcp.pop %v3335
        %v3385 = vmul.f32 1.0, %v3384
        %v3386 = vrcp.pop %v3336
        %v3387 = vmul.f32 1.0, %v3386
        %v3388 = vrcp.pop %v3337
        %v3389 = vmul.f32 1.0, %v3388
        %v3390 = vrcp.pop %v3338
        %v3391 = vmul.f32 1.0, %v3390
        %v3392 = vrcp.pop %v3339
        %v3393 = vmul.f32 1.0, %v3392
        %v3394 = vrcp.pop %v3340
        %v3395 = vmul.f32 1.0, %v3394
        %v3396 = vrcp.pop %v3341
        %v3397 = vmul.f32 1.0, %v3396
        %v3398 = vrcp.pop %v3342
        %v3399 = vmul.f32 1.0, %v3398
        %v3400 = vrcp.pop %v3343
        %v3401 = vmul.f32 1.0, %v3400
        %v3402 = vrcp.pop %v3344
        %v3403 = vmul.f32 1.0, %v3402
        %v3404 = vrcp.pop %v3345
        %v3405 = vmul.f32 1.0, %v3404
        %v3406 = vrcp.pop %v3346
        %v3407 = vmul.f32 1.0, %v3406
        %v3408 = vrcp.pop %v3347
        %v3409 = vmul.f32 1.0, %v3408
        %v3410 = vrcp.pop %v3348
        %v3411 = vmul.f32 1.0, %v3410
        %v3412 = vrcp.pop %v3349
        %v3413 = vmul.f32 1.0, %v3412
        %v3414 = vpack.c.bf16 %v3355, %v3351
        %v3415 = vpack.c.bf16 %v3357, %v3353
        %v3416 = vpack.c.bf16 %v3363, %v3359
        %v3417 = vpack.c.bf16 %v3365, %v3361
        %v3418 = vpack.c.bf16 %v3371, %v3367
        %v3419 = vpack.c.bf16 %v3373, %v3369
        %v3420 = vpack.c.bf16 %v3379, %v3375
        %v3421 = vpack.c.bf16 %v3381, %v3377
        %v3422 = vpack.c.bf16 %v3387, %v3383
        %v3423 = vpack.c.bf16 %v3389, %v3385
        %v3424 = vpack.c.bf16 %v3395, %v3391
        %v3425 = vpack.c.bf16 %v3397, %v3393
        %v3426 = vpack.c.bf16 %v3403, %v3399
        %v3427 = vpack.c.bf16 %v3405, %v3401
        %v3428 = vpack.c.bf16 %v3411, %v3407
        %v3429 = vpack.c.bf16 %v3413, %v3409
        %v3446 = vunpack.c.l.b16 %v3414
        %v3447 = vunpack.c.l.b16 %v3415
        %v3448 = vunpack.c.h.b16 %v3414
        %v3449 = vunpack.c.h.b16 %v3415
        %v3450 = vunpack.c.l.b16 %v3416
        %v3451 = vunpack.c.l.b16 %v3417
        %v3452 = vunpack.c.h.b16 %v3416
        %v3453 = vunpack.c.h.b16 %v3417
        %v3454 = vunpack.c.l.b16 %v3418
        %v3455 = vunpack.c.l.b16 %v3419
        %v3456 = vunpack.c.h.b16 %v3418
        %v3457 = vunpack.c.h.b16 %v3419
        %v3458 = vunpack.c.l.b16 %v3420
        %v3459 = vunpack.c.l.b16 %v3421
        %v3460 = vunpack.c.h.b16 %v3420
        %v3461 = vunpack.c.h.b16 %v3421
        %v3462 = vunpack.c.l.b16 %v3422
        %v3463 = vunpack.c.l.b16 %v3423
        %v3464 = vunpack.c.h.b16 %v3422
        %v3465 = vunpack.c.h.b16 %v3423
        %v3466 = vunpack.c.l.b16 %v3424
        %v3467 = vunpack.c.l.b16 %v3425
        %v3468 = vunpack.c.h.b16 %v3424
        %v3469 = vunpack.c.h.b16 %v3425
        %v3470 = vunpack.c.l.b16 %v3426
        %v3471 = vunpack.c.l.b16 %v3427
        %v3472 = vunpack.c.h.b16 %v3426
        %v3473 = vunpack.c.h.b16 %v3427
        %v3474 = vunpack.c.l.b16 %v3428
        %v3475 = vunpack.c.l.b16 %v3429
        %v3476 = vunpack.c.h.b16 %v3428
        %v3477 = vunpack.c.h.b16 %v3429
        %v3478 = vpack.c.b16 %v3447, %v3446
        %v3479 = vpack.c.b16 %v3449, %v3448
        %v3480 = vpack.c.b16 %v3451, %v3450
        %v3481 = vpack.c.b16 %v3453, %v3452
        %v3482 = vpack.c.b16 %v3455, %v3454
        %v3483 = vpack.c.b16 %v3457, %v3456
        %v3484 = vpack.c.b16 %v3459, %v3458
        %v3485 = vpack.c.b16 %v3461, %v3460
        %v3486 = vpack.c.b16 %v3463, %v3462
        %v3487 = vpack.c.b16 %v3465, %v3464
        %v3488 = vpack.c.b16 %v3467, %v3466
        %v3489 = vpack.c.b16 %v3469, %v3468
        %v3490 = vpack.c.b16 %v3471, %v3470
        %v3491 = vpack.c.b16 %v3473, %v3472
        %v3492 = vpack.c.b16 %v3475, %v3474
        %v3493 = vpack.c.b16 %v3477, %v3476
        %3510 = vst [vmem:[%s583] sm:$0xff] %v3478
        %3511 = vst [vmem:[%s583 + $0x8] sm:$0xff] %v3479
        %3512 = vst [vmem:[%s583 + $0x10] sm:$0xff] %v3480
        %3513 = vst [vmem:[%s583 + $0x18] sm:$0xff] %v3481
        %3514 = vst [vmem:[%s583 + $0x20] sm:$0xff] %v3482
        %3515 = vst [vmem:[%s583 + $0x28] sm:$0xff] %v3483
        %3516 = vst [vmem:[%s583 + $0x30] sm:$0xff] %v3484
        %3517 = vst [vmem:[%s583 + $0x38] sm:$0xff] %v3485
        %3518 = vst [vmem:[%s583 + $0x40] sm:$0xff] %v3486
        %3519 = vst [vmem:[%s583 + $0x48] sm:$0xff] %v3487
        %3520 = vst [vmem:[%s583 + $0x50] sm:$0xff] %v3488
        %3521 = vst [vmem:[%s583 + $0x58] sm:$0xff] %v3489
        %3522 = vst [vmem:[%s583 + $0x60] sm:$0xff] %v3490
        %3523 = vst [vmem:[%s583 + $0x68] sm:$0xff] %v3491
        %3524 = vst [vmem:[%s583 + $0x70] sm:$0xff] %v3492
        %3525 = vst [vmem:[%s583 + $0x78] sm:$0xff] %v3493
        %3526 = vst.msk [vmem:[%s590] sm:$0xff] %vm2127, %v2080
        %3527 = vst.msk [vmem:[%s590 + $0x8] sm:$0xff] %vm2127, %v2081
        %3528 = vst.msk [vmem:[%s590 + $0x10] sm:$0xff] %vm2127, %v2082
        %3529 = vst.msk [vmem:[%s590 + $0x18] sm:$0xff] %vm2127, %v2083
        %3530 = vst.msk [vmem:[%s590 + $0x20] sm:$0xff] %vm2127, %v2084
        %3531 = vst.msk [vmem:[%s590 + $0x28] sm:$0xff] %vm2127, %v2085
        %3532 = vst.msk [vmem:[%s590 + $0x30] sm:$0xff] %vm2127, %v2086
        %3533 = vst.msk [vmem:[%s590 + $0x38] sm:$0xff] %vm2127, %v2087
        %3534 = vst.msk [vmem:[%s590 + $0x40] sm:$0xff] %vm2127, %v2088
        %3535 = vst.msk [vmem:[%s590 + $0x48] sm:$0xff] %vm2127, %v2089
        %3536 = vst.msk [vmem:[%s590 + $0x50] sm:$0xff] %vm2127, %v2090
        %3537 = vst.msk [vmem:[%s590 + $0x58] sm:$0xff] %vm2127, %v2091
        %3538 = vst.msk [vmem:[%s590 + $0x60] sm:$0xff] %vm2127, %v2092
        %3539 = vst.msk [vmem:[%s590 + $0x68] sm:$0xff] %vm2127, %v2093
        %3540 = vst.msk [vmem:[%s590 + $0x70] sm:$0xff] %vm2127, %v2094
        %3541 = vst.msk [vmem:[%s590 + $0x78] sm:$0xff] %vm2127, %v2095
        %3558 = vrot.lane.b32.xlu0 %v1506, 32
        %v3559 = vpop.permute.xlu0 %3558
        %3560 = vrot.lane.b32.xlu0 %v1509, 32
        %v3561 = vpop.permute.xlu0 %3560
        %3562 = vrot.lane.b32.xlu0 %v1514, 32
        %v3563 = vpop.permute.xlu0 %3562
        %3564 = vrot.lane.b32.xlu0 %v1517, 32
        %v3565 = vpop.permute.xlu0 %3564
        %3566 = vrot.lane.b32.xlu0 %v1522, 32
        %v3567 = vpop.permute.xlu0 %3566
        %3568 = vrot.lane.b32.xlu0 %v1525, 32
        %v3569 = vpop.permute.xlu0 %3568
        %3570 = vrot.lane.b32.xlu0 %v1530, 32
        %v3571 = vpop.permute.xlu0 %3570
        %3572 = vrot.lane.b32.xlu0 %v1533, 32
        %v3573 = vpop.permute.xlu0 %3572
        %3574 = vrot.lane.b32.xlu0 %v1538, 32
        %v3575 = vpop.permute.xlu0 %3574
        %3576 = vrot.lane.b32.xlu0 %v1541, 32
        %v3577 = vpop.permute.xlu0 %3576
        %3578 = vrot.lane.b32.xlu0 %v1546, 32
        %v3579 = vpop.permute.xlu0 %3578
        %3580 = vrot.lane.b32.xlu0 %v1549, 32
        %v3581 = vpop.permute.xlu0 %3580
        %3582 = vrot.lane.b32.xlu0 %v1554, 32
        %v3583 = vpop.permute.xlu0 %3582
        %3584 = vrot.lane.b32.xlu0 %v1557, 32
        %v3585 = vpop.permute.xlu0 %3584
        %3586 = vrot.lane.b32.xlu0 %v1562, 32
        %v3587 = vpop.permute.xlu0 %3586
        %3588 = vrot.lane.b32.xlu0 %v1565, 32
        %v3589 = vpop.permute.xlu0 %3588
        %vm3606 = vcmask 523520
        %3607 = vst.msk [vmem:[%s590] sm:$0xff] %vm3606, %v3559
        %3608 = vst.msk [vmem:[%s590 + $0x8] sm:$0xff] %vm3606, %v3561
        %3609 = vst.msk [vmem:[%s590 + $0x10] sm:$0xff] %vm3606, %v3563
        %3610 = vst.msk [vmem:[%s590 + $0x18] sm:$0xff] %vm3606, %v3565
        %3611 = vst.msk [vmem:[%s590 + $0x20] sm:$0xff] %vm3606, %v3567
        %3612 = vst.msk [vmem:[%s590 + $0x28] sm:$0xff] %vm3606, %v3569
        %3613 = vst.msk [vmem:[%s590 + $0x30] sm:$0xff] %vm3606, %v3571
        %3614 = vst.msk [vmem:[%s590 + $0x38] sm:$0xff] %vm3606, %v3573
        %3615 = vst.msk [vmem:[%s590 + $0x40] sm:$0xff] %vm3606, %v3575
        %3616 = vst.msk [vmem:[%s590 + $0x48] sm:$0xff] %vm3606, %v3577
        %3617 = vst.msk [vmem:[%s590 + $0x50] sm:$0xff] %vm3606, %v3579
        %3618 = vst.msk [vmem:[%s590 + $0x58] sm:$0xff] %vm3606, %v3581
        %3619 = vst.msk [vmem:[%s590 + $0x60] sm:$0xff] %vm3606, %v3583
        %3620 = vst.msk [vmem:[%s590 + $0x68] sm:$0xff] %vm3606, %v3585
        %3621 = vst.msk [vmem:[%s590 + $0x70] sm:$0xff] %vm3606, %v3587
        %3622 = vst.msk [vmem:[%s590 + $0x78] sm:$0xff] %vm3606, %v3589
        %3639 = vrot.lane.b32.xlu0 %v1840, 32
        %v3640 = vpop.permute.xlu0 %3639
        %3641 = vrot.lane.b32.xlu0 %v1841, 32
        %v3642 = vpop.permute.xlu0 %3641
        %3643 = vrot.lane.b32.xlu0 %v1842, 32
        %v3644 = vpop.permute.xlu0 %3643
        %3645 = vrot.lane.b32.xlu0 %v1843, 32
        %v3646 = vpop.permute.xlu0 %3645
        %3647 = vrot.lane.b32.xlu0 %v1844, 32
        %v3648 = vpop.permute.xlu0 %3647
        %3649 = vrot.lane.b32.xlu0 %v1845, 32
        %v3650 = vpop.permute.xlu0 %3649
        %3651 = vrot.lane.b32.xlu0 %v1846, 32
        %v3652 = vpop.permute.xlu0 %3651
        %3653 = vrot.lane.b32.xlu0 %v1847, 32
        %v3654 = vpop.permute.xlu0 %3653
        %3655 = vrot.lane.b32.xlu0 %v1848, 32
        %v3656 = vpop.permute.xlu0 %3655
        %3657 = vrot.lane.b32.xlu0 %v1849, 32
        %v3658 = vpop.permute.xlu0 %3657
        %3659 = vrot.lane.b32.xlu0 %v1850, 32
        %v3660 = vpop.permute.xlu0 %3659
        %3661 = vrot.lane.b32.xlu0 %v1851, 32
        %v3662 = vpop.permute.xlu0 %3661
        %3663 = vrot.lane.b32.xlu0 %v1852, 32
        %v3664 = vpop.permute.xlu0 %3663
        %3665 = vrot.lane.b32.xlu0 %v1853, 32
        %v3666 = vpop.permute.xlu0 %3665
        %3667 = vrot.lane.b32.xlu0 %v1854, 32
        %v3668 = vpop.permute.xlu0 %3667
        %3669 = vrot.lane.b32.xlu0 %v1855, 32
        %v3670 = vpop.permute.xlu0 %3669
        %vm3687 = vcmask 785920
        %3688 = vst.msk [vmem:[%s590] sm:$0xff] %vm3687, %v3640
        %3689 = vst.msk [vmem:[%s590 + $0x8] sm:$0xff] %vm3687, %v3642
        %3690 = vst.msk [vmem:[%s590 + $0x10] sm:$0xff] %vm3687, %v3644
        %3691 = vst.msk [vmem:[%s590 + $0x18] sm:$0xff] %vm3687, %v3646
        %3692 = vst.msk [vmem:[%s590 + $0x20] sm:$0xff] %vm3687, %v3648
        %3693 = vst.msk [vmem:[%s590 + $0x28] sm:$0xff] %vm3687, %v3650
        %3694 = vst.msk [vmem:[%s590 + $0x30] sm:$0xff] %vm3687, %v3652
        %3695 = vst.msk [vmem:[%s590 + $0x38] sm:$0xff] %vm3687, %v3654
        %3696 = vst.msk [vmem:[%s590 + $0x40] sm:$0xff] %vm3687, %v3656
        %3697 = vst.msk [vmem:[%s590 + $0x48] sm:$0xff] %vm3687, %v3658
        %3698 = vst.msk [vmem:[%s590 + $0x50] sm:$0xff] %vm3687, %v3660
        %3699 = vst.msk [vmem:[%s590 + $0x58] sm:$0xff] %vm3687, %v3662
        %3700 = vst.msk [vmem:[%s590 + $0x60] sm:$0xff] %vm3687, %v3664
        %3701 = vst.msk [vmem:[%s590 + $0x68] sm:$0xff] %vm3687, %v3666
        %3702 = vst.msk [vmem:[%s590 + $0x70] sm:$0xff] %vm3687, %v3668
        %3703 = vst.msk [vmem:[%s590 + $0x78] sm:$0xff] %vm3687, %v3670
        %s3704 = sand.u32 %s348, 1
        %s3705 = scalar_lea.sflag [#allocation4], %s3704
        %s3706 = sand.u32 %s348, 1
        %s3707 = smul.addr %s3706, 128
        %s3708 = scalar_lea.vmem [#allocation11], %s3707
        %s3709 = sand.u32 %s374, 1
        %s3710 = scalar_lea.sflag [#allocation13], %s3709
        %s3711 = sand.u32 %s374, 1
        %s3712 = smul.addr %s3711, 128
        %s3713 = scalar_lea.vmem [#allocation12], %s3712
        // Predicated region
        $region97: #{tpu_custom_call.1} parent=75 // pred_check
          %p3714 = pneg %p358
        $region98: #{tpu_custom_call.1} parent=75 // pred_check_branch
          %3716 = sbr.rel (%p3714) target = $region100
        $region99: #{tpu_custom_call.1} parent=75 // pred_region
          %s3717 = smul.u32 16, %s36
          %s3719 = ssub.s32 2048, 2048
          %3720 = vsyncadd %s3705, %s3719
          %s3721 = smul.addr %s3717, 2
          %s3722 = smul.addr %s3721, 64
          %s3723 = scalar_lea.hbm %s14, %s3722
          %s3724 = sshll.u32 %s3708, 4
          %s3725 = int_to_ptr.vmem [resolvable:$true] %s3724
          %3730 = dma.vmem_to_hbm [thread:$0]  %s3725, 2048, %s3723, %s3705, 128, 128, 8
        $region100: #{tpu_custom_call.1} parent=75 // pred_fallthru
          _
        // Predicated region
        $region101: #{tpu_custom_call.1} parent=75 // pred_check
          %p3731 = pneg %p384
        $region102: #{tpu_custom_call.1} parent=75 // pred_check_branch
          %3733 = sbr.rel (%p3731) target = $region104
        $region103: #{tpu_custom_call.1} parent=75 // pred_region
          %s3734 = smul.u32 16, %s36
          %s3736 = ssub.s32 2048, 2048
          %3737 = vsyncadd %s3710, %s3736
          %s3738 = smul.addr %s3734, 128
          %s3739 = scalar_lea.hbm %s15, %s3738
          %s3740 = sshll.u32 %s3713, 4
          %s3741 = int_to_ptr.vmem [resolvable:$true] %s3740
          %3746 = dma.vmem_to_hbm [thread:$0]  %s3741, 2048, %s3739, %s3710, 128, 128, 8
        $region104: #{tpu_custom_call.1} parent=75 // pred_fallthru
          _
      $region76: #{tpu_custom_call.1} parent=5 // pred_fallthru
        _
      %p3747 = scmp.le.s32.totalorder 2, %s31
      // Predicated region
      $region105: #{tpu_custom_call.1} parent=5 // pred_check
        %p3748 = pneg %p3747
      $region106: #{tpu_custom_call.1} parent=5 // pred_check_branch
        %3750 = sbr.rel (%p3748) target = $region108
      $region107: #{tpu_custom_call.1} parent=5 // pred_region
        %s3751 = ssub.s32 %s31, 2
        // Predicated region
        $region109: #{tpu_custom_call.1} parent=107 // pred_check
          %p3752 = pneg %p364
        $region110: #{tpu_custom_call.1} parent=107 // pred_check_branch
          %3754 = sbr.rel (%p3752) target = $region112
        $region111: #{tpu_custom_call.1} parent=107 // pred_region
          %s3755 = sand.u32 %s349, 1
          %s3756 = scalar_lea.sflag [#allocation4], %s3755
          %s3757 = sand.u32 %s349, 1
          %s3758 = smul.addr %s3757, 128
          %s3759 = scalar_lea.vmem [#allocation11], %s3758
          %3760 = dma.done %s3756, 2048
        $region112: #{tpu_custom_call.1} parent=107 // pred_fallthru
          _
        // Predicated region
        $region113: #{tpu_custom_call.1} parent=107 // pred_check
          %p3761 = pneg %p390
        $region114: #{tpu_custom_call.1} parent=107 // pred_check_branch
          %3763 = sbr.rel (%p3761) target = $region116
        $region115: #{tpu_custom_call.1} parent=107 // pred_region
          %s3764 = sand.u32 %s375, 1
          %s3765 = scalar_lea.sflag [#allocation13], %s3764
          %s3766 = sand.u32 %s375, 1
          %s3767 = smul.addr %s3766, 128
          %s3768 = scalar_lea.vmem [#allocation12], %s3767
          %3769 = dma.done %s3765, 2048
        $region116: #{tpu_custom_call.1} parent=107 // pred_fallthru
          _
      $region108: #{tpu_custom_call.1} parent=5 // pred_fallthru
        _
    $region6: #{tpu_custom_call.1} parent=1 // loop_footer
      %s35 = sadd.s32 1, %s31
    $region7: #{tpu_custom_call.1} parent=1 // loop_footer_branch
      %30 = sbr.rel target = $region3
    $region8: #{tpu_custom_call.1} parent=1 // loop_exit
      _
    %3770 = vsyncpa [#allocation3], 1
    %s3771 = scalar_lea.sflag [#allocation3], 1
    %3772 = vsyncpa %s3771, 1
    %3773 = vsyncpa [#allocation6], 1
    %3774 = vsyncpa [#allocation9], 1
    %3775 = vsyncpa [#allocation4], 1
    %s3776 = scalar_lea.sflag [#allocation4], 1
    %3777 = vsyncpa %s3776, 1
    %3778 = vsyncpa [#allocation13], 1
    %s3779 = scalar_lea.sflag [#allocation13], 1
    %3780 = vsyncpa %s3779, 1

</llo_original>
